<compile_context>
chip_gen: v7x
topology: tpu7x:2x2x1
jax: 0.10.0
libtpu: 0.0.40
codegen_flags: <defaults>
</compile_context>

<pallas_src>
import functools
import math

import jax
import jax.numpy as jnp
from jax.experimental import pallas as pl
from jax.experimental.pallas import tpu as pltpu


# ----------------------------------------------------------------------------
# helpers
# ----------------------------------------------------------------------------
def _tile(n, cap):
    """Largest tile <= cap that divides n (prefer multiples of 16, then 8)."""
    if n <= cap:
        return n
    for step in (16, 8):
        start = cap - (cap % step)
        for t in range(start, step - 1, -step):
            if n % t == 0:
                return t
    return n


def _col_tile(n, cap=512):
    """Largest lane-dense (multiple-of-128) tile <= cap dividing n; else n."""
    if n <= cap:
        return n
    for t in range(cap - (cap % 128), 127, -128):
        if n % t == 0:
            return t
    return n


_VMEM_LIMIT = None


def _vmem_limit_bytes():
    """Generation-aware scoped-VMEM request (~100 MiB on 128 MiB parts, ~48 MiB on v7x)."""
    global _VMEM_LIMIT
    if _VMEM_LIMIT is None:
        limit = 48 * 1024 * 1024
        try:
            cap = pltpu.get_tpu_info().vmem_capacity_bytes
            limit = int(min(max(cap - 16 * 1024 * 1024, 32 * 1024 * 1024),
                            100 * 1024 * 1024))
        except Exception:
            pass
        _VMEM_LIMIT = limit
    return _VMEM_LIMIT


# ----------------------------------------------------------------------------
# Fused multi-head attention + residual + LayerNorm kernel.
# Grid = (batch, query_tiles). K/V are projected once per batch (q_tile == 0)
# into head-batched VMEM scratch; heads are contracted with batched einsums.
# ----------------------------------------------------------------------------
def _mha_ln_kernel(xq_ref, xkv_ref, qm_ref, km_ref,
                   wq_ref, bq_ref, wk_ref, bk_ref, wv_ref, bv_ref,
                   wo_ref, bo_ref, g_ref, beta_ref,
                   o_ref, k_sc, v_sc, *, num_heads, causal):
    TQ, D = xq_ref.shape[1], xq_ref.shape[2]
    Sk = xkv_ref.shape[1]
    dk = D // num_heads
    scale = 1.0 / math.sqrt(dk)

    # --- K/V projection: once per batch element, cached in (H, Sk, dk) scratch ---
    @pl.when(pl.program_id(1) == 0)
    def _():
        xkv = xkv_ref[0]                                          # (Sk, D) bf16
        k = jnp.dot(xkv, wk_ref[...],
                    preferred_element_type=jnp.float32) + bk_ref[...]
        v = jnp.dot(xkv, wv_ref[...],
                    preferred_element_type=jnp.float32) + bv_ref[...]
        k_sc[...] = pltpu.einshape(
            "khd->hkd", k.astype(jnp.bfloat16).reshape(Sk, num_heads, dk))
        v_sc[...] = pltpu.einshape(
            "khd->hkd", v.astype(jnp.bfloat16).reshape(Sk, num_heads, dk))

    # --- Q projection for this query tile (1/sqrt(dk) folded into Q) ---
    xq = xq_ref[0]                                                # (TQ, D) bf16
    q = jnp.dot(xq, wq_ref[...],
                preferred_element_type=jnp.float32) + bq_ref[...]
    q = q * scale
    qh = pltpu.einshape(
        "qhd->hqd", q.astype(jnp.bfloat16).reshape(TQ, num_heads, dk))  # (H,TQ,dk)

    # --- additive mask bias: pad bits + causal iota, built once per tile ---
    valid = (qm_ref[0] != 0) & (km_ref[0] != 0)                   # (TQ,1)&(1,Sk)->(TQ,Sk)
    if causal:
        q0 = pl.program_id(1) * TQ
        row = q0 + jax.lax.broadcasted_iota(jnp.int32, (TQ, Sk), 0)
        col = jax.lax.broadcasted_iota(jnp.int32, (TQ, Sk), 1)
        valid = valid & (col <= row)
    bias = jnp.where(valid, jnp.float32(0.0), jnp.float32(-1e9))  # (TQ, Sk) f32

    # --- head-batched attention: single MXU streams, no per-head Python loop ---
    s = jnp.einsum("hqd,hkd->hqk", qh, k_sc[...],
                   preferred_element_type=jnp.float32)            # (H, TQ, Sk) f32
    s = s + bias[None, :, :]
    m = jnp.max(s, axis=-1, keepdims=True)
    p = jnp.exp(s - m)
    p = p * pl.reciprocal(jnp.sum(p, axis=-1, keepdims=True), approx=True)
    ctx = jnp.einsum("hqk,hkd->hqd", p.astype(jnp.bfloat16), v_sc[...],
                     preferred_element_type=jnp.float32)          # (H, TQ, dk) f32
    attn = pltpu.einshape("hqd->qhd", ctx.astype(jnp.bfloat16)).reshape(TQ, D)

    # --- output projection + residual + LayerNorm epilogue (f32 math) ---
    y = jnp.dot(attn, wo_ref[...],
                preferred_element_type=jnp.float32) + bo_ref[...]
    z = xq.astype(jnp.float32) + y
    mean = jnp.mean(z, axis=-1, keepdims=True)
    var = jnp.mean((z - mean) ** 2, axis=-1, keepdims=True)
    out = (z - mean) * jax.lax.rsqrt(var + 1e-5) * g_ref[...] + beta_ref[...]
    o_ref[0] = out.astype(o_ref.dtype)


def mha_block(p, xq, xkv, q_valid, k_valid, ln_g, ln_b, *, num_heads, causal):
    """Fused MHA(xq, xkv, xkv) -> +xq residual -> LayerNorm, one pallas_call."""
    B, Sq, D = xq.shape
    Sk = xkv.shape[1]
    assert D % num_heads == 0
    dk = D // num_heads
    TQ = _tile(Sq, 256)
    qm = q_valid.reshape(B, Sq, 1).astype(jnp.int32)
    km = k_valid.reshape(B, 1, Sk).astype(jnp.int32)
    kern = functools.partial(_mha_ln_kernel, num_heads=num_heads, causal=causal)

    def const(shape):
        # Constant-index blocks never change across the grid: single-buffer them.
        return pl.BlockSpec(shape, lambda b, i: (0,) * len(shape),
                            pipeline_mode=pl.Buffered(1))

    return pl.pallas_call(
        kern,
        out_shape=jax.ShapeDtypeStruct((B, Sq, D), jnp.bfloat16),
        grid=(B, Sq // TQ),
        in_specs=[
            pl.BlockSpec((1, TQ, D), lambda b, i: (b, i, 0)),     # xq tile (bf16)
            pl.BlockSpec((1, Sk, D), lambda b, i: (b, 0, 0)),     # xkv (bf16, per batch)
            pl.BlockSpec((1, TQ, 1), lambda b, i: (b, i, 0)),     # query pad bits
            pl.BlockSpec((1, 1, Sk), lambda b, i: (b, 0, 0)),     # key pad bits
            const((D, D)), const((1, D)),                         # wq, bq
            const((D, D)), const((1, D)),                         # wk, bk
            const((D, D)), const((1, D)),                         # wv, bv
            const((D, D)), const((1, D)),                         # wo, bo
            const((1, D)), const((1, D)),                         # ln gamma, beta
        ],
        out_specs=pl.BlockSpec((1, TQ, D), lambda b, i: (b, i, 0)),
        scratch_shapes=[pltpu.VMEM((num_heads, Sk, dk), jnp.bfloat16),
                        pltpu.VMEM((num_heads, Sk, dk), jnp.bfloat16)],
        compiler_params=pltpu.CompilerParams(
            dimension_semantics=("parallel", "arbitrary"),
            vmem_limit_bytes=_vmem_limit_bytes()),
    )(xq, xkv, qm, km,
      p["wq"], p["bq"], p["wk"], p["bk"], p["wv"], p["bv"], p["wo"], p["bo"],
      ln_g, ln_b)


# ----------------------------------------------------------------------------
# Fused position-wise FFN + residual + LayerNorm kernel (row-tiled grid).
# ----------------------------------------------------------------------------
def _ffn_ln_kernel(x_ref, w1_ref, b1_ref, w2_ref, b2_ref, g_ref, beta_ref, o_ref):
    x = x_ref[...]                                                # (TM, D) bf16
    h = jnp.dot(x, w1_ref[...],
                preferred_element_type=jnp.float32) + b1_ref[...]
    h = jnp.maximum(h, 0.0)                                       # ReLU (f32)
    y = jnp.dot(h.astype(jnp.bfloat16), w2_ref[...],
                preferred_element_type=jnp.float32) + b2_ref[...]
    z = x.astype(jnp.float32) + y                                 # residual (f32)
    mean = jnp.mean(z, axis=-1, keepdims=True)
    var = jnp.mean((z - mean) ** 2, axis=-1, keepdims=True)
    out = (z - mean) * jax.lax.rsqrt(var + 1e-5) * g_ref[...] + beta_ref[...]
    o_ref[...] = out.astype(o_ref.dtype)


def ffn_ln_block(p, x, ln_g, ln_b):
    B, S, D = x.shape
    M = B * S
    F = p["w1"].shape[1]
    TM = _tile(M, 256)   # capped at 256 so the (TM, F) f32 intermediate fits v7x VMEM

    def const(shape):
        return pl.BlockSpec(shape, lambda i: (0, 0), pipeline_mode=pl.Buffered(1))

    out = pl.pallas_call(
        _ffn_ln_kernel,
        out_shape=jax.ShapeDtypeStruct((M, D), jnp.bfloat16),
        grid=(M // TM,),
        in_specs=[
            pl.BlockSpec((TM, D), lambda i: (i, 0)),
            const((D, F)), const((1, F)),
            const((F, D)), const((1, D)),
            const((1, D)), const((1, D)),
        ],
        out_specs=pl.BlockSpec((TM, D), lambda i: (i, 0)),
        compiler_params=pltpu.CompilerParams(
            dimension_semantics=("parallel",),
            vmem_limit_bytes=_vmem_limit_bytes()),
    )(x.reshape(M, D), p["w1"], p["b1"], p["w2"], p["b2"], ln_g, ln_b)
    return out.reshape(B, S, D)


# ----------------------------------------------------------------------------
# Row- and column-tiled linear kernel (final vocab projection; logits stay f32).
# ----------------------------------------------------------------------------
def _linear_kernel(x_ref, w_ref, b_ref, o_ref):
    o_ref[...] = (jnp.dot(x_ref[...], w_ref[...],
                          preferred_element_type=jnp.float32) + b_ref[...])


def linear(x, w, b):
    M, K = x.shape
    N = w.shape[1]
    TM = _tile(M, 256)
    TN = _col_tile(N, 512)
    return pl.pallas_call(
        _linear_kernel,
        out_shape=jax.ShapeDtypeStruct((M, N), jnp.float32),
        grid=(M // TM, N // TN),
        in_specs=[pl.BlockSpec((TM, K), lambda i, j: (i, 0)),
                  pl.BlockSpec((K, TN), lambda i, j: (0, j)),
                  pl.BlockSpec((1, TN), lambda i, j: (0, j))],
        out_specs=pl.BlockSpec((TM, TN), lambda i, j: (i, j)),
        compiler_params=pltpu.CompilerParams(
            dimension_semantics=("parallel", "parallel"),
            vmem_limit_bytes=_vmem_limit_bytes()),
    )(x, w, b)


# ----------------------------------------------------------------------------
# Model glue (plain JAX): embeddings, positional encoding, layer stacking
# ----------------------------------------------------------------------------
def encoder_layer(p, x, src_kmask, ones_src, num_heads):
    x = mha_block(p["attn"], x, x, ones_src, src_kmask, p["ln1_g"], p["ln1_b"],
                  num_heads=num_heads, causal=False)
    x = ffn_ln_block(p, x, p["ln2_g"], p["ln2_b"])
    return x


def decoder_layer(p, x, enc_out, src_kmask, tgt_qmask, ones_tgt, num_heads):
    x = mha_block(p["self_attn"], x, x, tgt_qmask, ones_tgt, p["ln1_g"], p["ln1_b"],
                  num_heads=num_heads, causal=True)
    x = mha_block(p["cross_attn"], x, enc_out, ones_tgt, src_kmask,
                  p["ln2_g"], p["ln2_b"], num_heads=num_heads, causal=False)
    x = ffn_ln_block(p, x, p["ln3_g"], p["ln3_b"])
    return x


def make_positional_encoding(max_len, d_model):
    pos = jnp.arange(max_len, dtype=jnp.float32)[:, None]
    div = jnp.exp(
        jnp.arange(0, d_model, 2, dtype=jnp.float32) * (-math.log(10000.0) / d_model)
    )
    pe = jnp.zeros((max_len, d_model), jnp.float32)
    pe = pe.at[:, 0::2].set(jnp.sin(pos * div))
    pe = pe.at[:, 1::2].set(jnp.cos(pos * div))
    return pe


def transformer_forward(params, src, tgt, num_heads):
    B, Ss = src.shape
    St = tgt.shape[1]
    # Only (B, S) pad bits reach the kernels; the causal part is built in-kernel.
    src_kmask = (src != 0).astype(jnp.int32)     # keys masked by src padding
    tgt_qmask = (tgt != 0).astype(jnp.int32)     # query rows masked by tgt padding
    ones_src = jnp.ones((B, Ss), jnp.int32)
    ones_tgt = jnp.ones((B, St), jnp.int32)

    pe = params["pe"]
    # TODO(synk): embedding gather + positional-encoding add stay as plain-JAX glue
    # (no clean Pallas gather win at these shapes). Activations are carried bf16.
    src_emb = (jnp.take(params["enc_emb"], src, axis=0) + pe[:Ss][None]).astype(jnp.bfloat16)
    tgt_emb = (jnp.take(params["dec_emb"], tgt, axis=0) + pe[:St][None]).astype(jnp.bfloat16)
    # dropout(p) in eval mode == identity

    enc = src_emb
    for lp in params["enc_layers"]:
        enc = encoder_layer(lp, enc, src_kmask, ones_src, num_heads)
    dec = tgt_emb
    for lp in params["dec_layers"]:
        dec = decoder_layer(lp, dec, enc, src_kmask, tgt_qmask, ones_tgt, num_heads)

    D = dec.shape[-1]
    logits = linear(dec.reshape(B * St, D), params["fc_w"], params["fc_b"])
    return logits.reshape(B, St, -1)


# ----------------------------------------------------------------------------
# Deterministic parameter init (weights pre-cast to bf16 once; biases / LN in f32)
# ----------------------------------------------------------------------------
def init_params(key, src_vocab, tgt_vocab, d_model, num_layers, d_ff, max_len):
    keys = iter(jax.random.split(key, 4096))

    def w(shape, scale=0.02):
        return jax.random.normal(next(keys), shape, jnp.float32) * scale

    def wb(shape, scale=0.02):
        return w(shape, scale).astype(jnp.bfloat16)

    def mha_p():
        return dict(
            wq=wb((d_model, d_model)), bq=w((1, d_model)),
            wk=wb((d_model, d_model)), bk=w((1, d_model)),
            wv=wb((d_model, d_model)), bv=w((1, d_model)),
            wo=wb((d_model, d_model)), bo=w((1, d_model)),
        )

    ones_d = lambda: jnp.ones((1, d_model), jnp.float32)
    zeros_d = lambda: jnp.zeros((1, d_model), jnp.float32)

    def enc_p():
        return dict(
            attn=mha_p(),
            w1=wb((d_model, d_ff)), b1=w((1, d_ff)),
            w2=wb((d_ff, d_model)), b2=w((1, d_model)),
            ln1_g=ones_d(), ln1_b=zeros_d(),
            ln2_g=ones_d(), ln2_b=zeros_d(),
        )

    def dec_p():
        return dict(
            self_attn=mha_p(),
            cross_attn=mha_p(),
            w1=wb((d_model, d_ff)), b1=w((1, d_ff)),
            w2=wb((d_ff, d_model)), b2=w((1, d_model)),
            ln1_g=ones_d(), ln1_b=zeros_d(),
            ln2_g=ones_d(), ln2_b=zeros_d(),
            ln3_g=ones_d(), ln3_b=zeros_d(),
        )

    return dict(
        enc_emb=w((src_vocab, d_model), 1.0),
        dec_emb=w((tgt_vocab, d_model), 1.0),
        pe=make_positional_encoding(max_len, d_model),
        enc_layers=[enc_p() for _ in range(num_layers)],
        dec_layers=[dec_p() for _ in range(num_layers)],
        fc_w=wb((d_model, tgt_vocab)),
        fc_b=w((1, tgt_vocab)),
    )


# ----------------------------------------------------------------------------
if __name__ == "__main__":
    # Small, module-consistent config
    SRC_VOCAB, TGT_VOCAB = 24, 24
    D_MODEL, NUM_HEADS, NUM_LAYERS, D_FF = 32, 4, 2, 64
    MAX_SEQ = 16
    B, S_SRC, S_TGT = 2, 8, 8

    key = jax.random.PRNGKey(0)
    k_p, k_src, k_tgt = jax.random.split(key, 3)

    params = init_params(k_p, SRC_VOCAB, TGT_VOCAB, D_MODEL, NUM_LAYERS, D_FF, MAX_SEQ)
    src = jax.random.randint(k_src, (B, S_SRC), 0, SRC_VOCAB, dtype=jnp.int32)
    tgt = jax.random.randint(k_tgt, (B, S_TGT), 0, TGT_VOCAB, dtype=jnp.int32)

    fwd = jax.jit(functools.partial(transformer_forward, num_heads=NUM_HEADS))
    out = fwd(params, src, tgt)
    out = jax.block_until_ready(out)
    assert out.shape == (B, S_TGT, TGT_VOCAB), out.shape
    assert jnp.all(jnp.isfinite(out))
    print("KERNEL_OK")
</pallas_src>

<mosaic_0001>
module attributes {stable_mosaic.version = 11 : i64} {
  func.func @_ffn_ln_kernel(%arg0: i32, %arg1: memref<16x32xbf16, #tpu.memory_space<vmem>>, %arg2: memref<32x64xbf16, #tpu.memory_space<vmem>>, %arg3: memref<1x64xf32, #tpu.memory_space<vmem>>, %arg4: memref<64x32xbf16, #tpu.memory_space<vmem>>, %arg5: memref<1x32xf32, #tpu.memory_space<vmem>>, %arg6: memref<1x32xf32, #tpu.memory_space<vmem>>, %arg7: memref<1x32xf32, #tpu.memory_space<vmem>>, %arg8: memref<16x32xbf16, #tpu.memory_space<vmem>>) attributes {dimension_semantics = [#tpu.dimension_semantics<parallel>], iteration_bounds = array<i64: 1>, scalar_prefetch = 0 : i64, scratch_operands = 0 : i64, tpu.core_type = #tpu.core_type<tc>, window_params = [{transform_indices = @transform_0, window_bounds = array<i64: 16, 32>}, {pipeline_mode = #tpu.pipeline_mode<synchronous>, transform_indices = @transform_1, window_bounds = array<i64: 32, 64>}, {pipeline_mode = #tpu.pipeline_mode<synchronous>, transform_indices = @transform_2, window_bounds = array<i64: 1, 64>}, {pipeline_mode = #tpu.pipeline_mode<synchronous>, transform_indices = @transform_3, window_bounds = array<i64: 64, 32>}, {pipeline_mode = #tpu.pipeline_mode<synchronous>, transform_indices = @transform_4, window_bounds = array<i64: 1, 32>}, {pipeline_mode = #tpu.pipeline_mode<synchronous>, transform_indices = @transform_5, window_bounds = array<i64: 1, 32>}, {pipeline_mode = #tpu.pipeline_mode<synchronous>, transform_indices = @transform_6, window_bounds = array<i64: 1, 32>}, {transform_indices = @transform_7, window_bounds = array<i64: 16, 32>}]} {
    %c0 = arith.constant 0 : index
    %c0_0 = arith.constant 0 : index
    %0 = vector.load %arg1[%c0, %c0_0] : memref<16x32xbf16, #tpu.memory_space<vmem>>, vector<16x32xbf16>
    %c0_1 = arith.constant 0 : index
    %c0_2 = arith.constant 0 : index
    %1 = vector.load %arg2[%c0_1, %c0_2] : memref<32x64xbf16, #tpu.memory_space<vmem>>, vector<32x64xbf16>
    %cst = arith.constant dense<0.000000e+00> : vector<16x64xf32>
    %2 = tpu.matmul %0, %1, %cst {dimension_numbers = #tpu.dot_dimension_numbers<[1], [0], [0], [1], [0, 0, 1, 1], [], []>} : vector<16x32xbf16>, vector<32x64xbf16>, vector<16x64xf32> -> vector<16x64xf32>
    %c0_3 = arith.constant 0 : index
    %c0_4 = arith.constant 0 : index
    %3 = vector.load %arg3[%c0_3, %c0_4] : memref<1x64xf32, #tpu.memory_space<vmem>>, vector<1x64xf32>
    %4 = vector.broadcast %3 : vector<1x64xf32> to vector<16x64xf32>
    %5 = arith.addf %2, %4 : vector<16x64xf32>
    %cst_5 = arith.constant 0.000000e+00 : f32
    %6 = vector.broadcast %cst_5 : f32 to vector<16x64xf32>
    %7 = arith.maximumf %5, %6 : vector<16x64xf32>
    %8 = arith.truncf %7 : vector<16x64xf32> to vector<16x64xbf16>
    %c0_6 = arith.constant 0 : index
    %c0_7 = arith.constant 0 : index
    %9 = vector.load %arg4[%c0_6, %c0_7] : memref<64x32xbf16, #tpu.memory_space<vmem>>, vector<64x32xbf16>
    %cst_8 = arith.constant dense<0.000000e+00> : vector<16x32xf32>
    %10 = tpu.matmul %8, %9, %cst_8 {dimension_numbers = #tpu.dot_dimension_numbers<[1], [0], [0], [1], [0, 0, 1, 1], [], []>} : vector<16x64xbf16>, vector<64x32xbf16>, vector<16x32xf32> -> vector<16x32xf32>
    %c0_9 = arith.constant 0 : index
    %c0_10 = arith.constant 0 : index
    %11 = vector.load %arg5[%c0_9, %c0_10] : memref<1x32xf32, #tpu.memory_space<vmem>>, vector<1x32xf32>
    %12 = vector.broadcast %11 : vector<1x32xf32> to vector<16x32xf32>
    %13 = arith.addf %10, %12 : vector<16x32xf32>
    %14 = arith.extf %0 : vector<16x32xbf16> to vector<16x32xf32>
    %15 = arith.addf %14, %13 : vector<16x32xf32>
    %cst_11 = arith.constant dense<0.000000e+00> : vector<16xf32>
    %16 = vector.multi_reduction <add>, %15, %cst_11 [1] : vector<16x32xf32> to vector<16xf32>
    %17 = vector.shape_cast %16 : vector<16xf32> to vector<16x1xf32>
    %cst_12 = arith.constant 3.200000e+01 : f32
    %18 = vector.broadcast %cst_12 : f32 to vector<16x1xf32>
    %19 = arith.divf %17, %18 : vector<16x1xf32>
    %20 = vector.broadcast %19 : vector<16x1xf32> to vector<16x32xf32>
    %21 = arith.subf %15, %20 : vector<16x32xf32>
    %22 = arith.mulf %21, %21 : vector<16x32xf32>
    %cst_13 = arith.constant dense<0.000000e+00> : vector<16xf32>
    %23 = vector.multi_reduction <add>, %22, %cst_13 [1] : vector<16x32xf32> to vector<16xf32>
    %24 = vector.shape_cast %23 : vector<16xf32> to vector<16x1xf32>
    %cst_14 = arith.constant 3.200000e+01 : f32
    %25 = vector.broadcast %cst_14 : f32 to vector<16x1xf32>
    %26 = arith.divf %24, %25 : vector<16x1xf32>
    %27 = vector.broadcast %19 : vector<16x1xf32> to vector<16x32xf32>
    %28 = arith.subf %15, %27 : vector<16x32xf32>
    %cst_15 = arith.constant 9.99999974E-6 : f32
    %29 = vector.broadcast %cst_15 : f32 to vector<16x1xf32>
    %30 = arith.addf %26, %29 : vector<16x1xf32>
    %31 = math.rsqrt %30 : vector<16x1xf32>
    %32 = vector.broadcast %31 : vector<16x1xf32> to vector<16x32xf32>
    %33 = arith.mulf %28, %32 : vector<16x32xf32>
    %c0_16 = arith.constant 0 : index
    %c0_17 = arith.constant 0 : index
    %34 = vector.load %arg6[%c0_16, %c0_17] : memref<1x32xf32, #tpu.memory_space<vmem>>, vector<1x32xf32>
    %35 = vector.broadcast %34 : vector<1x32xf32> to vector<16x32xf32>
    %36 = arith.mulf %33, %35 : vector<16x32xf32>
    %c0_18 = arith.constant 0 : index
    %c0_19 = arith.constant 0 : index
    %37 = vector.load %arg7[%c0_18, %c0_19] : memref<1x32xf32, #tpu.memory_space<vmem>>, vector<1x32xf32>
    %38 = vector.broadcast %37 : vector<1x32xf32> to vector<16x32xf32>
    %39 = arith.addf %36, %38 : vector<16x32xf32>
    %40 = arith.truncf %39 : vector<16x32xf32> to vector<16x32xbf16>
    %c0_20 = arith.constant 0 : index
    %c0_21 = arith.constant 0 : index
    %41 = vector.load %arg8[%c0_20, %c0_21] : memref<16x32xbf16, #tpu.memory_space<vmem>>, vector<16x32xbf16>
    tpu.vector_store %arg8[%c0_20, %c0_21], %40 {strides = array<i32>} : memref<16x32xbf16, #tpu.memory_space<vmem>>, vector<16x32xbf16>,
    return
  }
  func.func @transform_0(%arg0: i32) -> (i32, i32) {
    %c0_i32 = arith.constant 0 : i32
    %c0_i32_0 = arith.constant 0 : i32
    return %arg0, %c0_i32 : i32, i32
  }
  func.func @transform_1(%arg0: i32) -> (i32, i32) {
    %c0_i32 = arith.constant 0 : i32
    %c0_i32_0 = arith.constant 0 : i32
    %c0_i32_1 = arith.constant 0 : i32
    return %c0_i32, %c0_i32_0 : i32, i32
  }
  func.func @transform_2(%arg0: i32) -> (i32, i32) {
    %c0_i32 = arith.constant 0 : i32
    %c0_i32_0 = arith.constant 0 : i32
    %c0_i32_1 = arith.constant 0 : i32
    return %c0_i32, %c0_i32_0 : i32, i32
  }
  func.func @transform_3(%arg0: i32) -> (i32, i32) {
    %c0_i32 = arith.constant 0 : i32
    %c0_i32_0 = arith.constant 0 : i32
    %c0_i32_1 = arith.constant 0 : i32
    return %c0_i32, %c0_i32_0 : i32, i32
  }
  func.func @transform_4(%arg0: i32) -> (i32, i32) {
    %c0_i32 = arith.constant 0 : i32
    %c0_i32_0 = arith.constant 0 : i32
    %c0_i32_1 = arith.constant 0 : i32
    return %c0_i32, %c0_i32_0 : i32, i32
  }
  func.func @transform_5(%arg0: i32) -> (i32, i32) {
    %c0_i32 = arith.constant 0 : i32
    %c0_i32_0 = arith.constant 0 : i32
    %c0_i32_1 = arith.constant 0 : i32
    return %c0_i32, %c0_i32_0 : i32, i32
  }
  func.func @transform_6(%arg0: i32) -> (i32, i32) {
    %c0_i32 = arith.constant 0 : i32
    %c0_i32_0 = arith.constant 0 : i32
    %c0_i32_1 = arith.constant 0 : i32
    return %c0_i32, %c0_i32_0 : i32, i32
  }
  func.func @transform_7(%arg0: i32) -> (i32, i32) {
    %c0_i32 = arith.constant 0 : i32
    %c0_i32_0 = arith.constant 0 : i32
    return %arg0, %c0_i32 : i32, i32
  }
}

module attributes {stable_mosaic.version = 11 : i64} {
  func.func @_mha_ln_kernel(%arg0: i32, %arg1: i32, %arg2: memref<1x8x32xbf16, #tpu.memory_space<vmem>>, %arg3: memref<1x8x32xbf16, #tpu.memory_space<vmem>>, %arg4: memref<1x8x1xi32, #tpu.memory_space<vmem>>, %arg5: memref<1x1x8xi32, #tpu.memory_space<vmem>>, %arg6: memref<32x32xbf16, #tpu.memory_space<vmem>>, %arg7: memref<1x32xf32, #tpu.memory_space<vmem>>, %arg8: memref<32x32xbf16, #tpu.memory_space<vmem>>, %arg9: memref<1x32xf32, #tpu.memory_space<vmem>>, %arg10: memref<32x32xbf16, #tpu.memory_space<vmem>>, %arg11: memref<1x32xf32, #tpu.memory_space<vmem>>, %arg12: memref<32x32xbf16, #tpu.memory_space<vmem>>, %arg13: memref<1x32xf32, #tpu.memory_space<vmem>>, %arg14: memref<1x32xf32, #tpu.memory_space<vmem>>, %arg15: memref<1x32xf32, #tpu.memory_space<vmem>>, %arg16: memref<1x8x32xbf16, #tpu.memory_space<vmem>>, %arg17: memref<4x8x8xbf16, #tpu.memory_space<vmem>>, %arg18: memref<4x8x8xbf16, #tpu.memory_space<vmem>>) attributes {dimension_semantics = [#tpu.dimension_semantics<parallel>, #tpu.dimension_semantics<arbitrary>], iteration_bounds = array<i64: 2, 1>, scalar_prefetch = 0 : i64, scratch_operands = 2 : i64, tpu.core_type = #tpu.core_type<tc>, window_params = [{transform_indices = @transform_0, window_bounds = array<i64: 1, 8, 32>}, {transform_indices = @transform_1, window_bounds = array<i64: 1, 8, 32>}, {transform_indices = @transform_2, window_bounds = array<i64: 1, 8, 1>}, {transform_indices = @transform_3, window_bounds = array<i64: 1, 1, 8>}, {pipeline_mode = #tpu.pipeline_mode<synchronous>, transform_indices = @transform_4, window_bounds = array<i64: 32, 32>}, {pipeline_mode = #tpu.pipeline_mode<synchronous>, transform_indices = @transform_5, window_bounds = array<i64: 1, 32>}, {pipeline_mode = #tpu.pipeline_mode<synchronous>, transform_indices = @transform_6, window_bounds = array<i64: 32, 32>}, {pipeline_mode = #tpu.pipeline_mode<synchronous>, transform_indices = @transform_7, window_bounds = array<i64: 1, 32>}, {pipeline_mode = #tpu.pipeline_mode<synchronous>, transform_indices = @transform_8, window_bounds = array<i64: 32, 32>}, {pipeline_mode = #tpu.pipeline_mode<synchronous>, transform_indices = @transform_9, window_bounds = array<i64: 1, 32>}, {pipeline_mode = #tpu.pipeline_mode<synchronous>, transform_indices = @transform_10, window_bounds = array<i64: 32, 32>}, {pipeline_mode = #tpu.pipeline_mode<synchronous>, transform_indices = @transform_11, window_bounds = array<i64: 1, 32>}, {pipeline_mode = #tpu.pipeline_mode<synchronous>, transform_indices = @transform_12, window_bounds = array<i64: 1, 32>}, {pipeline_mode = #tpu.pipeline_mode<synchronous>, transform_indices = @transform_13, window_bounds = array<i64: 1, 32>}, {transform_indices = @transform_14, window_bounds = array<i64: 1, 8, 32>}]} {
    %c0_i32 = arith.constant 0 : i32
    %0 = arith.cmpi eq, %arg1, %c0_i32 : i32
    %1 = arith.extui %0 : i1 to i32
    %c0_i32_0 = arith.constant 0 : i32
    %2 = arith.cmpi ne, %1, %c0_i32_0 : i32
    scf.if %2 {
      %c0_45 = arith.constant 0 : index
      %c0_46 = arith.constant 0 : index
      %c0_47 = arith.constant 0 : index
      %85 = vector.load %arg3[%c0_45, %c0_46, %c0_47] : memref<1x8x32xbf16, #tpu.memory_space<vmem>>, vector<1x8x32xbf16>
      %86 = vector.shape_cast %85 : vector<1x8x32xbf16> to vector<8x32xbf16>
      %c0_48 = arith.constant 0 : index
      %c0_49 = arith.constant 0 : index
      %87 = vector.load %arg8[%c0_48, %c0_49] : memref<32x32xbf16, #tpu.memory_space<vmem>>, vector<32x32xbf16>
      %cst_50 = arith.constant dense<0.000000e+00> : vector<8x32xf32>
      %88 = tpu.matmul %86, %87, %cst_50 {dimension_numbers = #tpu.dot_dimension_numbers<[1], [0], [0], [1], [0, 0, 1, 1], [], []>} : vector<8x32xbf16>, vector<32x32xbf16>, vector<8x32xf32> -> vector<8x32xf32>
      %c0_51 = arith.constant 0 : index
      %c0_52 = arith.constant 0 : index
      %89 = vector.load %arg9[%c0_51, %c0_52] : memref<1x32xf32, #tpu.memory_space<vmem>>, vector<1x32xf32>
      %90 = vector.broadcast %89 : vector<1x32xf32> to vector<8x32xf32>
      %91 = arith.addf %88, %90 : vector<8x32xf32>
      %c0_53 = arith.constant 0 : index
      %c0_54 = arith.constant 0 : index
      %92 = vector.load %arg10[%c0_53, %c0_54] : memref<32x32xbf16, #tpu.memory_space<vmem>>, vector<32x32xbf16>
      %cst_55 = arith.constant dense<0.000000e+00> : vector<8x32xf32>
      %93 = tpu.matmul %86, %92, %cst_55 {dimension_numbers = #tpu.dot_dimension_numbers<[1], [0], [0], [1], [0, 0, 1, 1], [], []>} : vector<8x32xbf16>, vector<32x32xbf16>, vector<8x32xf32> -> vector<8x32xf32>
      %c0_56 = arith.constant 0 : index
      %c0_57 = arith.constant 0 : index
      %94 = vector.load %arg11[%c0_56, %c0_57] : memref<1x32xf32, #tpu.memory_space<vmem>>, vector<1x32xf32>
      %95 = vector.broadcast %94 : vector<1x32xf32> to vector<8x32xf32>
      %96 = arith.addf %93, %95 : vector<8x32xf32>
      %97 = arith.truncf %91 : vector<8x32xf32> to vector<8x32xbf16>
      %98 = vector.shape_cast %97 : vector<8x32xbf16> to vector<8x4x8xbf16>
      %99 = tpu.transpose %98, [1, 0, 2] : vector<8x4x8xbf16> -> vector<4x8x8xbf16>
      %c0_58 = arith.constant 0 : index
      %c0_59 = arith.constant 0 : index
      %c0_60 = arith.constant 0 : index
      %100 = vector.load %arg17[%c0_58, %c0_59, %c0_60] : memref<4x8x8xbf16, #tpu.memory_space<vmem>>, vector<4x8x8xbf16>
      tpu.vector_store %arg17[%c0_58, %c0_59, %c0_60], %99 {strides = array<i32>} : memref<4x8x8xbf16, #tpu.memory_space<vmem>>, vector<4x8x8xbf16>,
      %101 = arith.truncf %96 : vector<8x32xf32> to vector<8x32xbf16>
      %102 = vector.shape_cast %101 : vector<8x32xbf16> to vector<8x4x8xbf16>
      %103 = tpu.transpose %102, [1, 0, 2] : vector<8x4x8xbf16> -> vector<4x8x8xbf16>
      %c0_61 = arith.constant 0 : index
      %c0_62 = arith.constant 0 : index
      %c0_63 = arith.constant 0 : index
      %104 = vector.load %arg18[%c0_61, %c0_62, %c0_63] : memref<4x8x8xbf16, #tpu.memory_space<vmem>>, vector<4x8x8xbf16>
      tpu.vector_store %arg18[%c0_61, %c0_62, %c0_63], %103 {strides = array<i32>} : memref<4x8x8xbf16, #tpu.memory_space<vmem>>, vector<4x8x8xbf16>,
    } else {
    }
    %c0 = arith.constant 0 : index
    %c0_1 = arith.constant 0 : index
    %c0_2 = arith.constant 0 : index
    %3 = vector.load %arg2[%c0, %c0_1, %c0_2] : memref<1x8x32xbf16, #tpu.memory_space<vmem>>, vector<1x8x32xbf16>
    %4 = vector.shape_cast %3 : vector<1x8x32xbf16> to vector<8x32xbf16>
    %c0_3 = arith.constant 0 : index
    %c0_4 = arith.constant 0 : index
    %5 = vector.load %arg6[%c0_3, %c0_4] : memref<32x32xbf16, #tpu.memory_space<vmem>>, vector<32x32xbf16>
    %cst = arith.constant dense<0.000000e+00> : vector<8x32xf32>
    %6 = tpu.matmul %4, %5, %cst {dimension_numbers = #tpu.dot_dimension_numbers<[1], [0], [0], [1], [0, 0, 1, 1], [], []>} : vector<8x32xbf16>, vector<32x32xbf16>, vector<8x32xf32> -> vector<8x32xf32>
    %c0_5 = arith.constant 0 : index
    %c0_6 = arith.constant 0 : index
    %7 = vector.load %arg7[%c0_5, %c0_6] : memref<1x32xf32, #tpu.memory_space<vmem>>, vector<1x32xf32>
    %8 = vector.broadcast %7 : vector<1x32xf32> to vector<8x32xf32>
    %9 = arith.addf %6, %8 : vector<8x32xf32>
    %cst_7 = arith.constant 0.353553385 : f32
    %10 = vector.broadcast %cst_7 : f32 to vector<8x32xf32>
    %11 = arith.mulf %9, %10 : vector<8x32xf32>
    %12 = arith.truncf %11 : vector<8x32xf32> to vector<8x32xbf16>
    %13 = vector.shape_cast %12 : vector<8x32xbf16> to vector<8x4x8xbf16>
    %14 = tpu.transpose %13, [1, 0, 2] : vector<8x4x8xbf16> -> vector<4x8x8xbf16>
    %c0_8 = arith.constant 0 : index
    %c0_9 = arith.constant 0 : index
    %c0_10 = arith.constant 0 : index
    %15 = vector.load %arg4[%c0_8, %c0_9, %c0_10] : memref<1x8x1xi32, #tpu.memory_space<vmem>>, vector<1x8x1xi32>
    %16 = vector.shape_cast %15 : vector<1x8x1xi32> to vector<8x1xi32>
    %c0_i32_11 = arith.constant 0 : i32
    %17 = vector.broadcast %c0_i32_11 : i32 to vector<8x1xi32>
    %18 = arith.cmpi ne, %16, %17 : vector<8x1xi32>
    %c0_12 = arith.constant 0 : index
    %c0_13 = arith.constant 0 : index
    %c0_14 = arith.constant 0 : index
    %19 = vector.load %arg5[%c0_12, %c0_13, %c0_14] : memref<1x1x8xi32, #tpu.memory_space<vmem>>, vector<1x1x8xi32>
    %20 = vector.shape_cast %19 : vector<1x1x8xi32> to vector<1x8xi32>
    %c0_i32_15 = arith.constant 0 : i32
    %21 = vector.broadcast %c0_i32_15 : i32 to vector<1x8xi32>
    %22 = arith.cmpi ne, %20, %21 : vector<1x8xi32>
    %23 = vector.broadcast %18 : vector<8x1xi1> to vector<8x8xi1>
    %24 = vector.broadcast %22 : vector<1x8xi1> to vector<8x8xi1>
    %25 = arith.andi %23, %24 : vector<8x8xi1>
    %cst_16 = arith.constant 0.000000e+00 : f32
    %cst_17 = arith.constant -1.000000e+09 : f32
    %26 = vector.broadcast %cst_16 : f32 to vector<8x8xf32>
    %27 = vector.broadcast %cst_17 : f32 to vector<8x8xf32>
    %28 = arith.select %25, %26, %27 : vector<8x8xi1>, vector<8x8xf32>
    %c0_18 = arith.constant 0 : index
    %c0_19 = arith.constant 0 : index
    %c0_20 = arith.constant 0 : index
    %29 = vector.load %arg17[%c0_18, %c0_19, %c0_20] : memref<4x8x8xbf16, #tpu.memory_space<vmem>>, vector<4x8x8xbf16>
    "tpu.trace_start"() <{level = 10 : i32, message = "hqd,hkd->hqk"}> : () -> ()
    %cst_21 = arith.constant dense<0.000000e+00> : vector<4x8x8xf32>
    %30 = tpu.matmul %14, %29, %cst_21 {dimension_numbers = #tpu.dot_dimension_numbers<[2], [2], [1], [1], [0, 0, 0, 1, 1, 1], [0], [0]>} : vector<4x8x8xbf16>, vector<4x8x8xbf16>, vector<4x8x8xf32> -> vector<4x8x8xf32>
    "tpu.trace_stop"() : () -> ()
    %31 = vector.shape_cast %28 : vector<8x8xf32> to vector<1x8x8xf32>
    %32 = vector.broadcast %31 : vector<1x8x8xf32> to vector<4x8x8xf32>
    %33 = arith.addf %30, %32 : vector<4x8x8xf32>
    %cst_22 = arith.constant dense<0xFF800000> : vector<4x8xf32>
    %34 = vector.multi_reduction <maximumf>, %33, %cst_22 [2] : vector<4x8x8xf32> to vector<4x8xf32>
    %35 = vector.shape_cast %34 : vector<4x8xf32> to vector<4x8x1xf32>
    %36 = vector.broadcast %35 : vector<4x8x1xf32> to vector<4x8x8xf32>
    %37 = arith.subf %33, %36 : vector<4x8x8xf32>
    %38 = math.exp %37 : vector<4x8x8xf32>
    %cst_23 = arith.constant dense<0.000000e+00> : vector<4x8xf32>
    %39 = vector.multi_reduction <add>, %38, %cst_23 [2] : vector<4x8x8xf32> to vector<4x8xf32>
    %40 = vector.shape_cast %39 : vector<4x8xf32> to vector<4x8x1xf32>
    %41 = tpu.reciprocal %40 {approx = true} : vector<4x8x1xf32> -> vector<4x8x1xf32>
    %42 = vector.broadcast %41 : vector<4x8x1xf32> to vector<4x8x8xf32>
    %43 = arith.mulf %38, %42 : vector<4x8x8xf32>
    %44 = arith.truncf %43 : vector<4x8x8xf32> to vector<4x8x8xbf16>
    %c0_24 = arith.constant 0 : index
    %c0_25 = arith.constant 0 : index
    %c0_26 = arith.constant 0 : index
    %45 = vector.load %arg18[%c0_24, %c0_25, %c0_26] : memref<4x8x8xbf16, #tpu.memory_space<vmem>>, vector<4x8x8xbf16>
    "tpu.trace_start"() <{level = 10 : i32, message = "hqk,hkd->hqd"}> : () -> ()
    %cst_27 = arith.constant dense<0.000000e+00> : vector<4x8x8xf32>
    %46 = tpu.matmul %44, %45, %cst_27 {dimension_numbers = #tpu.dot_dimension_numbers<[2], [1], [1], [2], [0, 0, 0, 1, 1, 2], [0], [0]>} : vector<4x8x8xbf16>, vector<4x8x8xbf16>, vector<4x8x8xf32> -> vector<4x8x8xf32>
    "tpu.trace_stop"() : () -> ()
    %47 = arith.truncf %46 : vector<4x8x8xf32> to vector<4x8x8xbf16>
    %48 = tpu.transpose %47, [1, 0, 2] : vector<4x8x8xbf16> -> vector<8x4x8xbf16>
    %49 = vector.shape_cast %48 : vector<8x4x8xbf16> to vector<8x32xbf16>
    %c0_28 = arith.constant 0 : index
    %c0_29 = arith.constant 0 : index
    %50 = vector.load %arg12[%c0_28, %c0_29] : memref<32x32xbf16, #tpu.memory_space<vmem>>, vector<32x32xbf16>
    %cst_30 = arith.constant dense<0.000000e+00> : vector<8x32xf32>
    %51 = tpu.matmul %49, %50, %cst_30 {dimension_numbers = #tpu.dot_dimension_numbers<[1], [0], [0], [1], [0, 0, 1, 1], [], []>} : vector<8x32xbf16>, vector<32x32xbf16>, vector<8x32xf32> -> vector<8x32xf32>
    %c0_31 = arith.constant 0 : index
    %c0_32 = arith.constant 0 : index
    %52 = vector.load %arg13[%c0_31, %c0_32] : memref<1x32xf32, #tpu.memory_space<vmem>>, vector<1x32xf32>
    %53 = vector.broadcast %52 : vector<1x32xf32> to vector<8x32xf32>
    %54 = arith.addf %51, %53 : vector<8x32xf32>
    %55 = arith.extf %4 : vector<8x32xbf16> to vector<8x32xf32>
    %56 = arith.addf %55, %54 : vector<8x32xf32>
    %cst_33 = arith.constant dense<0.000000e+00> : vector<8xf32>
    %57 = vector.multi_reduction <add>, %56, %cst_33 [1] : vector<8x32xf32> to vector<8xf32>
    %58 = vector.shape_cast %57 : vector<8xf32> to vector<8x1xf32>
    %cst_34 = arith.constant 3.200000e+01 : f32
    %59 = vector.broadcast %cst_34 : f32 to vector<8x1xf32>
    %60 = arith.divf %58, %59 : vector<8x1xf32>
    %61 = vector.broadcast %60 : vector<8x1xf32> to vector<8x32xf32>
    %62 = arith.subf %56, %61 : vector<8x32xf32>
    %63 = arith.mulf %62, %62 : vector<8x32xf32>
    %cst_35 = arith.constant dense<0.000000e+00> : vector<8xf32>
    %64 = vector.multi_reduction <add>, %63, %cst_35 [1] : vector<8x32xf32> to vector<8xf32>
    %65 = vector.shape_cast %64 : vector<8xf32> to vector<8x1xf32>
    %cst_36 = arith.constant 3.200000e+01 : f32
    %66 = vector.broadcast %cst_36 : f32 to vector<8x1xf32>
    %67 = arith.divf %65, %66 : vector<8x1xf32>
    %68 = vector.broadcast %60 : vector<8x1xf32> to vector<8x32xf32>
    %69 = arith.subf %56, %68 : vector<8x32xf32>
    %cst_37 = arith.constant 9.99999974E-6 : f32
    %70 = vector.broadcast %cst_37 : f32 to vector<8x1xf32>
    %71 = arith.addf %67, %70 : vector<8x1xf32>
    %72 = math.rsqrt %71 : vector<8x1xf32>
    %73 = vector.broadcast %72 : vector<8x1xf32> to vector<8x32xf32>
    %74 = arith.mulf %69, %73 : vector<8x32xf32>
    %c0_38 = arith.constant 0 : index
    %c0_39 = arith.constant 0 : index
    %75 = vector.load %arg14[%c0_38, %c0_39] : memref<1x32xf32, #tpu.memory_space<vmem>>, vector<1x32xf32>
    %76 = vector.broadcast %75 : vector<1x32xf32> to vector<8x32xf32>
    %77 = arith.mulf %74, %76 : vector<8x32xf32>
    %c0_40 = arith.constant 0 : index
    %c0_41 = arith.constant 0 : index
    %78 = vector.load %arg15[%c0_40, %c0_41] : memref<1x32xf32, #tpu.memory_space<vmem>>, vector<1x32xf32>
    %79 = vector.broadcast %78 : vector<1x32xf32> to vector<8x32xf32>
    %80 = arith.addf %77, %79 : vector<8x32xf32>
    %81 = arith.truncf %80 : vector<8x32xf32> to vector<8x32xbf16>
    %c0_42 = arith.constant 0 : index
    %c0_43 = arith.constant 0 : index
    %c0_44 = arith.constant 0 : index
    %82 = vector.load %arg16[%c0_42, %c0_43, %c0_44] : memref<1x8x32xbf16, #tpu.memory_space<vmem>>, vector<1x8x32xbf16>
    %83 = vector.shape_cast %82 : vector<1x8x32xbf16> to vector<8x32xbf16>
    %84 = vector.shape_cast %81 : vector<8x32xbf16> to vector<1x8x32xbf16>
    tpu.vector_store %arg16[%c0_42, %c0_43, %c0_44], %84 {strides = array<i32>} : memref<1x8x32xbf16, #tpu.memory_space<vmem>>, vector<1x8x32xbf16>,
    return
  }
  func.func @transform_0(%arg0: i32, %arg1: i32) -> (i32, i32, i32) {
    %c0_i32 = arith.constant 0 : i32
    %c0_i32_0 = arith.constant 0 : i32
    return %arg0, %arg1, %c0_i32 : i32, i32, i32
  }
  func.func @transform_1(%arg0: i32, %arg1: i32) -> (i32, i32, i32) {
    %c0_i32 = arith.constant 0 : i32
    %c0_i32_0 = arith.constant 0 : i32
    %c0_i32_1 = arith.constant 0 : i32
    return %arg0, %c0_i32, %c0_i32_0 : i32, i32, i32
  }
  func.func @transform_2(%arg0: i32, %arg1: i32) -> (i32, i32, i32) {
    %c0_i32 = arith.constant 0 : i32
    %c0_i32_0 = arith.constant 0 : i32
    return %arg0, %arg1, %c0_i32 : i32, i32, i32
  }
  func.func @transform_3(%arg0: i32, %arg1: i32) -> (i32, i32, i32) {
    %c0_i32 = arith.constant 0 : i32
    %c0_i32_0 = arith.constant 0 : i32
    %c0_i32_1 = arith.constant 0 : i32
    return %arg0, %c0_i32, %c0_i32_0 : i32, i32, i32
  }
  func.func @transform_4(%arg0: i32, %arg1: i32) -> (i32, i32) {
    %c0_i32 = arith.constant 0 : i32
    %c0_i32_0 = arith.constant 0 : i32
    %c0_i32_1 = arith.constant 0 : i32
    return %c0_i32, %c0_i32_0 : i32, i32
  }
  func.func @transform_5(%arg0: i32, %arg1: i32) -> (i32, i32) {
    %c0_i32 = arith.constant 0 : i32
    %c0_i32_0 = arith.constant 0 : i32
    %c0_i32_1 = arith.constant 0 : i32
    return %c0_i32, %c0_i32_0 : i32, i32
  }
  func.func @transform_6(%arg0: i32, %arg1: i32) -> (i32, i32) {
    %c0_i32 = arith.constant 0 : i32
    %c0_i32_0 = arith.constant 0 : i32
    %c0_i32_1 = arith.constant 0 : i32
    return %c0_i32, %c0_i32_0 : i32, i32
  }
  func.func @transform_7(%arg0: i32, %arg1: i32) -> (i32, i32) {
    %c0_i32 = arith.constant 0 : i32
    %c0_i32_0 = arith.constant 0 : i32
    %c0_i32_1 = arith.constant 0 : i32
    return %c0_i32, %c0_i32_0 : i32, i32
  }
  func.func @transform_8(%arg0: i32, %arg1: i32) -> (i32, i32) {
    %c0_i32 = arith.constant 0 : i32
    %c0_i32_0 = arith.constant 0 : i32
    %c0_i32_1 = arith.constant 0 : i32
    return %c0_i32, %c0_i32_0 : i32, i32
  }
  func.func @transform_9(%arg0: i32, %arg1: i32) -> (i32, i32) {
    %c0_i32 = arith.constant 0 : i32
    %c0_i32_0 = arith.constant 0 : i32
    %c0_i32_1 = arith.constant 0 : i32
    return %c0_i32, %c0_i32_0 : i32, i32
  }
  func.func @transform_10(%arg0: i32, %arg1: i32) -> (i32, i32) {
    %c0_i32 = arith.constant 0 : i32
    %c0_i32_0 = arith.constant 0 : i32
    %c0_i32_1 = arith.constant 0 : i32
    return %c0_i32, %c0_i32_0 : i32, i32
  }
  func.func @transform_11(%arg0: i32, %arg1: i32) -> (i32, i32) {
    %c0_i32 = arith.constant 0 : i32
    %c0_i32_0 = arith.constant 0 : i32
    %c0_i32_1 = arith.constant 0 : i32
    return %c0_i32, %c0_i32_0 : i32, i32
  }
  func.func @transform_12(%arg0: i32, %arg1: i32) -> (i32, i32) {
    %c0_i32 = arith.constant 0 : i32
    %c0_i32_0 = arith.constant 0 : i32
    %c0_i32_1 = arith.constant 0 : i32
    return %c0_i32, %c0_i32_0 : i32, i32
  }
  func.func @transform_13(%arg0: i32, %arg1: i32) -> (i32, i32) {
    %c0_i32 = arith.constant 0 : i32
    %c0_i32_0 = arith.constant 0 : i32
    %c0_i32_1 = arith.constant 0 : i32
    return %c0_i32, %c0_i32_0 : i32, i32
  }
  func.func @transform_14(%arg0: i32, %arg1: i32) -> (i32, i32, i32) {
    %c0_i32 = arith.constant 0 : i32
    %c0_i32_0 = arith.constant 0 : i32
    return %arg0, %arg1, %c0_i32 : i32, i32, i32
  }
}

module attributes {stable_mosaic.version = 11 : i64} {
  func.func @_linear_kernel(%arg0: i32, %arg1: i32, %arg2: memref<16x32xbf16, #tpu.memory_space<vmem>>, %arg3: memref<32x24xbf16, #tpu.memory_space<vmem>>, %arg4: memref<1x24xf32, #tpu.memory_space<vmem>>, %arg5: memref<16x24xf32, #tpu.memory_space<vmem>>) attributes {dimension_semantics = [#tpu.dimension_semantics<parallel>, #tpu.dimension_semantics<parallel>], iteration_bounds = array<i64: 1, 1>, scalar_prefetch = 0 : i64, scratch_operands = 0 : i64, tpu.core_type = #tpu.core_type<tc>, window_params = [{transform_indices = @transform_0, window_bounds = array<i64: 16, 32>}, {transform_indices = @transform_1, window_bounds = array<i64: 32, 24>}, {transform_indices = @transform_2, window_bounds = array<i64: 1, 24>}, {transform_indices = @transform_3, window_bounds = array<i64: 16, 24>}]} {
    %c0 = arith.constant 0 : index
    %c0_0 = arith.constant 0 : index
    %0 = vector.load %arg2[%c0, %c0_0] : memref<16x32xbf16, #tpu.memory_space<vmem>>, vector<16x32xbf16>
    %c0_1 = arith.constant 0 : index
    %c0_2 = arith.constant 0 : index
    %1 = vector.load %arg3[%c0_1, %c0_2] : memref<32x24xbf16, #tpu.memory_space<vmem>>, vector<32x24xbf16>
    %cst = arith.constant dense<0.000000e+00> : vector<16x24xf32>
    %2 = tpu.matmul %0, %1, %cst {dimension_numbers = #tpu.dot_dimension_numbers<[1], [0], [0], [1], [0, 0, 1, 1], [], []>} : vector<16x32xbf16>, vector<32x24xbf16>, vector<16x24xf32> -> vector<16x24xf32>
    %c0_3 = arith.constant 0 : index
    %c0_4 = arith.constant 0 : index
    %3 = vector.load %arg4[%c0_3, %c0_4] : memref<1x24xf32, #tpu.memory_space<vmem>>, vector<1x24xf32>
    %4 = vector.broadcast %3 : vector<1x24xf32> to vector<16x24xf32>
    %5 = arith.addf %2, %4 : vector<16x24xf32>
    %c0_5 = arith.constant 0 : index
    %c0_6 = arith.constant 0 : index
    %6 = vector.load %arg5[%c0_5, %c0_6] : memref<16x24xf32, #tpu.memory_space<vmem>>, vector<16x24xf32>
    tpu.vector_store %arg5[%c0_5, %c0_6], %5 {strides = array<i32>} : memref<16x24xf32, #tpu.memory_space<vmem>>, vector<16x24xf32>,
    return
  }
  func.func @transform_0(%arg0: i32, %arg1: i32) -> (i32, i32) {
    %c0_i32 = arith.constant 0 : i32
    %c0_i32_0 = arith.constant 0 : i32
    return %arg0, %c0_i32 : i32, i32
  }
  func.func @transform_1(%arg0: i32, %arg1: i32) -> (i32, i32) {
    %c0_i32 = arith.constant 0 : i32
    %c0_i32_0 = arith.constant 0 : i32
    return %c0_i32, %arg1 : i32, i32
  }
  func.func @transform_2(%arg0: i32, %arg1: i32) -> (i32, i32) {
    %c0_i32 = arith.constant 0 : i32
    %c0_i32_0 = arith.constant 0 : i32
    return %c0_i32, %arg1 : i32, i32
  }
  func.func @transform_3(%arg0: i32, %arg1: i32) -> (i32, i32) {
    %c0_i32 = arith.constant 0 : i32
    return %arg0, %arg1 : i32, i32
  }
}

module attributes {stable_mosaic.version = 11 : i64} {
  func.func @_mha_ln_kernel(%arg0: i32, %arg1: i32, %arg2: memref<1x8x32xbf16, #tpu.memory_space<vmem>>, %arg3: memref<1x8x32xbf16, #tpu.memory_space<vmem>>, %arg4: memref<1x8x1xi32, #tpu.memory_space<vmem>>, %arg5: memref<1x1x8xi32, #tpu.memory_space<vmem>>, %arg6: memref<32x32xbf16, #tpu.memory_space<vmem>>, %arg7: memref<1x32xf32, #tpu.memory_space<vmem>>, %arg8: memref<32x32xbf16, #tpu.memory_space<vmem>>, %arg9: memref<1x32xf32, #tpu.memory_space<vmem>>, %arg10: memref<32x32xbf16, #tpu.memory_space<vmem>>, %arg11: memref<1x32xf32, #tpu.memory_space<vmem>>, %arg12: memref<32x32xbf16, #tpu.memory_space<vmem>>, %arg13: memref<1x32xf32, #tpu.memory_space<vmem>>, %arg14: memref<1x32xf32, #tpu.memory_space<vmem>>, %arg15: memref<1x32xf32, #tpu.memory_space<vmem>>, %arg16: memref<1x8x32xbf16, #tpu.memory_space<vmem>>, %arg17: memref<4x8x8xbf16, #tpu.memory_space<vmem>>, %arg18: memref<4x8x8xbf16, #tpu.memory_space<vmem>>) attributes {dimension_semantics = [#tpu.dimension_semantics<parallel>, #tpu.dimension_semantics<arbitrary>], iteration_bounds = array<i64: 2, 1>, scalar_prefetch = 0 : i64, scratch_operands = 2 : i64, tpu.core_type = #tpu.core_type<tc>, window_params = [{transform_indices = @transform_0, window_bounds = array<i64: 1, 8, 32>}, {transform_indices = @transform_1, window_bounds = array<i64: 1, 8, 32>}, {transform_indices = @transform_2, window_bounds = array<i64: 1, 8, 1>}, {transform_indices = @transform_3, window_bounds = array<i64: 1, 1, 8>}, {pipeline_mode = #tpu.pipeline_mode<synchronous>, transform_indices = @transform_4, window_bounds = array<i64: 32, 32>}, {pipeline_mode = #tpu.pipeline_mode<synchronous>, transform_indices = @transform_5, window_bounds = array<i64: 1, 32>}, {pipeline_mode = #tpu.pipeline_mode<synchronous>, transform_indices = @transform_6, window_bounds = array<i64: 32, 32>}, {pipeline_mode = #tpu.pipeline_mode<synchronous>, transform_indices = @transform_7, window_bounds = array<i64: 1, 32>}, {pipeline_mode = #tpu.pipeline_mode<synchronous>, transform_indices = @transform_8, window_bounds = array<i64: 32, 32>}, {pipeline_mode = #tpu.pipeline_mode<synchronous>, transform_indices = @transform_9, window_bounds = array<i64: 1, 32>}, {pipeline_mode = #tpu.pipeline_mode<synchronous>, transform_indices = @transform_10, window_bounds = array<i64: 32, 32>}, {pipeline_mode = #tpu.pipeline_mode<synchronous>, transform_indices = @transform_11, window_bounds = array<i64: 1, 32>}, {pipeline_mode = #tpu.pipeline_mode<synchronous>, transform_indices = @transform_12, window_bounds = array<i64: 1, 32>}, {pipeline_mode = #tpu.pipeline_mode<synchronous>, transform_indices = @transform_13, window_bounds = array<i64: 1, 32>}, {transform_indices = @transform_14, window_bounds = array<i64: 1, 8, 32>}]} {
    %c0_i32 = arith.constant 0 : i32
    %0 = arith.cmpi eq, %arg1, %c0_i32 : i32
    %1 = arith.extui %0 : i1 to i32
    %c0_i32_0 = arith.constant 0 : i32
    %2 = arith.cmpi ne, %1, %c0_i32_0 : i32
    scf.if %2 {
      %c0_45 = arith.constant 0 : index
      %c0_46 = arith.constant 0 : index
      %c0_47 = arith.constant 0 : index
      %92 = vector.load %arg3[%c0_45, %c0_46, %c0_47] : memref<1x8x32xbf16, #tpu.memory_space<vmem>>, vector<1x8x32xbf16>
      %93 = vector.shape_cast %92 : vector<1x8x32xbf16> to vector<8x32xbf16>
      %c0_48 = arith.constant 0 : index
      %c0_49 = arith.constant 0 : index
      %94 = vector.load %arg8[%c0_48, %c0_49] : memref<32x32xbf16, #tpu.memory_space<vmem>>, vector<32x32xbf16>
      %cst_50 = arith.constant dense<0.000000e+00> : vector<8x32xf32>
      %95 = tpu.matmul %93, %94, %cst_50 {dimension_numbers = #tpu.dot_dimension_numbers<[1], [0], [0], [1], [0, 0, 1, 1], [], []>} : vector<8x32xbf16>, vector<32x32xbf16>, vector<8x32xf32> -> vector<8x32xf32>
      %c0_51 = arith.constant 0 : index
      %c0_52 = arith.constant 0 : index
      %96 = vector.load %arg9[%c0_51, %c0_52] : memref<1x32xf32, #tpu.memory_space<vmem>>, vector<1x32xf32>
      %97 = vector.broadcast %96 : vector<1x32xf32> to vector<8x32xf32>
      %98 = arith.addf %95, %97 : vector<8x32xf32>
      %c0_53 = arith.constant 0 : index
      %c0_54 = arith.constant 0 : index
      %99 = vector.load %arg10[%c0_53, %c0_54] : memref<32x32xbf16, #tpu.memory_space<vmem>>, vector<32x32xbf16>
      %cst_55 = arith.constant dense<0.000000e+00> : vector<8x32xf32>
      %100 = tpu.matmul %93, %99, %cst_55 {dimension_numbers = #tpu.dot_dimension_numbers<[1], [0], [0], [1], [0, 0, 1, 1], [], []>} : vector<8x32xbf16>, vector<32x32xbf16>, vector<8x32xf32> -> vector<8x32xf32>
      %c0_56 = arith.constant 0 : index
      %c0_57 = arith.constant 0 : index
      %101 = vector.load %arg11[%c0_56, %c0_57] : memref<1x32xf32, #tpu.memory_space<vmem>>, vector<1x32xf32>
      %102 = vector.broadcast %101 : vector<1x32xf32> to vector<8x32xf32>
      %103 = arith.addf %100, %102 : vector<8x32xf32>
      %104 = arith.truncf %98 : vector<8x32xf32> to vector<8x32xbf16>
      %105 = vector.shape_cast %104 : vector<8x32xbf16> to vector<8x4x8xbf16>
      %106 = tpu.transpose %105, [1, 0, 2] : vector<8x4x8xbf16> -> vector<4x8x8xbf16>
      %c0_58 = arith.constant 0 : index
      %c0_59 = arith.constant 0 : index
      %c0_60 = arith.constant 0 : index
      %107 = vector.load %arg17[%c0_58, %c0_59, %c0_60] : memref<4x8x8xbf16, #tpu.memory_space<vmem>>, vector<4x8x8xbf16>
      tpu.vector_store %arg17[%c0_58, %c0_59, %c0_60], %106 {strides = array<i32>} : memref<4x8x8xbf16, #tpu.memory_space<vmem>>, vector<4x8x8xbf16>,
      %108 = arith.truncf %103 : vector<8x32xf32> to vector<8x32xbf16>
      %109 = vector.shape_cast %108 : vector<8x32xbf16> to vector<8x4x8xbf16>
      %110 = tpu.transpose %109, [1, 0, 2] : vector<8x4x8xbf16> -> vector<4x8x8xbf16>
      %c0_61 = arith.constant 0 : index
      %c0_62 = arith.constant 0 : index
      %c0_63 = arith.constant 0 : index
      %111 = vector.load %arg18[%c0_61, %c0_62, %c0_63] : memref<4x8x8xbf16, #tpu.memory_space<vmem>>, vector<4x8x8xbf16>
      tpu.vector_store %arg18[%c0_61, %c0_62, %c0_63], %110 {strides = array<i32>} : memref<4x8x8xbf16, #tpu.memory_space<vmem>>, vector<4x8x8xbf16>,
    } else {
    }
    %c0 = arith.constant 0 : index
    %c0_1 = arith.constant 0 : index
    %c0_2 = arith.constant 0 : index
    %3 = vector.load %arg2[%c0, %c0_1, %c0_2] : memref<1x8x32xbf16, #tpu.memory_space<vmem>>, vector<1x8x32xbf16>
    %4 = vector.shape_cast %3 : vector<1x8x32xbf16> to vector<8x32xbf16>
    %c0_3 = arith.constant 0 : index
    %c0_4 = arith.constant 0 : index
    %5 = vector.load %arg6[%c0_3, %c0_4] : memref<32x32xbf16, #tpu.memory_space<vmem>>, vector<32x32xbf16>
    %cst = arith.constant dense<0.000000e+00> : vector<8x32xf32>
    %6 = tpu.matmul %4, %5, %cst {dimension_numbers = #tpu.dot_dimension_numbers<[1], [0], [0], [1], [0, 0, 1, 1], [], []>} : vector<8x32xbf16>, vector<32x32xbf16>, vector<8x32xf32> -> vector<8x32xf32>
    %c0_5 = arith.constant 0 : index
    %c0_6 = arith.constant 0 : index
    %7 = vector.load %arg7[%c0_5, %c0_6] : memref<1x32xf32, #tpu.memory_space<vmem>>, vector<1x32xf32>
    %8 = vector.broadcast %7 : vector<1x32xf32> to vector<8x32xf32>
    %9 = arith.addf %6, %8 : vector<8x32xf32>
    %cst_7 = arith.constant 0.353553385 : f32
    %10 = vector.broadcast %cst_7 : f32 to vector<8x32xf32>
    %11 = arith.mulf %9, %10 : vector<8x32xf32>
    %12 = arith.truncf %11 : vector<8x32xf32> to vector<8x32xbf16>
    %13 = vector.shape_cast %12 : vector<8x32xbf16> to vector<8x4x8xbf16>
    %14 = tpu.transpose %13, [1, 0, 2] : vector<8x4x8xbf16> -> vector<4x8x8xbf16>
    %c0_8 = arith.constant 0 : index
    %c0_9 = arith.constant 0 : index
    %c0_10 = arith.constant 0 : index
    %15 = vector.load %arg4[%c0_8, %c0_9, %c0_10] : memref<1x8x1xi32, #tpu.memory_space<vmem>>, vector<1x8x1xi32>
    %16 = vector.shape_cast %15 : vector<1x8x1xi32> to vector<8x1xi32>
    %c0_i32_11 = arith.constant 0 : i32
    %17 = vector.broadcast %c0_i32_11 : i32 to vector<8x1xi32>
    %18 = arith.cmpi ne, %16, %17 : vector<8x1xi32>
    %c0_12 = arith.constant 0 : index
    %c0_13 = arith.constant 0 : index
    %c0_14 = arith.constant 0 : index
    %19 = vector.load %arg5[%c0_12, %c0_13, %c0_14] : memref<1x1x8xi32, #tpu.memory_space<vmem>>, vector<1x1x8xi32>
    %20 = vector.shape_cast %19 : vector<1x1x8xi32> to vector<1x8xi32>
    %c0_i32_15 = arith.constant 0 : i32
    %21 = vector.broadcast %c0_i32_15 : i32 to vector<1x8xi32>
    %22 = arith.cmpi ne, %20, %21 : vector<1x8xi32>
    %23 = vector.broadcast %18 : vector<8x1xi1> to vector<8x8xi1>
    %24 = vector.broadcast %22 : vector<1x8xi1> to vector<8x8xi1>
    %25 = arith.andi %23, %24 : vector<8x8xi1>
    %c8_i32 = arith.constant 8 : i32
    %26 = arith.muli %arg1, %c8_i32 : i32
    %27 = tpu.iota {dimensions = array<i32: 0>} : vector<8x8xi32>
    %28 = vector.broadcast %26 : i32 to vector<8x8xi32>
    %29 = arith.addi %28, %27 : vector<8x8xi32>
    %30 = tpu.iota {dimensions = array<i32: 1>} : vector<8x8xi32>
    %31 = arith.cmpi sle, %30, %29 : vector<8x8xi32>
    %32 = arith.andi %25, %31 : vector<8x8xi1>
    %cst_16 = arith.constant 0.000000e+00 : f32
    %cst_17 = arith.constant -1.000000e+09 : f32
    %33 = vector.broadcast %cst_16 : f32 to vector<8x8xf32>
    %34 = vector.broadcast %cst_17 : f32 to vector<8x8xf32>
    %35 = arith.select %32, %33, %34 : vector<8x8xi1>, vector<8x8xf32>
    %c0_18 = arith.constant 0 : index
    %c0_19 = arith.constant 0 : index
    %c0_20 = arith.constant 0 : index
    %36 = vector.load %arg17[%c0_18, %c0_19, %c0_20] : memref<4x8x8xbf16, #tpu.memory_space<vmem>>, vector<4x8x8xbf16>
    "tpu.trace_start"() <{level = 10 : i32, message = "hqd,hkd->hqk"}> : () -> ()
    %cst_21 = arith.constant dense<0.000000e+00> : vector<4x8x8xf32>
    %37 = tpu.matmul %14, %36, %cst_21 {dimension_numbers = #tpu.dot_dimension_numbers<[2], [2], [1], [1], [0, 0, 0, 1, 1, 1], [0], [0]>} : vector<4x8x8xbf16>, vector<4x8x8xbf16>, vector<4x8x8xf32> -> vector<4x8x8xf32>
    "tpu.trace_stop"() : () -> ()
    %38 = vector.shape_cast %35 : vector<8x8xf32> to vector<1x8x8xf32>
    %39 = vector.broadcast %38 : vector<1x8x8xf32> to vector<4x8x8xf32>
    %40 = arith.addf %37, %39 : vector<4x8x8xf32>
    %cst_22 = arith.constant dense<0xFF800000> : vector<4x8xf32>
    %41 = vector.multi_reduction <maximumf>, %40, %cst_22 [2] : vector<4x8x8xf32> to vector<4x8xf32>
    %42 = vector.shape_cast %41 : vector<4x8xf32> to vector<4x8x1xf32>
    %43 = vector.broadcast %42 : vector<4x8x1xf32> to vector<4x8x8xf32>
    %44 = arith.subf %40, %43 : vector<4x8x8xf32>
    %45 = math.exp %44 : vector<4x8x8xf32>
    %cst_23 = arith.constant dense<0.000000e+00> : vector<4x8xf32>
    %46 = vector.multi_reduction <add>, %45, %cst_23 [2] : vector<4x8x8xf32> to vector<4x8xf32>
    %47 = vector.shape_cast %46 : vector<4x8xf32> to vector<4x8x1xf32>
    %48 = tpu.reciprocal %47 {approx = true} : vector<4x8x1xf32> -> vector<4x8x1xf32>
    %49 = vector.broadcast %48 : vector<4x8x1xf32> to vector<4x8x8xf32>
    %50 = arith.mulf %45, %49 : vector<4x8x8xf32>
    %51 = arith.truncf %50 : vector<4x8x8xf32> to vector<4x8x8xbf16>
    %c0_24 = arith.constant 0 : index
    %c0_25 = arith.constant 0 : index
    %c0_26 = arith.constant 0 : index
    %52 = vector.load %arg18[%c0_24, %c0_25, %c0_26] : memref<4x8x8xbf16, #tpu.memory_space<vmem>>, vector<4x8x8xbf16>
    "tpu.trace_start"() <{level = 10 : i32, message = "hqk,hkd->hqd"}> : () -> ()
    %cst_27 = arith.constant dense<0.000000e+00> : vector<4x8x8xf32>
    %53 = tpu.matmul %51, %52, %cst_27 {dimension_numbers = #tpu.dot_dimension_numbers<[2], [1], [1], [2], [0, 0, 0, 1, 1, 2], [0], [0]>} : vector<4x8x8xbf16>, vector<4x8x8xbf16>, vector<4x8x8xf32> -> vector<4x8x8xf32>
    "tpu.trace_stop"() : () -> ()
    %54 = arith.truncf %53 : vector<4x8x8xf32> to vector<4x8x8xbf16>
    %55 = tpu.transpose %54, [1, 0, 2] : vector<4x8x8xbf16> -> vector<8x4x8xbf16>
    %56 = vector.shape_cast %55 : vector<8x4x8xbf16> to vector<8x32xbf16>
    %c0_28 = arith.constant 0 : index
    %c0_29 = arith.constant 0 : index
    %57 = vector.load %arg12[%c0_28, %c0_29] : memref<32x32xbf16, #tpu.memory_space<vmem>>, vector<32x32xbf16>
    %cst_30 = arith.constant dense<0.000000e+00> : vector<8x32xf32>
    %58 = tpu.matmul %56, %57, %cst_30 {dimension_numbers = #tpu.dot_dimension_numbers<[1], [0], [0], [1], [0, 0, 1, 1], [], []>} : vector<8x32xbf16>, vector<32x32xbf16>, vector<8x32xf32> -> vector<8x32xf32>
    %c0_31 = arith.constant 0 : index
    %c0_32 = arith.constant 0 : index
    %59 = vector.load %arg13[%c0_31, %c0_32] : memref<1x32xf32, #tpu.memory_space<vmem>>, vector<1x32xf32>
    %60 = vector.broadcast %59 : vector<1x32xf32> to vector<8x32xf32>
    %61 = arith.addf %58, %60 : vector<8x32xf32>
    %62 = arith.extf %4 : vector<8x32xbf16> to vector<8x32xf32>
    %63 = arith.addf %62, %61 : vector<8x32xf32>
    %cst_33 = arith.constant dense<0.000000e+00> : vector<8xf32>
    %64 = vector.multi_reduction <add>, %63, %cst_33 [1] : vector<8x32xf32> to vector<8xf32>
    %65 = vector.shape_cast %64 : vector<8xf32> to vector<8x1xf32>
    %cst_34 = arith.constant 3.200000e+01 : f32
    %66 = vector.broadcast %cst_34 : f32 to vector<8x1xf32>
    %67 = arith.divf %65, %66 : vector<8x1xf32>
    %68 = vector.broadcast %67 : vector<8x1xf32> to vector<8x32xf32>
    %69 = arith.subf %63, %68 : vector<8x32xf32>
    %70 = arith.mulf %69, %69 : vector<8x32xf32>
    %cst_35 = arith.constant dense<0.000000e+00> : vector<8xf32>
    %71 = vector.multi_reduction <add>, %70, %cst_35 [1] : vector<8x32xf32> to vector<8xf32>
    %72 = vector.shape_cast %71 : vector<8xf32> to vector<8x1xf32>
    %cst_36 = arith.constant 3.200000e+01 : f32
    %73 = vector.broadcast %cst_36 : f32 to vector<8x1xf32>
    %74 = arith.divf %72, %73 : vector<8x1xf32>
    %75 = vector.broadcast %67 : vector<8x1xf32> to vector<8x32xf32>
    %76 = arith.subf %63, %75 : vector<8x32xf32>
    %cst_37 = arith.constant 9.99999974E-6 : f32
    %77 = vector.broadcast %cst_37 : f32 to vector<8x1xf32>
    %78 = arith.addf %74, %77 : vector<8x1xf32>
    %79 = math.rsqrt %78 : vector<8x1xf32>
    %80 = vector.broadcast %79 : vector<8x1xf32> to vector<8x32xf32>
    %81 = arith.mulf %76, %80 : vector<8x32xf32>
    %c0_38 = arith.constant 0 : index
    %c0_39 = arith.constant 0 : index
    %82 = vector.load %arg14[%c0_38, %c0_39] : memref<1x32xf32, #tpu.memory_space<vmem>>, vector<1x32xf32>
    %83 = vector.broadcast %82 : vector<1x32xf32> to vector<8x32xf32>
    %84 = arith.mulf %81, %83 : vector<8x32xf32>
    %c0_40 = arith.constant 0 : index
    %c0_41 = arith.constant 0 : index
    %85 = vector.load %arg15[%c0_40, %c0_41] : memref<1x32xf32, #tpu.memory_space<vmem>>, vector<1x32xf32>
    %86 = vector.broadcast %85 : vector<1x32xf32> to vector<8x32xf32>
    %87 = arith.addf %84, %86 : vector<8x32xf32>
    %88 = arith.truncf %87 : vector<8x32xf32> to vector<8x32xbf16>
    %c0_42 = arith.constant 0 : index
    %c0_43 = arith.constant 0 : index
    %c0_44 = arith.constant 0 : index
    %89 = vector.load %arg16[%c0_42, %c0_43, %c0_44] : memref<1x8x32xbf16, #tpu.memory_space<vmem>>, vector<1x8x32xbf16>
    %90 = vector.shape_cast %89 : vector<1x8x32xbf16> to vector<8x32xbf16>
    %91 = vector.shape_cast %88 : vector<8x32xbf16> to vector<1x8x32xbf16>
    tpu.vector_store %arg16[%c0_42, %c0_43, %c0_44], %91 {strides = array<i32>} : memref<1x8x32xbf16, #tpu.memory_space<vmem>>, vector<1x8x32xbf16>,
    return
  }
  func.func @transform_0(%arg0: i32, %arg1: i32) -> (i32, i32, i32) {
    %c0_i32 = arith.constant 0 : i32
    %c0_i32_0 = arith.constant 0 : i32
    return %arg0, %arg1, %c0_i32 : i32, i32, i32
  }
  func.func @transform_1(%arg0: i32, %arg1: i32) -> (i32, i32, i32) {
    %c0_i32 = arith.constant 0 : i32
    %c0_i32_0 = arith.constant 0 : i32
    %c0_i32_1 = arith.constant 0 : i32
    return %arg0, %c0_i32, %c0_i32_0 : i32, i32, i32
  }
  func.func @transform_2(%arg0: i32, %arg1: i32) -> (i32, i32, i32) {
    %c0_i32 = arith.constant 0 : i32
    %c0_i32_0 = arith.constant 0 : i32
    return %arg0, %arg1, %c0_i32 : i32, i32, i32
  }
  func.func @transform_3(%arg0: i32, %arg1: i32) -> (i32, i32, i32) {
    %c0_i32 = arith.constant 0 : i32
    %c0_i32_0 = arith.constant 0 : i32
    %c0_i32_1 = arith.constant 0 : i32
    return %arg0, %c0_i32, %c0_i32_0 : i32, i32, i32
  }
  func.func @transform_4(%arg0: i32, %arg1: i32) -> (i32, i32) {
    %c0_i32 = arith.constant 0 : i32
    %c0_i32_0 = arith.constant 0 : i32
    %c0_i32_1 = arith.constant 0 : i32
    return %c0_i32, %c0_i32_0 : i32, i32
  }
  func.func @transform_5(%arg0: i32, %arg1: i32) -> (i32, i32) {
    %c0_i32 = arith.constant 0 : i32
    %c0_i32_0 = arith.constant 0 : i32
    %c0_i32_1 = arith.constant 0 : i32
    return %c0_i32, %c0_i32_0 : i32, i32
  }
  func.func @transform_6(%arg0: i32, %arg1: i32) -> (i32, i32) {
    %c0_i32 = arith.constant 0 : i32
    %c0_i32_0 = arith.constant 0 : i32
    %c0_i32_1 = arith.constant 0 : i32
    return %c0_i32, %c0_i32_0 : i32, i32
  }
  func.func @transform_7(%arg0: i32, %arg1: i32) -> (i32, i32) {
    %c0_i32 = arith.constant 0 : i32
    %c0_i32_0 = arith.constant 0 : i32
    %c0_i32_1 = arith.constant 0 : i32
    return %c0_i32, %c0_i32_0 : i32, i32
  }
  func.func @transform_8(%arg0: i32, %arg1: i32) -> (i32, i32) {
    %c0_i32 = arith.constant 0 : i32
    %c0_i32_0 = arith.constant 0 : i32
    %c0_i32_1 = arith.constant 0 : i32
    return %c0_i32, %c0_i32_0 : i32, i32
  }
  func.func @transform_9(%arg0: i32, %arg1: i32) -> (i32, i32) {
    %c0_i32 = arith.constant 0 : i32
    %c0_i32_0 = arith.constant 0 : i32
    %c0_i32_1 = arith.constant 0 : i32
    return %c0_i32, %c0_i32_0 : i32, i32
  }
  func.func @transform_10(%arg0: i32, %arg1: i32) -> (i32, i32) {
    %c0_i32 = arith.constant 0 : i32
    %c0_i32_0 = arith.constant 0 : i32
    %c0_i32_1 = arith.constant 0 : i32
    return %c0_i32, %c0_i32_0 : i32, i32
  }
  func.func @transform_11(%arg0: i32, %arg1: i32) -> (i32, i32) {
    %c0_i32 = arith.constant 0 : i32
    %c0_i32_0 = arith.constant 0 : i32
    %c0_i32_1 = arith.constant 0 : i32
    return %c0_i32, %c0_i32_0 : i32, i32
  }
  func.func @transform_12(%arg0: i32, %arg1: i32) -> (i32, i32) {
    %c0_i32 = arith.constant 0 : i32
    %c0_i32_0 = arith.constant 0 : i32
    %c0_i32_1 = arith.constant 0 : i32
    return %c0_i32, %c0_i32_0 : i32, i32
  }
  func.func @transform_13(%arg0: i32, %arg1: i32) -> (i32, i32) {
    %c0_i32 = arith.constant 0 : i32
    %c0_i32_0 = arith.constant 0 : i32
    %c0_i32_1 = arith.constant 0 : i32
    return %c0_i32, %c0_i32_0 : i32, i32
  }
  func.func @transform_14(%arg0: i32, %arg1: i32) -> (i32, i32, i32) {
    %c0_i32 = arith.constant 0 : i32
    %c0_i32_0 = arith.constant 0 : i32
    return %arg0, %arg1, %c0_i32 : i32, i32, i32
  }
}

</mosaic_0001>

<llo_original>
// kernel: transformer_forward.21
$region0: #{transformer_forward.21}
  #allocation0 [shape = 'u32[]', space=smem, size = 0x4, offset = 0x4, fixed_abs, tag = 'smem constant byte address 0x4 - core index']
  #allocation1 [shape = 'u32[144,128]{1,0:T(1,128)}', space=vmem, size = 0x12000, scoped, tag = 'internal scratch']
  %s0 = inlined_call_operand.vmem [shape: bf16[16,32], index: 0, kind: input, shape index: {}]
  %s1 = inlined_call_operand.vmem [shape: bf16[32,24], index: 1, kind: input, shape index: {}]
  %s2 = inlined_call_operand.vmem [shape: f32[1,24], index: 2, kind: input, shape index: {}]
  %s3 = inlined_call_operand.hbm [shape: f32[16,24], index: 3, kind: output, shape index: {}]
  %s4 = sld [smem:[#allocation0]]
  $region22: #{transformer_forward.21} parent=0
    _
  %s6 = ssub.s32 1, %s4
  %s7 = scalar_select 0, %s6, %s4
  $region1: #{transformer_forward.21} parent=0
    #allocation2 [shape = 'u8[8192]{0}', space=vmem, size = 0x2000, scoped, tag = 'output window, operand 0, single buffered']
    #allocation3 [shape = 's32[1]{0}', space=sflag, size = 0x4, scoped, tag = 'scoped memory for transformer_forward.21']
    %8 = vsyncpa [#allocation3], 0
    // Predicated region
    $region2: #{transformer_forward.21} parent=1 // pred_check
      _
    $region3: #{transformer_forward.21} parent=1 // pred_check_branch
      %10 = sbr.rel (0) target = $region5
    $region4: #{transformer_forward.21} parent=1 // pred_region
      _
    $region5: #{transformer_forward.21} parent=1 // pred_fallthru
      _
    // Predicated region
    $region6: #{transformer_forward.21} parent=1 // pred_check
      _
    $region7: #{transformer_forward.21} parent=1 // pred_check_branch
      %12 = sbr.rel (0) target = $region9
    $region8: #{transformer_forward.21} parent=1 // pred_region
      _
    $region9: #{transformer_forward.21} parent=1 // pred_fallthru
      _
    // Predicated region
    $region10: #{transformer_forward.21} parent=1 // pred_check
      _
    $region11: #{transformer_forward.21} parent=1 // pred_check_branch
      %14 = sbr.rel (0) target = $region13
    $region12: #{transformer_forward.21} parent=1 // pred_region
      _
    $region13: #{transformer_forward.21} parent=1 // pred_fallthru
      _
    %v16 = vld [vmem:[%s0] sm:$0xf]
    %v17 = vld [vmem:[%s0 + $0x4] sm:$0xf]
    %v18 = vld [vmem:[%s1] sm:$0xf]
    %v19 = vld [vmem:[%s1 + $0x4] sm:$0xf]
    %v20 = vld [vmem:[%s1 + $0x8] sm:$0xf]
    %v21 = vld [vmem:[%s1 + $0xc] sm:$0xf]
    %v22 = vld [vmem:[%s2] sm:$0x1]
    %v24 = vlaneseq
    %v25 = vshrl.u32 %v24, 7
    %v26 = vsub.s32 0, %v25
    %v27 = vrot.slane %v22, %v26
    %v31 = vunpack.c.l.b16 %v16
    %v32 = vunpack.c.l.b16 %v17
    %v33 = vpack.c.b16 %v32, %v31
    %v38 = vunpack.c.l.b16 %v18
    %v39 = vunpack.c.l.b16 %v19
    %v40 = vunpack.c.l.b16 %v20
    %v41 = vunpack.c.l.b16 %v21
    %v42 = vpack.c.b16 %v39, %v38
    %v43 = vpack.c.b16 %v41, %v40
    %vm46 = vcmask 261120
    %v48 = vsel %vm46, %v33, 0
    %50 = vmatprep.subr.bf16.mxu0 0
    %51 = vmatpush1.bf16.msra.mxu0 %v42
    %52 = vmatprep.subr.bf16.mxu0 0
    %53 = vmatpush1.bf16.msra.mxu0 %v43
    %54 = vmatprep.subr.bf16.mxu0 0
    %55 = vmatpush1.bf16.msra.mxu0 0
    %56 = vmatprep.subr.bf16.mxu0 0
    %57 = vmatpush1.bf16.msra.mxu0 0
    %58 = vmatprep.subr.bf16.mxu0 0
    %59 = vmatpush1.bf16.msra.mxu0 0
    %60 = vmatprep.subr.bf16.mxu0 0
    %61 = vmatpush1.bf16.msra.mxu0 0
    %62 = vmatprep.subr.bf16.mxu0 0
    %63 = vmatpush1.bf16.msra.mxu0 0
    %64 = vmatprep.subr.bf16.mxu0 0
    %65 = vmatpush1.bf16.msra.mxu0 0
    %66 = vmatprep.subr.bf16.mxu0 0
    %67 = vmatpush1.bf16.msra.mxu0 0
    %68 = vmatprep.subr.bf16.mxu0 0
    %69 = vmatpush1.bf16.msra.mxu0 0
    %70 = vmatprep.subr.bf16.mxu0 0
    %71 = vmatpush1.bf16.msra.mxu0 0
    %72 = vmatprep.subr.bf16.mxu0 0
    %73 = vmatpush1.bf16.msra.mxu0 0
    %74 = vmatprep.subr.bf16.mxu0 0
    %75 = vmatpush1.bf16.msra.mxu0 0
    %76 = vmatprep.subr.bf16.mxu0 0
    %77 = vmatpush1.bf16.msra.mxu0 0
    %78 = vmatprep.subr.bf16.mxu0 0
    %79 = vmatpush1.bf16.msra.mxu0 0
    %80 = vmatprep.subr.bf16.mxu0 0
    %81 = vmatpush1.bf16.msra.mxu0 0
    %82 = vmatprep.mubr.bf16.mxu0 0
    %83 = vmatmul.mubr.bf16.gmra.mrb[0].mxu0 %v48
    %v84 = vpop.f32.mrb[0].mxu0
    %v85 = vadd.f32 %v27, %v84
    %v86 = vpop.f32.mrb[0].mxu0
    %v87 = vpop.f32.mrb[0].mxu0
    %v88 = vadd.f32 %v27, %v87
    %v89 = vpop.f32.mrb[0].mxu0
    %90 = vdwg.mxu0
    %vm91 = vcmask 195584
    %92 = vst.msk [vmem:[#allocation2] sm:$0xff] %vm91, %v85
    %93 = vst.msk [vmem:[#allocation2 + $0x8] sm:$0xff] %vm91, %v88
    // Predicated region
    $region14: #{transformer_forward.21} parent=1 // pred_check
      _
    $region15: #{transformer_forward.21} parent=1 // pred_check_branch
      %95 = sbr.rel (0) target = $region17
    $region16: #{transformer_forward.21} parent=1 // pred_region
      %s97 = ssub.s32 256, 256
      %98 = vsyncadd [#allocation3], %s97
      %s99 = sshll.u32 [#allocation2], 4
      %s100 = int_to_ptr.vmem [resolvable:$true] %s99
      %105 = dma.vmem_to_hbm [thread:$0]  %s100, 256, %s3, [#allocation3], 128, 128, 8
    $region17: #{transformer_forward.21} parent=1 // pred_fallthru
      _
    // Predicated region
    $region18: #{transformer_forward.21} parent=1 // pred_check
      _
    $region19: #{transformer_forward.21} parent=1 // pred_check_branch
      %107 = sbr.rel (0) target = $region21
    $region20: #{transformer_forward.21} parent=1 // pred_region
      %108 = dma.done [#allocation3], 256
    $region21: #{transformer_forward.21} parent=1 // pred_fallthru
      _
    %109 = vsyncpa [#allocation3], 1

// kernel: transformer_forward.12
$region0: #{transformer_forward.12}
  #allocation0 [shape = 'u32[]', space=smem, size = 0x4, offset = 0x4, fixed_abs, tag = 'smem constant byte address 0x4 - core index']
  #allocation1 [shape = 'u32[144,128]{1,0:T(1,128)}', space=vmem, size = 0x12000, scoped, tag = 'internal scratch']
  %s0 = inlined_call_operand.vmem [shape: bf16[16,32], index: 0, kind: input, shape index: {}]
  %s1 = inlined_call_operand.vmem [shape: bf16[32,64], index: 1, kind: input, shape index: {}]
  %s2 = inlined_call_operand.vmem [shape: f32[1,64], index: 2, kind: input, shape index: {}]
  %s3 = inlined_call_operand.vmem [shape: bf16[64,32], index: 3, kind: input, shape index: {}]
  %s4 = inlined_call_operand.vmem [shape: f32[1,32], index: 4, kind: input, shape index: {}]
  %s5 = inlined_call_operand.vmem [shape: f32[1,32], index: 5, kind: input, shape index: {}]
  %s6 = inlined_call_operand.vmem [shape: f32[1,32], index: 6, kind: input, shape index: {}]
  %s7 = inlined_call_operand.vmem [shape: bf16[16,32], index: 7, kind: output, shape index: {}]
  %s8 = sld [smem:[#allocation0]]
  $region38: #{transformer_forward.12} parent=0
    _
  %s10 = ssub.s32 1, %s8
  %s11 = scalar_select 0, %s10, %s8
  // Predicated region
  $region2: #{transformer_forward.12} parent=0 // pred_check
    _
  $region3: #{transformer_forward.12} parent=0 // pred_check_branch
    %13 = sbr.rel (0) target = $region5
  $region4: #{transformer_forward.12} parent=0 // pred_region
    _
  $region5: #{transformer_forward.12} parent=0 // pred_fallthru
    _
  // Predicated region
  $region6: #{transformer_forward.12} parent=0 // pred_check
    _
  $region7: #{transformer_forward.12} parent=0 // pred_check_branch
    %15 = sbr.rel (0) target = $region9
  $region8: #{transformer_forward.12} parent=0 // pred_region
    _
  $region9: #{transformer_forward.12} parent=0 // pred_fallthru
    _
  // Predicated region
  $region10: #{transformer_forward.12} parent=0 // pred_check
    _
  $region11: #{transformer_forward.12} parent=0 // pred_check_branch
    %17 = sbr.rel (0) target = $region13
  $region12: #{transformer_forward.12} parent=0 // pred_region
    _
  $region13: #{transformer_forward.12} parent=0 // pred_fallthru
    _
  // Predicated region
  $region14: #{transformer_forward.12} parent=0 // pred_check
    _
  $region15: #{transformer_forward.12} parent=0 // pred_check_branch
    %19 = sbr.rel (0) target = $region17
  $region16: #{transformer_forward.12} parent=0 // pred_region
    _
  $region17: #{transformer_forward.12} parent=0 // pred_fallthru
    _
  // Predicated region
  $region18: #{transformer_forward.12} parent=0 // pred_check
    _
  $region19: #{transformer_forward.12} parent=0 // pred_check_branch
    %21 = sbr.rel (0) target = $region21
  $region20: #{transformer_forward.12} parent=0 // pred_region
    _
  $region21: #{transformer_forward.12} parent=0 // pred_fallthru
    _
  // Predicated region
  $region22: #{transformer_forward.12} parent=0 // pred_check
    _
  $region23: #{transformer_forward.12} parent=0 // pred_check_branch
    %23 = sbr.rel (0) target = $region25
  $region24: #{transformer_forward.12} parent=0 // pred_region
    _
  $region25: #{transformer_forward.12} parent=0 // pred_fallthru
    _
  // Predicated region
  $region26: #{transformer_forward.12} parent=0 // pred_check
    _
  $region27: #{transformer_forward.12} parent=0 // pred_check_branch
    %25 = sbr.rel (0) target = $region29
  $region28: #{transformer_forward.12} parent=0 // pred_region
    _
  $region29: #{transformer_forward.12} parent=0 // pred_fallthru
    _
  %v27 = vld [vmem:[%s0] sm:$0xf]
  %v28 = vld [vmem:[%s0 + $0x4] sm:$0xf]
  %v29 = vld [vmem:[%s1] sm:$0xf]
  %v30 = vld [vmem:[%s1 + $0x4] sm:$0xf]
  %v31 = vld [vmem:[%s1 + $0x8] sm:$0xf]
  %v32 = vld [vmem:[%s1 + $0xc] sm:$0xf]
  %v33 = vld [vmem:[%s2] sm:$0x1]
  %v35 = vlaneseq
  %v36 = vshrl.u32 %v35, 7
  %v37 = vsub.s32 0, %v36
  %v38 = vrot.slane %v33, %v37
  %v42 = vunpack.c.l.b16 %v27
  %v43 = vunpack.c.l.b16 %v28
  %v44 = vpack.c.b16 %v43, %v42
  %v49 = vunpack.c.l.b16 %v29
  %v50 = vunpack.c.l.b16 %v30
  %v51 = vunpack.c.l.b16 %v31
  %v52 = vunpack.c.l.b16 %v32
  %v53 = vpack.c.b16 %v50, %v49
  %v54 = vpack.c.b16 %v52, %v51
  %vm57 = vcmask 261120
  %v59 = vsel %vm57, %v44, 0
  %61 = vmatprep.subr.bf16.mxu0 0
  %62 = vmatpush1.bf16.msra.mxu0 %v53
  %63 = vmatprep.subr.bf16.mxu0 0
  %64 = vmatpush1.bf16.msra.mxu0 %v54
  %65 = vmatprep.subr.bf16.mxu0 0
  %66 = vmatpush1.bf16.msra.mxu0 0
  %67 = vmatprep.subr.bf16.mxu0 0
  %68 = vmatpush1.bf16.msra.mxu0 0
  %69 = vmatprep.subr.bf16.mxu0 0
  %70 = vmatpush1.bf16.msra.mxu0 0
  %71 = vmatprep.subr.bf16.mxu0 0
  %72 = vmatpush1.bf16.msra.mxu0 0
  %73 = vmatprep.subr.bf16.mxu0 0
  %74 = vmatpush1.bf16.msra.mxu0 0
  %75 = vmatprep.subr.bf16.mxu0 0
  %76 = vmatpush1.bf16.msra.mxu0 0
  %77 = vmatprep.subr.bf16.mxu0 0
  %78 = vmatpush1.bf16.msra.mxu0 0
  %79 = vmatprep.subr.bf16.mxu0 0
  %80 = vmatpush1.bf16.msra.mxu0 0
  %81 = vmatprep.subr.bf16.mxu0 0
  %82 = vmatpush1.bf16.msra.mxu0 0
  %83 = vmatprep.subr.bf16.mxu0 0
  %84 = vmatpush1.bf16.msra.mxu0 0
  %85 = vmatprep.subr.bf16.mxu0 0
  %86 = vmatpush1.bf16.msra.mxu0 0
  %87 = vmatprep.subr.bf16.mxu0 0
  %88 = vmatpush1.bf16.msra.mxu0 0
  %89 = vmatprep.subr.bf16.mxu0 0
  %90 = vmatpush1.bf16.msra.mxu0 0
  %91 = vmatprep.subr.bf16.mxu0 0
  %92 = vmatpush1.bf16.msra.mxu0 0
  %93 = vmatprep.mubr.bf16.mxu0 0
  %94 = vmatmul.mubr.bf16.gmra.mrb[0].mxu0 %v59
  %v95 = vpop.f32.mrb[0].mxu0
  %v96 = vadd.f32 %v38, %v95
  %v97 = vpop.f32.mrb[0].mxu0
  %v98 = vpop.f32.mrb[0].mxu0
  %v99 = vadd.f32 %v38, %v98
  %v100 = vpop.f32.mrb[0].mxu0
  %101 = vdwg.mxu0
  %v102 = vmax.f32 %v96, 0.0
  %v103 = vmax.f32 %v99, 0.0
  %v104 = vpack.c.bf16 %v103, %v102
  %v105 = vld [vmem:[%s3] sm:$0xf]
  %v106 = vld [vmem:[%s3 + $0x4] sm:$0xf]
  %v107 = vld [vmem:[%s3 + $0x8] sm:$0xf]
  %v108 = vld [vmem:[%s3 + $0xc] sm:$0xf]
  %v109 = vld [vmem:[%s3 + $0x10] sm:$0xf]
  %v110 = vld [vmem:[%s3 + $0x14] sm:$0xf]
  %v111 = vld [vmem:[%s3 + $0x18] sm:$0xf]
  %v112 = vld [vmem:[%s3 + $0x1c] sm:$0xf]
  %v113 = vld [vmem:[%s4] sm:$0x1]
  %v115 = vlaneseq
  %v116 = vshrl.u32 %v115, 7
  %v117 = vsub.s32 0, %v116
  %v118 = vrot.slane %v113, %v117
  %v128 = vunpack.c.l.b16 %v105
  %v129 = vunpack.c.l.b16 %v106
  %v130 = vunpack.c.l.b16 %v107
  %v131 = vunpack.c.l.b16 %v108
  %v132 = vunpack.c.l.b16 %v109
  %v133 = vunpack.c.l.b16 %v110
  %v134 = vunpack.c.l.b16 %v111
  %v135 = vunpack.c.l.b16 %v112
  %v136 = vpack.c.b16 %v129, %v128
  %v137 = vpack.c.b16 %v131, %v130
  %v138 = vpack.c.b16 %v133, %v132
  %v139 = vpack.c.b16 %v135, %v134
  %vm144 = vcmask 523264
  %v146 = vsel %vm144, %v104, 0
  %148 = vmatprep.subr.bf16.mxu0 0
  %149 = vmatpush1.bf16.msra.mxu0 %v136
  %150 = vmatprep.subr.bf16.mxu0 0
  %151 = vmatpush1.bf16.msra.mxu0 %v137
  %152 = vmatprep.subr.bf16.mxu0 0
  %153 = vmatpush1.bf16.msra.mxu0 %v138
  %154 = vmatprep.subr.bf16.mxu0 0
  %155 = vmatpush1.bf16.msra.mxu0 %v139
  %156 = vmatprep.subr.bf16.mxu0 0
  %157 = vmatpush1.bf16.msra.mxu0 0
  %158 = vmatprep.subr.bf16.mxu0 0
  %159 = vmatpush1.bf16.msra.mxu0 0
  %160 = vmatprep.subr.bf16.mxu0 0
  %161 = vmatpush1.bf16.msra.mxu0 0
  %162 = vmatprep.subr.bf16.mxu0 0
  %163 = vmatpush1.bf16.msra.mxu0 0
  %164 = vmatprep.subr.bf16.mxu0 0
  %165 = vmatpush1.bf16.msra.mxu0 0
  %166 = vmatprep.subr.bf16.mxu0 0
  %167 = vmatpush1.bf16.msra.mxu0 0
  %168 = vmatprep.subr.bf16.mxu0 0
  %169 = vmatpush1.bf16.msra.mxu0 0
  %170 = vmatprep.subr.bf16.mxu0 0
  %171 = vmatpush1.bf16.msra.mxu0 0
  %172 = vmatprep.subr.bf16.mxu0 0
  %173 = vmatpush1.bf16.msra.mxu0 0
  %174 = vmatprep.subr.bf16.mxu0 0
  %175 = vmatpush1.bf16.msra.mxu0 0
  %176 = vmatprep.subr.bf16.mxu0 0
  %177 = vmatpush1.bf16.msra.mxu0 0
  %178 = vmatprep.subr.bf16.mxu0 0
  %179 = vmatpush1.bf16.msra.mxu0 0
  %180 = vmatprep.mubr.bf16.mxu0 0
  %181 = vmatmul.mubr.bf16.gmra.mrb[0].mxu0 %v146
  %v182 = vpop.f32.mrb[0].mxu0
  %v183 = vadd.f32 %v118, %v182
  %v184 = vpop.f32.mrb[0].mxu0
  %v185 = vpop.f32.mrb[0].mxu0
  %v186 = vadd.f32 %v118, %v185
  %v187 = vpop.f32.mrb[0].mxu0
  %188 = vdwg.mxu0
  %v189 = vunpack.c.l.bf16 %v27
  %v190 = vunpack.c.l.bf16 %v28
  %v191 = vadd.f32 %v189, %v183
  %v192 = vadd.f32 %v190, %v186
  %v193 = vsel %vm57, %v191, 0.0
  %194 = vadd.xlane.f32.xlu0 %v193
  %v195 = vpop.xlane.xlu0 %194
  %v196 = vsel %vm57, %v192, 0.0
  %197 = vadd.xlane.f32.xlu0 %v196
  %v198 = vpop.xlane.xlu0 %197
  %v199 = vrcp.pop 32.0
  %v200 = vmul.f32 %v195, %v199
  %v201 = vmul.f32 %v198, %v199
  %v202 = vsub.f32 %v191, %v200
  %v203 = vsub.f32 %v192, %v201
  %v204 = vmul.f32 %v202, %v202
  %v205 = vmul.f32 %v203, %v203
  %v206 = vsel %vm57, %v204, 0.0
  %207 = vadd.xlane.f32.xlu0 %v206
  %v208 = vpop.xlane.xlu0 %207
  %v209 = vsel %vm57, %v205, 0.0
  %210 = vadd.xlane.f32.xlu0 %v209
  %v211 = vpop.xlane.xlu0 %210
  %v212 = vmul.f32 %v208, %v199
  %v213 = vmul.f32 %v211, %v199
  %v214 = vadd.f32 %v212, 1e-05
  %v215 = vadd.f32 %v213, 1e-05
  %v216 = vrsqrt.pop %v214
  %v217 = vrsqrt.pop %v215
  %v218 = vmul.f32 %v202, %v216
  %v219 = vmul.f32 %v203, %v217
  %v220 = vld [vmem:[%s5] sm:$0x1]
  %v222 = vlaneseq
  %v223 = vshrl.u32 %v222, 7
  %v224 = vsub.s32 0, %v223
  %v225 = vrot.slane %v220, %v224
  %v227 = vmul.f32 %v218, %v225
  %v228 = vmul.f32 %v219, %v225
  %v229 = vld [vmem:[%s6] sm:$0x1]
  %v231 = vlaneseq
  %v232 = vshrl.u32 %v231, 7
  %v233 = vsub.s32 0, %v232
  %v234 = vrot.slane %v229, %v233
  %v236 = vadd.f32 %v227, %v234
  %v237 = vadd.f32 %v228, %v234
  %v238 = vpack.c.bf16 %v237, %v236
  %v240 = vunpack.c.l.b16 %v238
  %v241 = vunpack.c.h.b16 %v238
  %v242 = vpack.c.b16 %v240, %v240
  %v243 = vpack.c.b16 %v241, %v241
  %vm246 = vcmask 257024
  %247 = vst.msk [vmem:[%s7] sm:$0xf] %vm246, %v242
  %248 = vst.msk [vmem:[%s7 + $0x4] sm:$0xf] %vm246, %v243
  // Predicated region
  $region30: #{transformer_forward.12} parent=0 // pred_check
    _
  $region31: #{transformer_forward.12} parent=0 // pred_check_branch
    %250 = sbr.rel (0) target = $region33
  $region32: #{transformer_forward.12} parent=0 // pred_region
    _
  $region33: #{transformer_forward.12} parent=0 // pred_fallthru
    _
  // Predicated region
  $region34: #{transformer_forward.12} parent=0 // pred_check
    _
  $region35: #{transformer_forward.12} parent=0 // pred_check_branch
    %252 = sbr.rel (0) target = $region37
  $region36: #{transformer_forward.12} parent=0 // pred_region
    _
  $region37: #{transformer_forward.12} parent=0 // pred_fallthru
    _

// kernel: transformer_forward.11
$region0: #{transformer_forward.11}
  #allocation0 [shape = 'u32[]', space=smem, size = 0x4, offset = 0x4, fixed_abs, tag = 'smem constant byte address 0x4 - core index']
  #allocation1 [shape = 'u32[144,128]{1,0:T(1,128)}', space=vmem, size = 0x12000, scoped, tag = 'internal scratch']
  #allocation2 [shape = 'bf16[4,8,8]{2,1,0:T(8,128)(2,1)}', space=vmem, size = 0x2000, scoped, tag = 'scratch operand']
  #allocation3 [shape = 'bf16[4,8,8]{2,1,0:T(8,128)(2,1)}', space=vmem, size = 0x2000, scoped, tag = 'scratch operand']
  %s0 = inlined_call_operand.vmem [shape: bf16[2,8,32], index: 0, kind: input, shape index: {}, may-alias: {0,1}]
  %s1 = inlined_call_operand.vmem [shape: bf16[2,8,32], index: 1, kind: input, shape index: {}, may-alias: {0,1}]
  %s2 = inlined_call_operand.vmem [shape: s32[2,8,1], index: 2, kind: input, shape index: {}]
  %s3 = inlined_call_operand.vmem [shape: s32[2,1,8], index: 3, kind: input, shape index: {}]
  %s4 = inlined_call_operand.vmem [shape: bf16[32,32], index: 4, kind: input, shape index: {}]
  %s5 = inlined_call_operand.vmem [shape: f32[1,32], index: 5, kind: input, shape index: {}]
  %s6 = inlined_call_operand.vmem [shape: bf16[32,32], index: 6, kind: input, shape index: {}]
  %s7 = inlined_call_operand.vmem [shape: f32[1,32], index: 7, kind: input, shape index: {}]
  %s8 = inlined_call_operand.vmem [shape: bf16[32,32], index: 8, kind: input, shape index: {}]
  %s9 = inlined_call_operand.vmem [shape: f32[1,32], index: 9, kind: input, shape index: {}]
  %s10 = inlined_call_operand.vmem [shape: bf16[32,32], index: 10, kind: input, shape index: {}]
  %s11 = inlined_call_operand.vmem [shape: f32[1,32], index: 11, kind: input, shape index: {}]
  %s12 = inlined_call_operand.vmem [shape: f32[1,32], index: 12, kind: input, shape index: {}]
  %s13 = inlined_call_operand.vmem [shape: f32[1,32], index: 13, kind: input, shape index: {}]
  %s14 = inlined_call_operand.vmem [shape: bf16[2,8,32], index: 14, kind: output, shape index: {}]
  %s15 = sld [smem:[#allocation0]]
  $region93: #{transformer_forward.11} parent=0
    _
  %s17 = ssub.s32 1, %s15
  %s18 = scalar_select 0, %s17, %s15
  loop: start=0, step=1, limit=4
  $region2: #{transformer_forward.11} parent=0 // loop_pre_header
    _
  $region3: #{transformer_forward.11} parent=0 // loop_header
    %s20 = sphi 0, %s24
    %p21 = scmp.ge.s32.totalorder %s20, 4
    %s27 = sphi 0, %s39
    %s28 = sphi 0, %s35
    %s29 = sphi 0, %s27
    %s30 = sphi 0, %s28
    %s31 = sphi 0, %s29
    %s32 = sphi 0, %s30
    %s44 = sphi 0, %s46
    %s47 = sphi 0, %s44
    %s48 = sphi 0, %s47
    %s64 = sphi 0, %s48
    %s70 = sphi 0, %s72
    %s73 = sphi 0, %s70
    %s74 = sphi 0, %s73
    %s90 = sphi 0, %s74
    %s98 = sphi 0, %s100
    %s101 = sphi 0, %s98
    %s102 = sphi 0, %s101
    %s118 = sphi 0, %s102
    %s124 = sphi 0, %s126
    %s127 = sphi 0, %s124
    %s128 = sphi 0, %s127
    %s144 = sphi 0, %s128
    %s148 = sphi 0, %s148
    %s150 = sphi 0, %s148
    %s151 = sphi 0, %s150
    %s165 = sphi 0, %s151
    %s169 = sphi 0, %s169
    %s171 = sphi 0, %s169
    %s172 = sphi 0, %s171
    %s186 = sphi 0, %s172
    %s190 = sphi 0, %s190
    %s192 = sphi 0, %s190
    %s193 = sphi 0, %s192
    %s207 = sphi 0, %s193
    %s211 = sphi 0, %s211
    %s213 = sphi 0, %s211
    %s214 = sphi 0, %s213
    %s228 = sphi 0, %s214
    %s232 = sphi 0, %s232
    %s234 = sphi 0, %s232
    %s235 = sphi 0, %s234
    %s249 = sphi 0, %s235
    %s253 = sphi 0, %s253
    %s255 = sphi 0, %s253
    %s256 = sphi 0, %s255
    %s270 = sphi 0, %s256
    %s274 = sphi 0, %s274
    %s276 = sphi 0, %s274
    %s277 = sphi 0, %s276
    %s291 = sphi 0, %s277
    %s295 = sphi 0, %s295
    %s297 = sphi 0, %s295
    %s298 = sphi 0, %s297
    %s312 = sphi 0, %s298
    %s316 = sphi 0, %s316
    %s318 = sphi 0, %s316
    %s319 = sphi 0, %s318
    %s333 = sphi 0, %s319
    %s337 = sphi 0, %s337
    %s339 = sphi 0, %s337
    %s340 = sphi 0, %s339
    %s354 = sphi 0, %s340
    %s362 = sphi 0, %s364
    %s365 = sphi 0, %s362
    %s366 = sphi 0, %s365
    %s382 = sphi 0, %s366
  $region4: #{transformer_forward.11} parent=0 // loop_header_branch
    %23 = sbr.rel (%p21) target = $region8
  $region5: #{transformer_forward.11} parent=0 // loop_body
    %s25 = ssub.s32 %s20, 1
    %s26 = ssub.s32 %s20, 2
    %s33 = sadd.s32 1, %s28
    %p34 = scmp.ge.s32.totalorder %s33, 1
    %s35 = scalar_select %p34, 0, %s33
    %s36 = sadd.s32 1, %s27
    %s37 = scalar_select %p34, %s36, %s27
    %p38 = scmp.ge.s32.totalorder %s37, 2
    %s39 = scalar_select %p38, 0, %s37
    %s40 = ssub.s32 %s27, %s39
    %s41 = ssub.s32 %s28, %s35
    %s42 = sor.u32 %s40, %s41
    %p43 = scmp.eq.s32.totalorder %s42, 0
    %s45 = sadd.s32 %s44, 1
    %s46 = scalar_select %p43, %s44, %s45
    %p49 = pneg %p43
    %p50 = scmp.eq.s32.totalorder %s20, 1
    %p51 = por %p49, %p50
    %p52 = scmp.ne.s32.totalorder %s44, %s47
    %p53 = scmp.eq.s32.totalorder %s20, 0
    %p54 = por %p52, %p53
    %p55 = scmp.ne.s32.totalorder %s44, %s47
    %p56 = scmp.eq.s32.totalorder %s25, 1
    %p57 = por %p55, %p56
    %p58 = scmp.ne.s32.totalorder %s47, %s48
    %p59 = scmp.eq.s32.totalorder %s25, 0
    %p60 = por %p58, %p59
    %p61 = scmp.ne.s32.totalorder %s47, %s48
    %p62 = scmp.eq.s32.totalorder %s26, 1
    %p63 = por %p61, %p62
    %p65 = scmp.ne.s32.totalorder %s48, %s64
    %p66 = scmp.eq.s32.totalorder %s26, 0
    %p67 = por %p65, %p66
    %s68 = ssub.s32 %s27, %s39
    %p69 = scmp.eq.s32.totalorder %s68, 0
    %s71 = sadd.s32 %s70, 1
    %s72 = scalar_select %p69, %s70, %s71
    %p75 = pneg %p69
    %p76 = scmp.eq.s32.totalorder %s20, 1
    %p77 = por %p75, %p76
    %p78 = scmp.ne.s32.totalorder %s70, %s73
    %p79 = scmp.eq.s32.totalorder %s20, 0
    %p80 = por %p78, %p79
    %p81 = scmp.ne.s32.totalorder %s70, %s73
    %p82 = scmp.eq.s32.totalorder %s25, 1
    %p83 = por %p81, %p82
    %p84 = scmp.ne.s32.totalorder %s73, %s74
    %p85 = scmp.eq.s32.totalorder %s25, 0
    %p86 = por %p84, %p85
    %p87 = scmp.ne.s32.totalorder %s73, %s74
    %p88 = scmp.eq.s32.totalorder %s26, 1
    %p89 = por %p87, %p88
    %p91 = scmp.ne.s32.totalorder %s74, %s90
    %p92 = scmp.eq.s32.totalorder %s26, 0
    %p93 = por %p91, %p92
    %s94 = ssub.s32 %s27, %s39
    %s95 = ssub.s32 %s28, %s35
    %s96 = sor.u32 %s94, %s95
    %p97 = scmp.eq.s32.totalorder %s96, 0
    %s99 = sadd.s32 %s98, 1
    %s100 = scalar_select %p97, %s98, %s99
    %p103 = pneg %p97
    %p104 = scmp.eq.s32.totalorder %s20, 1
    %p105 = por %p103, %p104
    %p106 = scmp.ne.s32.totalorder %s98, %s101
    %p107 = scmp.eq.s32.totalorder %s20, 0
    %p108 = por %p106, %p107
    %p109 = scmp.ne.s32.totalorder %s98, %s101
    %p110 = scmp.eq.s32.totalorder %s25, 1
    %p111 = por %p109, %p110
    %p112 = scmp.ne.s32.totalorder %s101, %s102
    %p113 = scmp.eq.s32.totalorder %s25, 0
    %p114 = por %p112, %p113
    %p115 = scmp.ne.s32.totalorder %s101, %s102
    %p116 = scmp.eq.s32.totalorder %s26, 1
    %p117 = por %p115, %p116
    %p119 = scmp.ne.s32.totalorder %s102, %s118
    %p120 = scmp.eq.s32.totalorder %s26, 0
    %p121 = por %p119, %p120
    %s122 = ssub.s32 %s27, %s39
    %p123 = scmp.eq.s32.totalorder %s122, 0
    %s125 = sadd.s32 %s124, 1
    %s126 = scalar_select %p123, %s124, %s125
    %p129 = pneg %p123
    %p130 = scmp.eq.s32.totalorder %s20, 1
    %p131 = por %p129, %p130
    %p132 = scmp.ne.s32.totalorder %s124, %s127
    %p133 = scmp.eq.s32.totalorder %s20, 0
    %p134 = por %p132, %p133
    %p135 = scmp.ne.s32.totalorder %s124, %s127
    %p136 = scmp.eq.s32.totalorder %s25, 1
    %p137 = por %p135, %p136
    %p138 = scmp.ne.s32.totalorder %s127, %s128
    %p139 = scmp.eq.s32.totalorder %s25, 0
    %p140 = por %p138, %p139
    %p141 = scmp.ne.s32.totalorder %s127, %s128
    %p142 = scmp.eq.s32.totalorder %s26, 1
    %p143 = por %p141, %p142
    %p145 = scmp.ne.s32.totalorder %s128, %s144
    %p146 = scmp.eq.s32.totalorder %s26, 0
    %p147 = por %p145, %p146
    %s149 = sadd.s32 %s148, 1
    %p152 = scmp.eq.s32.totalorder %s20, 1
    %p153 = scmp.ne.s32.totalorder %s148, %s150
    %p154 = scmp.eq.s32.totalorder %s20, 0
    %p155 = por %p153, %p154
    %p156 = scmp.ne.s32.totalorder %s148, %s150
    %p157 = scmp.eq.s32.totalorder %s25, 1
    %p158 = por %p156, %p157
    %p159 = scmp.ne.s32.totalorder %s150, %s151
    %p160 = scmp.eq.s32.totalorder %s25, 0
    %p161 = por %p159, %p160
    %p162 = scmp.ne.s32.totalorder %s150, %s151
    %p163 = scmp.eq.s32.totalorder %s26, 1
    %p164 = por %p162, %p163
    %p166 = scmp.ne.s32.totalorder %s151, %s165
    %p167 = scmp.eq.s32.totalorder %s26, 0
    %p168 = por %p166, %p167
    %s170 = sadd.s32 %s169, 1
    %p173 = scmp.eq.s32.totalorder %s20, 1
    %p174 = scmp.ne.s32.totalorder %s169, %s171
    %p175 = scmp.eq.s32.totalorder %s20, 0
    %p176 = por %p174, %p175
    %p177 = scmp.ne.s32.totalorder %s169, %s171
    %p178 = scmp.eq.s32.totalorder %s25, 1
    %p179 = por %p177, %p178
    %p180 = scmp.ne.s32.totalorder %s171, %s172
    %p181 = scmp.eq.s32.totalorder %s25, 0
    %p182 = por %p180, %p181
    %p183 = scmp.ne.s32.totalorder %s171, %s172
    %p184 = scmp.eq.s32.totalorder %s26, 1
    %p185 = por %p183, %p184
    %p187 = scmp.ne.s32.totalorder %s172, %s186
    %p188 = scmp.eq.s32.totalorder %s26, 0
    %p189 = por %p187, %p188
    %s191 = sadd.s32 %s190, 1
    %p194 = scmp.eq.s32.totalorder %s20, 1
    %p195 = scmp.ne.s32.totalorder %s190, %s192
    %p196 = scmp.eq.s32.totalorder %s20, 0
    %p197 = por %p195, %p196
    %p198 = scmp.ne.s32.totalorder %s190, %s192
    %p199 = scmp.eq.s32.totalorder %s25, 1
    %p200 = por %p198, %p199
    %p201 = scmp.ne.s32.totalorder %s192, %s193
    %p202 = scmp.eq.s32.totalorder %s25, 0
    %p203 = por %p201, %p202
    %p204 = scmp.ne.s32.totalorder %s192, %s193
    %p205 = scmp.eq.s32.totalorder %s26, 1
    %p206 = por %p204, %p205
    %p208 = scmp.ne.s32.totalorder %s193, %s207
    %p209 = scmp.eq.s32.totalorder %s26, 0
    %p210 = por %p208, %p209
    %s212 = sadd.s32 %s211, 1
    %p215 = scmp.eq.s32.totalorder %s20, 1
    %p216 = scmp.ne.s32.totalorder %s211, %s213
    %p217 = scmp.eq.s32.totalorder %s20, 0
    %p218 = por %p216, %p217
    %p219 = scmp.ne.s32.totalorder %s211, %s213
    %p220 = scmp.eq.s32.totalorder %s25, 1
    %p221 = por %p219, %p220
    %p222 = scmp.ne.s32.totalorder %s213, %s214
    %p223 = scmp.eq.s32.totalorder %s25, 0
    %p224 = por %p222, %p223
    %p225 = scmp.ne.s32.totalorder %s213, %s214
    %p226 = scmp.eq.s32.totalorder %s26, 1
    %p227 = por %p225, %p226
    %p229 = scmp.ne.s32.totalorder %s214, %s228
    %p230 = scmp.eq.s32.totalorder %s26, 0
    %p231 = por %p229, %p230
    %s233 = sadd.s32 %s232, 1
    %p236 = scmp.eq.s32.totalorder %s20, 1
    %p237 = scmp.ne.s32.totalorder %s232, %s234
    %p238 = scmp.eq.s32.totalorder %s20, 0
    %p239 = por %p237, %p238
    %p240 = scmp.ne.s32.totalorder %s232, %s234
    %p241 = scmp.eq.s32.totalorder %s25, 1
    %p242 = por %p240, %p241
    %p243 = scmp.ne.s32.totalorder %s234, %s235
    %p244 = scmp.eq.s32.totalorder %s25, 0
    %p245 = por %p243, %p244
    %p246 = scmp.ne.s32.totalorder %s234, %s235
    %p247 = scmp.eq.s32.totalorder %s26, 1
    %p248 = por %p246, %p247
    %p250 = scmp.ne.s32.totalorder %s235, %s249
    %p251 = scmp.eq.s32.totalorder %s26, 0
    %p252 = por %p250, %p251
    %s254 = sadd.s32 %s253, 1
    %p257 = scmp.eq.s32.totalorder %s20, 1
    %p258 = scmp.ne.s32.totalorder %s253, %s255
    %p259 = scmp.eq.s32.totalorder %s20, 0
    %p260 = por %p258, %p259
    %p261 = scmp.ne.s32.totalorder %s253, %s255
    %p262 = scmp.eq.s32.totalorder %s25, 1
    %p263 = por %p261, %p262
    %p264 = scmp.ne.s32.totalorder %s255, %s256
    %p265 = scmp.eq.s32.totalorder %s25, 0
    %p266 = por %p264, %p265
    %p267 = scmp.ne.s32.totalorder %s255, %s256
    %p268 = scmp.eq.s32.totalorder %s26, 1
    %p269 = por %p267, %p268
    %p271 = scmp.ne.s32.totalorder %s256, %s270
    %p272 = scmp.eq.s32.totalorder %s26, 0
    %p273 = por %p271, %p272
    %s275 = sadd.s32 %s274, 1
    %p278 = scmp.eq.s32.totalorder %s20, 1
    %p279 = scmp.ne.s32.totalorder %s274, %s276
    %p280 = scmp.eq.s32.totalorder %s20, 0
    %p281 = por %p279, %p280
    %p282 = scmp.ne.s32.totalorder %s274, %s276
    %p283 = scmp.eq.s32.totalorder %s25, 1
    %p284 = por %p282, %p283
    %p285 = scmp.ne.s32.totalorder %s276, %s277
    %p286 = scmp.eq.s32.totalorder %s25, 0
    %p287 = por %p285, %p286
    %p288 = scmp.ne.s32.totalorder %s276, %s277
    %p289 = scmp.eq.s32.totalorder %s26, 1
    %p290 = por %p288, %p289
    %p292 = scmp.ne.s32.totalorder %s277, %s291
    %p293 = scmp.eq.s32.totalorder %s26, 0
    %p294 = por %p292, %p293
    %s296 = sadd.s32 %s295, 1
    %p299 = scmp.eq.s32.totalorder %s20, 1
    %p300 = scmp.ne.s32.totalorder %s295, %s297
    %p301 = scmp.eq.s32.totalorder %s20, 0
    %p302 = por %p300, %p301
    %p303 = scmp.ne.s32.totalorder %s295, %s297
    %p304 = scmp.eq.s32.totalorder %s25, 1
    %p305 = por %p303, %p304
    %p306 = scmp.ne.s32.totalorder %s297, %s298
    %p307 = scmp.eq.s32.totalorder %s25, 0
    %p308 = por %p306, %p307
    %p309 = scmp.ne.s32.totalorder %s297, %s298
    %p310 = scmp.eq.s32.totalorder %s26, 1
    %p311 = por %p309, %p310
    %p313 = scmp.ne.s32.totalorder %s298, %s312
    %p314 = scmp.eq.s32.totalorder %s26, 0
    %p315 = por %p313, %p314
    %s317 = sadd.s32 %s316, 1
    %p320 = scmp.eq.s32.totalorder %s20, 1
    %p321 = scmp.ne.s32.totalorder %s316, %s318
    %p322 = scmp.eq.s32.totalorder %s20, 0
    %p323 = por %p321, %p322
    %p324 = scmp.ne.s32.totalorder %s316, %s318
    %p325 = scmp.eq.s32.totalorder %s25, 1
    %p326 = por %p324, %p325
    %p327 = scmp.ne.s32.totalorder %s318, %s319
    %p328 = scmp.eq.s32.totalorder %s25, 0
    %p329 = por %p327, %p328
    %p330 = scmp.ne.s32.totalorder %s318, %s319
    %p331 = scmp.eq.s32.totalorder %s26, 1
    %p332 = por %p330, %p331
    %p334 = scmp.ne.s32.totalorder %s319, %s333
    %p335 = scmp.eq.s32.totalorder %s26, 0
    %p336 = por %p334, %p335
    %s338 = sadd.s32 %s337, 1
    %p341 = scmp.eq.s32.totalorder %s20, 1
    %p342 = scmp.ne.s32.totalorder %s337, %s339
    %p343 = scmp.eq.s32.totalorder %s20, 0
    %p344 = por %p342, %p343
    %p345 = scmp.ne.s32.totalorder %s337, %s339
    %p346 = scmp.eq.s32.totalorder %s25, 1
    %p347 = por %p345, %p346
    %p348 = scmp.ne.s32.totalorder %s339, %s340
    %p349 = scmp.eq.s32.totalorder %s25, 0
    %p350 = por %p348, %p349
    %p351 = scmp.ne.s32.totalorder %s339, %s340
    %p352 = scmp.eq.s32.totalorder %s26, 1
    %p353 = por %p351, %p352
    %p355 = scmp.ne.s32.totalorder %s340, %s354
    %p356 = scmp.eq.s32.totalorder %s26, 0
    %p357 = por %p355, %p356
    %s358 = ssub.s32 %s27, %s39
    %s359 = ssub.s32 %s28, %s35
    %s360 = sor.u32 %s358, %s359
    %p361 = scmp.eq.s32.totalorder %s360, 0
    %s363 = sadd.s32 %s362, 1
    %s364 = scalar_select %p361, %s362, %s363
    %p367 = pneg %p361
    %p368 = scmp.eq.s32.totalorder %s20, 1
    %p369 = por %p367, %p368
    %p370 = scmp.ne.s32.totalorder %s362, %s365
    %p371 = scmp.eq.s32.totalorder %s20, 0
    %p372 = por %p370, %p371
    %p373 = scmp.ne.s32.totalorder %s362, %s365
    %p374 = scmp.eq.s32.totalorder %s25, 1
    %p375 = por %p373, %p374
    %p376 = scmp.ne.s32.totalorder %s365, %s366
    %p377 = scmp.eq.s32.totalorder %s25, 0
    %p378 = por %p376, %p377
    %p379 = scmp.ne.s32.totalorder %s365, %s366
    %p380 = scmp.eq.s32.totalorder %s26, 1
    %p381 = por %p379, %p380
    %p383 = scmp.ne.s32.totalorder %s366, %s382
    %p384 = scmp.eq.s32.totalorder %s26, 0
    %p385 = por %p383, %p384
    %p386 = scmp.le.s32.totalorder 1, %s20
    %p387 = scmp.lt.s32.totalorder %s20, 3
    %p388 = pnand %p386, %p387
    %p389 = pneg %p388
    // Predicated region
    $region9: #{transformer_forward.11} parent=5 // pred_check
      _
    $region10: #{transformer_forward.11} parent=5 // pred_check_branch
      %391 = sbr.rel (%p388) target = $region12
    $region11: #{transformer_forward.11} parent=5 // pred_region
      %s392 = ssub.s32 %s20, 1
      // Predicated region
      $region13: #{transformer_forward.11} parent=11 // pred_check
        %p393 = pneg %p161
      $region14: #{transformer_forward.11} parent=11 // pred_check_branch
        %395 = sbr.rel (%p393) target = $region16
      $region15: #{transformer_forward.11} parent=11 // pred_region
        _
      $region16: #{transformer_forward.11} parent=11 // pred_fallthru
        _
      // Predicated region
      $region17: #{transformer_forward.11} parent=11 // pred_check
        %p396 = pneg %p182
      $region18: #{transformer_forward.11} parent=11 // pred_check_branch
        %398 = sbr.rel (%p396) target = $region20
      $region19: #{transformer_forward.11} parent=11 // pred_region
        _
      $region20: #{transformer_forward.11} parent=11 // pred_fallthru
        _
      // Predicated region
      $region21: #{transformer_forward.11} parent=11 // pred_check
        %p399 = pneg %p203
      $region22: #{transformer_forward.11} parent=11 // pred_check_branch
        %401 = sbr.rel (%p399) target = $region24
      $region23: #{transformer_forward.11} parent=11 // pred_region
        _
      $region24: #{transformer_forward.11} parent=11 // pred_fallthru
        _
      // Predicated region
      $region25: #{transformer_forward.11} parent=11 // pred_check
        %p402 = pneg %p224
      $region26: #{transformer_forward.11} parent=11 // pred_check_branch
        %404 = sbr.rel (%p402) target = $region28
      $region27: #{transformer_forward.11} parent=11 // pred_region
        _
      $region28: #{transformer_forward.11} parent=11 // pred_fallthru
        _
      // Predicated region
      $region29: #{transformer_forward.11} parent=11 // pred_check
        %p405 = pneg %p245
      $region30: #{transformer_forward.11} parent=11 // pred_check_branch
        %407 = sbr.rel (%p405) target = $region32
      $region31: #{transformer_forward.11} parent=11 // pred_region
        _
      $region32: #{transformer_forward.11} parent=11 // pred_fallthru
        _
      // Predicated region
      $region33: #{transformer_forward.11} parent=11 // pred_check
        %p408 = pneg %p266
      $region34: #{transformer_forward.11} parent=11 // pred_check_branch
        %410 = sbr.rel (%p408) target = $region36
      $region35: #{transformer_forward.11} parent=11 // pred_region
        _
      $region36: #{transformer_forward.11} parent=11 // pred_fallthru
        _
      // Predicated region
      $region37: #{transformer_forward.11} parent=11 // pred_check
        %p411 = pneg %p287
      $region38: #{transformer_forward.11} parent=11 // pred_check_branch
        %413 = sbr.rel (%p411) target = $region40
      $region39: #{transformer_forward.11} parent=11 // pred_region
        _
      $region40: #{transformer_forward.11} parent=11 // pred_fallthru
        _
      // Predicated region
      $region41: #{transformer_forward.11} parent=11 // pred_check
        %p414 = pneg %p308
      $region42: #{transformer_forward.11} parent=11 // pred_check_branch
        %416 = sbr.rel (%p414) target = $region44
      $region43: #{transformer_forward.11} parent=11 // pred_region
        _
      $region44: #{transformer_forward.11} parent=11 // pred_fallthru
        _
      // Predicated region
      $region45: #{transformer_forward.11} parent=11 // pred_check
        %p417 = pneg %p329
      $region46: #{transformer_forward.11} parent=11 // pred_check_branch
        %419 = sbr.rel (%p417) target = $region48
      $region47: #{transformer_forward.11} parent=11 // pred_region
        _
      $region48: #{transformer_forward.11} parent=11 // pred_fallthru
        _
      // Predicated region
      $region49: #{transformer_forward.11} parent=11 // pred_check
        %p420 = pneg %p350
      $region50: #{transformer_forward.11} parent=11 // pred_check_branch
        %422 = sbr.rel (%p420) target = $region52
      $region51: #{transformer_forward.11} parent=11 // pred_region
        _
      $region52: #{transformer_forward.11} parent=11 // pred_fallthru
        _
    $region12: #{transformer_forward.11} parent=5 // pred_fallthru
      _
    %p423 = scmp.lt.s32.totalorder %s20, 2
    // Predicated region
    $region53: #{transformer_forward.11} parent=5 // pred_check
      %p424 = pneg %p423
    $region54: #{transformer_forward.11} parent=5 // pred_check_branch
      %426 = sbr.rel (%p424) target = $region56
    $region55: #{transformer_forward.11} parent=5 // pred_region
      // Predicated region
      $region57: #{transformer_forward.11} parent=55 // pred_check
        %p427 = pneg %p54
      $region58: #{transformer_forward.11} parent=55 // pred_check_branch
        %429 = sbr.rel (%p427) target = $region60
      $region59: #{transformer_forward.11} parent=55 // pred_region
        %p430 = scmp.lt.s32.totalorder %s27, 1
        %s431 = scalar_select %p430, %s27, 1
        %p432 = scmp.lt.s32.totalorder %s28, 0
        %s433 = scalar_select %p432, %s28, 0
        %s434 = sadd.s32 %s433, %s431
        %s435 = smul.addr %s434, 4
        %s436 = scalar_lea.vmem %s0, %s435
      $region60: #{transformer_forward.11} parent=55 // pred_fallthru
        _
      // Predicated region
      $region61: #{transformer_forward.11} parent=55 // pred_check
        %p437 = pneg %p80
      $region62: #{transformer_forward.11} parent=55 // pred_check_branch
        %439 = sbr.rel (%p437) target = $region64
      $region63: #{transformer_forward.11} parent=55 // pred_region
        %p440 = scmp.lt.s32.totalorder %s27, 1
        %s441 = scalar_select %p440, %s27, 1
        %s442 = smul.addr %s441, 4
        %s443 = scalar_lea.vmem %s1, %s442
      $region64: #{transformer_forward.11} parent=55 // pred_fallthru
        _
      // Predicated region
      $region65: #{transformer_forward.11} parent=55 // pred_check
        %p444 = pneg %p108
      $region66: #{transformer_forward.11} parent=55 // pred_check_branch
        %446 = sbr.rel (%p444) target = $region68
      $region67: #{transformer_forward.11} parent=55 // pred_region
        %p447 = scmp.lt.s32.totalorder %s27, 1
        %s448 = scalar_select %p447, %s27, 1
        %p449 = scmp.lt.s32.totalorder %s28, 0
        %s450 = scalar_select %p449, %s28, 0
        %s451 = sadd.s32 %s450, %s448
        %s452 = smul.addr %s451, 8
        %s453 = scalar_lea.vmem %s2, %s452
      $region68: #{transformer_forward.11} parent=55 // pred_fallthru
        _
      // Predicated region
      $region69: #{transformer_forward.11} parent=55 // pred_check
        %p454 = pneg %p134
      $region70: #{transformer_forward.11} parent=55 // pred_check_branch
        %456 = sbr.rel (%p454) target = $region72
      $region71: #{transformer_forward.11} parent=55 // pred_region
        %p457 = scmp.lt.s32.totalorder %s27, 1
        %s458 = scalar_select %p457, %s27, 1
        %s459 = scalar_lea.vmem %s3, %s458
      $region72: #{transformer_forward.11} parent=55 // pred_fallthru
        _
    $region56: #{transformer_forward.11} parent=5 // pred_fallthru
      _
    %p460 = scmp.le.s32.totalorder 1, %s20
    %p461 = scmp.lt.s32.totalorder %s20, 3
    %p462 = pnand %p460, %p461
    %p463 = pneg %p462
    // Predicated region
    $region73: #{transformer_forward.11} parent=5 // pred_check
      _
    $region74: #{transformer_forward.11} parent=5 // pred_check_branch
      %465 = sbr.rel (%p462) target = $region76
    $region75: #{transformer_forward.11} parent=5 // pred_region
      %s466 = ssub.s32 %s20, 1
      %p467 = scmp.lt.s32.totalorder %s29, 1
      %s468 = scalar_select %p467, %s29, 1
      %p469 = scmp.lt.s32.totalorder %s30, 0
      %s470 = scalar_select %p469, %s30, 0
      %s471 = sadd.s32 %s470, %s468
      %s472 = smul.addr %s471, 4
      %s473 = scalar_lea.vmem %s0, %s472
      %p474 = pneg %p60
      %p475 = pneg %p57
      %p476 = scmp.lt.s32.totalorder %s29, 1
      %s477 = scalar_select %p476, %s29, 1
      %s478 = smul.addr %s477, 4
      %s479 = scalar_lea.vmem %s1, %s478
      %p480 = pneg %p86
      %p481 = pneg %p83
      %p482 = scmp.lt.s32.totalorder %s29, 1
      %s483 = scalar_select %p482, %s29, 1
      %p484 = scmp.lt.s32.totalorder %s30, 0
      %s485 = scalar_select %p484, %s30, 0
      %s486 = sadd.s32 %s485, %s483
      %s487 = smul.addr %s486, 8
      %s488 = scalar_lea.vmem %s2, %s487
      %p489 = pneg %p114
      %p490 = pneg %p111
      %p491 = scmp.lt.s32.totalorder %s29, 1
      %s492 = scalar_select %p491, %s29, 1
      %s493 = scalar_lea.vmem %s3, %s492
      %p494 = pneg %p140
      %p495 = pneg %p137
      %p496 = pneg %p161
      %p497 = pneg %p158
      %p498 = pneg %p182
      %p499 = pneg %p179
      %p500 = pneg %p203
      %p501 = pneg %p200
      %p502 = pneg %p224
      %p503 = pneg %p221
      %p504 = pneg %p245
      %p505 = pneg %p242
      %p506 = pneg %p266
      %p507 = pneg %p263
      %p508 = pneg %p287
      %p509 = pneg %p284
      %p510 = pneg %p308
      %p511 = pneg %p305
      %p512 = pneg %p329
      %p513 = pneg %p326
      %p514 = pneg %p350
      %p515 = pneg %p347
      %p516 = pneg %p378
      %p517 = pneg %p375
      %p518 = scmp.lt.s32.totalorder %s29, 1
      %s519 = scalar_select %p518, %s29, 1
      %p520 = scmp.lt.s32.totalorder %s30, 0
      %s521 = scalar_select %p520, %s30, 0
      %s522 = sadd.s32 %s521, %s519
      %s523 = smul.addr %s522, 4
      %s524 = scalar_lea.vmem %s14, %s523
      %p525 = scmp.lt.s32.totalorder %s29, 1
      %s526 = scalar_select %p525, %s29, 1
      %p527 = scmp.lt.s32.totalorder %s30, 0
      %s528 = scalar_select %p527, %s30, 0
      %s529 = sadd.s32 %s528, %s526
      %s530 = smul.addr %s529, 4
      %s531 = scalar_lea.vmem %s0, %s530
      %p532 = scmp.lt.s32.totalorder %s29, 1
      %s533 = scalar_select %p532, %s29, 1
      %s534 = smul.addr %s533, 4
      %s535 = scalar_lea.vmem %s1, %s534
      %p536 = scmp.lt.s32.totalorder %s29, 1
      %s537 = scalar_select %p536, %s29, 1
      %p538 = scmp.lt.s32.totalorder %s30, 0
      %s539 = scalar_select %p538, %s30, 0
      %s540 = sadd.s32 %s539, %s537
      %s541 = smul.addr %s540, 8
      %s542 = scalar_lea.vmem %s2, %s541
      %p543 = scmp.lt.s32.totalorder %s29, 1
      %s544 = scalar_select %p543, %s29, 1
      %s545 = scalar_lea.vmem %s3, %s544
      %p546 = scmp.lt.s32.totalorder %s29, 1
      %s547 = scalar_select %p546, %s29, 1
      %p548 = scmp.lt.s32.totalorder %s30, 0
      %s549 = scalar_select %p548, %s30, 0
      %s550 = sadd.s32 %s549, %s547
      %s551 = smul.addr %s550, 4
      %s552 = scalar_lea.vmem %s14, %s551
      %p554 = scmp.eq.s32.totalorder %s30, 0
      // Predicated region
      $region77: #{transformer_forward.11} parent=75 // pred_check
        %p555 = pneg %p554
      $region78: #{transformer_forward.11} parent=75 // pred_check_branch
        %557 = sbr.rel (%p555) target = $region80
      $region79: #{transformer_forward.11} parent=75 // pred_region
        %v558 = vld [vmem:[%s535] sm:$0xf]
        %v559 = vld [vmem:[%s6] sm:$0xf]
        %v560 = vld [vmem:[%s6 + $0x4] sm:$0xf]
        %v561 = vld [vmem:[%s6 + $0x8] sm:$0xf]
        %v562 = vld [vmem:[%s6 + $0xc] sm:$0xf]
        %v563 = vld [vmem:[%s7] sm:$0x1]
        %v565 = vlaneseq
        %v566 = vshrl.u32 %v565, 7
        %v567 = vsub.s32 0, %v566
        %v568 = vrot.slane %v563, %v567
        %v574 = vunpack.c.l.b16 %v559
        %v575 = vunpack.c.l.b16 %v560
        %v576 = vunpack.c.l.b16 %v561
        %v577 = vunpack.c.l.b16 %v562
        %v578 = vpack.c.b16 %v575, %v574
        %v579 = vpack.c.b16 %v577, %v576
        %vm582 = vcmask 261120
        %v584 = vsel %vm582, %v558, 0
        %586 = vmatprep.subr.bf16.mxu0 0
        %587 = vmatpush1.bf16.msra.mxu0 %v578
        %588 = vmatprep.subr.bf16.mxu0 0
        %589 = vmatpush1.bf16.msra.mxu0 %v579
        %590 = vmatprep.subr.bf16.mxu0 0
        %591 = vmatpush1.bf16.msra.mxu0 0
        %592 = vmatprep.subr.bf16.mxu0 0
        %593 = vmatpush1.bf16.msra.mxu0 0
        %594 = vmatprep.subr.bf16.mxu0 0
        %595 = vmatpush1.bf16.msra.mxu0 0
        %596 = vmatprep.subr.bf16.mxu0 0
        %597 = vmatpush1.bf16.msra.mxu0 0
        %598 = vmatprep.subr.bf16.mxu0 0
        %599 = vmatpush1.bf16.msra.mxu0 0
        %600 = vmatprep.subr.bf16.mxu0 0
        %601 = vmatpush1.bf16.msra.mxu0 0
        %602 = vmatprep.subr.bf16.mxu0 0
        %603 = vmatpush1.bf16.msra.mxu0 0
        %604 = vmatprep.subr.bf16.mxu0 0
        %605 = vmatpush1.bf16.msra.mxu0 0
        %606 = vmatprep.subr.bf16.mxu0 0
        %607 = vmatpush1.bf16.msra.mxu0 0
        %608 = vmatprep.subr.bf16.mxu0 0
        %609 = vmatpush1.bf16.msra.mxu0 0
        %610 = vmatprep.subr.bf16.mxu0 0
        %611 = vmatpush1.bf16.msra.mxu0 0
        %612 = vmatprep.subr.bf16.mxu0 0
        %613 = vmatpush1.bf16.msra.mxu0 0
        %614 = vmatprep.subr.bf16.mxu0 0
        %615 = vmatpush1.bf16.msra.mxu0 0
        %616 = vmatprep.subr.bf16.mxu0 0
        %617 = vmatpush1.bf16.msra.mxu0 0
        %618 = vmatprep.mubr.bf16.mxu0 0
        %619 = vmatmul.mubr.bf16.gmra.mrb[0].mxu0 %v584
        %v620 = vpop.f32.mrb[0].mxu0
        %v621 = vadd.f32 %v568, %v620
        %v622 = vpop.f32.mrb[0].mxu0
        %v623 = vpop.f32.mrb[0].mxu0
        %v624 = vpop.f32.mrb[0].mxu0
        %625 = vdwg.mxu0
        %v626 = vld [vmem:[%s8] sm:$0xf]
        %v627 = vld [vmem:[%s8 + $0x4] sm:$0xf]
        %v628 = vld [vmem:[%s8 + $0x8] sm:$0xf]
        %v629 = vld [vmem:[%s8 + $0xc] sm:$0xf]
        %v630 = vld [vmem:[%s9] sm:$0x1]
        %v632 = vlaneseq
        %v633 = vshrl.u32 %v632, 7
        %v634 = vsub.s32 0, %v633
        %v635 = vrot.slane %v630, %v634
        %v641 = vunpack.c.l.b16 %v626
        %v642 = vunpack.c.l.b16 %v627
        %v643 = vunpack.c.l.b16 %v628
        %v644 = vunpack.c.l.b16 %v629
        %v645 = vpack.c.b16 %v642, %v641
        %v646 = vpack.c.b16 %v644, %v643
        %649 = vmatprep.subr.bf16.mxu0 0
        %650 = vmatpush1.bf16.msra.mxu0 %v645
        %651 = vmatprep.subr.bf16.mxu0 0
        %652 = vmatpush1.bf16.msra.mxu0 %v646
        %653 = vmatprep.subr.bf16.mxu0 0
        %654 = vmatpush1.bf16.msra.mxu0 0
        %655 = vmatprep.subr.bf16.mxu0 0
        %656 = vmatpush1.bf16.msra.mxu0 0
        %657 = vmatprep.subr.bf16.mxu0 0
        %658 = vmatpush1.bf16.msra.mxu0 0
        %659 = vmatprep.subr.bf16.mxu0 0
        %660 = vmatpush1.bf16.msra.mxu0 0
        %661 = vmatprep.subr.bf16.mxu0 0
        %662 = vmatpush1.bf16.msra.mxu0 0
        %663 = vmatprep.subr.bf16.mxu0 0
        %664 = vmatpush1.bf16.msra.mxu0 0
        %665 = vmatprep.subr.bf16.mxu0 0
        %666 = vmatpush1.bf16.msra.mxu0 0
        %667 = vmatprep.subr.bf16.mxu0 0
        %668 = vmatpush1.bf16.msra.mxu0 0
        %669 = vmatprep.subr.bf16.mxu0 0
        %670 = vmatpush1.bf16.msra.mxu0 0
        %671 = vmatprep.subr.bf16.mxu0 0
        %672 = vmatpush1.bf16.msra.mxu0 0
        %673 = vmatprep.subr.bf16.mxu0 0
        %674 = vmatpush1.bf16.msra.mxu0 0
        %675 = vmatprep.subr.bf16.mxu0 0
        %676 = vmatpush1.bf16.msra.mxu0 0
        %677 = vmatprep.subr.bf16.mxu0 0
        %678 = vmatpush1.bf16.msra.mxu0 0
        %679 = vmatprep.subr.bf16.mxu0 0
        %680 = vmatpush1.bf16.msra.mxu0 0
        %681 = vmatprep.mubr.bf16.mxu0 0
        %682 = vmatmul.mubr.bf16.gmra.mrb[0].mxu0 %v584
        %v683 = vpop.f32.mrb[0].mxu0
        %v684 = vadd.f32 %v635, %v683
        %v685 = vpop.f32.mrb[0].mxu0
        %v686 = vpop.f32.mrb[0].mxu0
        %v687 = vpop.f32.mrb[0].mxu0
        %688 = vdwg.mxu0
        %v689 = vpack.c.bf16 %v621, %v621
        %691 = vrot.lane.b32.xlu0 %v689, 120
        %v692 = vpop.permute.xlu0 %691
        %693 = vrot.lane.b32.xlu0 %v689, 112
        %v694 = vpop.permute.xlu0 %693
        %695 = vrot.lane.b32.xlu0 %v689, 104
        %v696 = vpop.permute.xlu0 %695
        %v698 = vunpack.c.l.s4 1983009808
        %v699 = vunpack.c.0.s8 %v698
        %v700 = vlaneseq
        %v701 = vshrl.u32 %v700, 7
        %v702 = vsub.s32 %v699, %v701
        %v703 = vrot.slane %v689, %v702
        %v706 = vunpack.c.l.s4 1983009808
        %v707 = vunpack.c.0.s8 %v706
        %v708 = vlaneseq
        %v709 = vshrl.u32 %v708, 7
        %v710 = vsub.s32 %v707, %v709
        %v711 = vrot.slane %v694, %v710
        %v712 = vcombine.low %v703, %v711
        %v713 = vcombine.high %v703, %v711
        %v715 = vunpack.c.l.s4 1934713408
        %v716 = vunpack.c.0.s8 %v715
        %v717 = vlaneseq
        %v718 = vshrl.u32 %v717, 7
        %v719 = vsub.s32 %v716, %v718
        %v720 = vrot.slane %v712, %v719
        %v722 = vunpack.c.l.s4 1934713408
        %v723 = vunpack.c.0.s8 %v722
        %v724 = vlaneseq
        %v725 = vshrl.u32 %v724, 7
        %v726 = vsub.s32 %v723, %v725
        %v727 = vrot.slane %v713, %v726
        %v728 = vcombine.high %v720, 0
        %v729 = vcombine.high %v727, 0
        %v732 = vunpack.c.l.s4 1983009808
        %v733 = vunpack.c.0.s8 %v732
        %v734 = vlaneseq
        %v735 = vshrl.u32 %v734, 7
        %v736 = vsub.s32 %v733, %v735
        %v737 = vrot.slane %v692, %v736
        %v740 = vunpack.c.l.s4 1983009808
        %v741 = vunpack.c.0.s8 %v740
        %v742 = vlaneseq
        %v743 = vshrl.u32 %v742, 7
        %v744 = vsub.s32 %v741, %v743
        %v745 = vrot.slane %v696, %v744
        %v746 = vcombine.low %v737, %v745
        %v747 = vcombine.high %v737, %v745
        %v749 = vunpack.c.l.s4 1934713408
        %v750 = vunpack.c.0.s8 %v749
        %v751 = vlaneseq
        %v752 = vshrl.u32 %v751, 7
        %v753 = vsub.s32 %v750, %v752
        %v754 = vrot.slane %v746, %v753
        %v756 = vunpack.c.l.s4 1934713408
        %v757 = vunpack.c.0.s8 %v756
        %v758 = vlaneseq
        %v759 = vshrl.u32 %v758, 7
        %v760 = vsub.s32 %v757, %v759
        %v761 = vrot.slane %v747, %v760
        %v762 = vcombine.high %v754, 0
        %v763 = vcombine.high %v761, 0
        %v766 = vpack.i.b16 %v754, %v720
        %v768 = vshrl.u32 %v720, 16
        %v769 = vshrl.u32 %v754, 16
        %v770 = vpack.i.b16 %v769, %v768
        %v774 = vpack.i.b16 %v762, %v728
        %v776 = vshrl.u32 %v728, 16
        %v777 = vshrl.u32 %v762, 16
        %v778 = vpack.i.b16 %v777, %v776
        %v782 = vpack.i.b16 %v761, %v727
        %v784 = vshrl.u32 %v727, 16
        %v785 = vshrl.u32 %v761, 16
        %v786 = vpack.i.b16 %v785, %v784
        %v790 = vpack.i.b16 %v763, %v729
        %v792 = vshrl.u32 %v729, 16
        %v793 = vshrl.u32 %v763, 16
        %v794 = vpack.i.b16 %v793, %v792
        %v796 = vcombine.low %v766, %v782
        %v798 = vunpack.c.l.s4 1983009808
        %v799 = vunpack.c.0.s8 %v798
        %v800 = vlaneseq
        %v801 = vshrl.u32 %v800, 7
        %v802 = vsub.s32 %v799, %v801
        %v803 = vrot.slane %v796, %v802
        %v804 = vcombine.low %v774, %v790
        %v806 = vunpack.c.l.s4 1983009808
        %v807 = vunpack.c.0.s8 %v806
        %v808 = vlaneseq
        %v809 = vshrl.u32 %v808, 7
        %v810 = vsub.s32 %v807, %v809
        %v811 = vrot.slane %v804, %v810
        %v812 = vcombine.low %v803, %v811
        %v814 = vunpack.c.l.s4 1934713408
        %v815 = vunpack.c.0.s8 %v814
        %v816 = vlaneseq
        %v817 = vshrl.u32 %v816, 7
        %v818 = vsub.s32 %v815, %v817
        %v819 = vrot.slane %v812, %v818
        %v820 = vcombine.high %v819, 0
        %v821 = vcombine.low %v770, %v786
        %v823 = vunpack.c.l.s4 1983009808
        %v824 = vunpack.c.0.s8 %v823
        %v825 = vlaneseq
        %v826 = vshrl.u32 %v825, 7
        %v827 = vsub.s32 %v824, %v826
        %v828 = vrot.slane %v821, %v827
        %v829 = vcombine.low %v778, %v794
        %v831 = vunpack.c.l.s4 1983009808
        %v832 = vunpack.c.0.s8 %v831
        %v833 = vlaneseq
        %v834 = vshrl.u32 %v833, 7
        %v835 = vsub.s32 %v832, %v834
        %v836 = vrot.slane %v829, %v835
        %v837 = vcombine.low %v828, %v836
        %v839 = vunpack.c.l.s4 1934713408
        %v840 = vunpack.c.0.s8 %v839
        %v841 = vlaneseq
        %v842 = vshrl.u32 %v841, 7
        %v843 = vsub.s32 %v840, %v842
        %v844 = vrot.slane %v837, %v843
        %v845 = vcombine.high %v844, 0
        %v848 = vpack.i.b16 %v844, %v819
        %v850 = vshrl.u32 %v819, 16
        %v851 = vshrl.u32 %v844, 16
        %v852 = vpack.i.b16 %v851, %v850
        %v856 = vpack.i.b16 %v845, %v820
        %v858 = vshrl.u32 %v820, 16
        %v859 = vshrl.u32 %v845, 16
        %v860 = vpack.i.b16 %v859, %v858
        %vm862 = vcmask 60416
        %863 = vst.msk [vmem:[#allocation2] sm:$0xf] %vm862, %v848
        %864 = vst.msk [vmem:[#allocation2 + $0x4] sm:$0xf] %vm862, %v852
        %865 = vst.msk [vmem:[#allocation2 + $0x8] sm:$0xf] %vm862, %v856
        %866 = vst.msk [vmem:[#allocation2 + $0xc] sm:$0xf] %vm862, %v860
        %v867 = vpack.c.bf16 %v684, %v684
        %869 = vrot.lane.b32.xlu0 %v867, 120
        %v870 = vpop.permute.xlu0 %869
        %871 = vrot.lane.b32.xlu0 %v867, 112
        %v872 = vpop.permute.xlu0 %871
        %873 = vrot.lane.b32.xlu0 %v867, 104
        %v874 = vpop.permute.xlu0 %873
        %v876 = vunpack.c.l.s4 1983009808
        %v877 = vunpack.c.0.s8 %v876
        %v878 = vlaneseq
        %v879 = vshrl.u32 %v878, 7
        %v880 = vsub.s32 %v877, %v879
        %v881 = vrot.slane %v867, %v880
        %v884 = vunpack.c.l.s4 1983009808
        %v885 = vunpack.c.0.s8 %v884
        %v886 = vlaneseq
        %v887 = vshrl.u32 %v886, 7
        %v888 = vsub.s32 %v885, %v887
        %v889 = vrot.slane %v872, %v888
        %v890 = vcombine.low %v881, %v889
        %v891 = vcombine.high %v881, %v889
        %v893 = vunpack.c.l.s4 1934713408
        %v894 = vunpack.c.0.s8 %v893
        %v895 = vlaneseq
        %v896 = vshrl.u32 %v895, 7
        %v897 = vsub.s32 %v894, %v896
        %v898 = vrot.slane %v890, %v897
        %v900 = vunpack.c.l.s4 1934713408
        %v901 = vunpack.c.0.s8 %v900
        %v902 = vlaneseq
        %v903 = vshrl.u32 %v902, 7
        %v904 = vsub.s32 %v901, %v903
        %v905 = vrot.slane %v891, %v904
        %v906 = vcombine.high %v898, 0
        %v907 = vcombine.high %v905, 0
        %v910 = vunpack.c.l.s4 1983009808
        %v911 = vunpack.c.0.s8 %v910
        %v912 = vlaneseq
        %v913 = vshrl.u32 %v912, 7
        %v914 = vsub.s32 %v911, %v913
        %v915 = vrot.slane %v870, %v914
        %v918 = vunpack.c.l.s4 1983009808
        %v919 = vunpack.c.0.s8 %v918
        %v920 = vlaneseq
        %v921 = vshrl.u32 %v920, 7
        %v922 = vsub.s32 %v919, %v921
        %v923 = vrot.slane %v874, %v922
        %v924 = vcombine.low %v915, %v923
        %v925 = vcombine.high %v915, %v923
        %v927 = vunpack.c.l.s4 1934713408
        %v928 = vunpack.c.0.s8 %v927
        %v929 = vlaneseq
        %v930 = vshrl.u32 %v929, 7
        %v931 = vsub.s32 %v928, %v930
        %v932 = vrot.slane %v924, %v931
        %v934 = vunpack.c.l.s4 1934713408
        %v935 = vunpack.c.0.s8 %v934
        %v936 = vlaneseq
        %v937 = vshrl.u32 %v936, 7
        %v938 = vsub.s32 %v935, %v937
        %v939 = vrot.slane %v925, %v938
        %v940 = vcombine.high %v932, 0
        %v941 = vcombine.high %v939, 0
        %v944 = vpack.i.b16 %v932, %v898
        %v946 = vshrl.u32 %v898, 16
        %v947 = vshrl.u32 %v932, 16
        %v948 = vpack.i.b16 %v947, %v946
        %v952 = vpack.i.b16 %v940, %v906
        %v954 = vshrl.u32 %v906, 16
        %v955 = vshrl.u32 %v940, 16
        %v956 = vpack.i.b16 %v955, %v954
        %v960 = vpack.i.b16 %v939, %v905
        %v962 = vshrl.u32 %v905, 16
        %v963 = vshrl.u32 %v939, 16
        %v964 = vpack.i.b16 %v963, %v962
        %v968 = vpack.i.b16 %v941, %v907
        %v970 = vshrl.u32 %v907, 16
        %v971 = vshrl.u32 %v941, 16
        %v972 = vpack.i.b16 %v971, %v970
        %v974 = vcombine.low %v944, %v960
        %v976 = vunpack.c.l.s4 1983009808
        %v977 = vunpack.c.0.s8 %v976
        %v978 = vlaneseq
        %v979 = vshrl.u32 %v978, 7
        %v980 = vsub.s32 %v977, %v979
        %v981 = vrot.slane %v974, %v980
        %v982 = vcombine.low %v952, %v968
        %v984 = vunpack.c.l.s4 1983009808
        %v985 = vunpack.c.0.s8 %v984
        %v986 = vlaneseq
        %v987 = vshrl.u32 %v986, 7
        %v988 = vsub.s32 %v985, %v987
        %v989 = vrot.slane %v982, %v988
        %v990 = vcombine.low %v981, %v989
        %v992 = vunpack.c.l.s4 1934713408
        %v993 = vunpack.c.0.s8 %v992
        %v994 = vlaneseq
        %v995 = vshrl.u32 %v994, 7
        %v996 = vsub.s32 %v993, %v995
        %v997 = vrot.slane %v990, %v996
        %v998 = vcombine.high %v997, 0
        %v999 = vcombine.low %v948, %v964
        %v1001 = vunpack.c.l.s4 1983009808
        %v1002 = vunpack.c.0.s8 %v1001
        %v1003 = vlaneseq
        %v1004 = vshrl.u32 %v1003, 7
        %v1005 = vsub.s32 %v1002, %v1004
        %v1006 = vrot.slane %v999, %v1005
        %v1007 = vcombine.low %v956, %v972
        %v1009 = vunpack.c.l.s4 1983009808
        %v1010 = vunpack.c.0.s8 %v1009
        %v1011 = vlaneseq
        %v1012 = vshrl.u32 %v1011, 7
        %v1013 = vsub.s32 %v1010, %v1012
        %v1014 = vrot.slane %v1007, %v1013
        %v1015 = vcombine.low %v1006, %v1014
        %v1017 = vunpack.c.l.s4 1934713408
        %v1018 = vunpack.c.0.s8 %v1017
        %v1019 = vlaneseq
        %v1020 = vshrl.u32 %v1019, 7
        %v1021 = vsub.s32 %v1018, %v1020
        %v1022 = vrot.slane %v1015, %v1021
        %v1023 = vcombine.high %v1022, 0
        %v1026 = vpack.i.b16 %v1022, %v997
        %v1028 = vshrl.u32 %v997, 16
        %v1029 = vshrl.u32 %v1022, 16
        %v1030 = vpack.i.b16 %v1029, %v1028
        %v1034 = vpack.i.b16 %v1023, %v998
        %v1036 = vshrl.u32 %v998, 16
        %v1037 = vshrl.u32 %v1023, 16
        %v1038 = vpack.i.b16 %v1037, %v1036
        %1040 = vst.msk [vmem:[#allocation3] sm:$0xf] %vm862, %v1026
        %1041 = vst.msk [vmem:[#allocation3 + $0x4] sm:$0xf] %vm862, %v1030
        %1042 = vst.msk [vmem:[#allocation3 + $0x8] sm:$0xf] %vm862, %v1034
        %1043 = vst.msk [vmem:[#allocation3 + $0xc] sm:$0xf] %vm862, %v1038
      $region80: #{transformer_forward.11} parent=75 // pred_fallthru
        _
      %v1044 = vld [vmem:[%s531] sm:$0xf]
      %v1045 = vld [vmem:[%s4] sm:$0xf]
      %v1046 = vld [vmem:[%s4 + $0x4] sm:$0xf]
      %v1047 = vld [vmem:[%s4 + $0x8] sm:$0xf]
      %v1048 = vld [vmem:[%s4 + $0xc] sm:$0xf]
      %v1049 = vld [vmem:[%s5] sm:$0x1]
      %v1051 = vlaneseq
      %v1052 = vshrl.u32 %v1051, 7
      %v1053 = vsub.s32 0, %v1052
      %v1054 = vrot.slane %v1049, %v1053
      %v1060 = vunpack.c.l.b16 %v1045
      %v1061 = vunpack.c.l.b16 %v1046
      %v1062 = vunpack.c.l.b16 %v1047
      %v1063 = vunpack.c.l.b16 %v1048
      %v1064 = vpack.c.b16 %v1061, %v1060
      %v1065 = vpack.c.b16 %v1063, %v1062
      %vm1068 = vcmask 261120
      %v1070 = vsel %vm1068, %v1044, 0
      %1072 = vmatprep.subr.bf16.mxu0 0
      %1073 = vmatpush1.bf16.msra.mxu0 %v1064
      %1074 = vmatprep.subr.bf16.mxu0 0
      %1075 = vmatpush1.bf16.msra.mxu0 %v1065
      %1076 = vmatprep.subr.bf16.mxu0 0
      %1077 = vmatpush1.bf16.msra.mxu0 0
      %1078 = vmatprep.subr.bf16.mxu0 0
      %1079 = vmatpush1.bf16.msra.mxu0 0
      %1080 = vmatprep.subr.bf16.mxu0 0
      %1081 = vmatpush1.bf16.msra.mxu0 0
      %1082 = vmatprep.subr.bf16.mxu0 0
      %1083 = vmatpush1.bf16.msra.mxu0 0
      %1084 = vmatprep.subr.bf16.mxu0 0
      %1085 = vmatpush1.bf16.msra.mxu0 0
      %1086 = vmatprep.subr.bf16.mxu0 0
      %1087 = vmatpush1.bf16.msra.mxu0 0
      %1088 = vmatprep.subr.bf16.mxu0 0
      %1089 = vmatpush1.bf16.msra.mxu0 0
      %1090 = vmatprep.subr.bf16.mxu0 0
      %1091 = vmatpush1.bf16.msra.mxu0 0
      %1092 = vmatprep.subr.bf16.mxu0 0
      %1093 = vmatpush1.bf16.msra.mxu0 0
      %1094 = vmatprep.subr.bf16.mxu0 0
      %1095 = vmatpush1.bf16.msra.mxu0 0
      %1096 = vmatprep.subr.bf16.mxu0 0
      %1097 = vmatpush1.bf16.msra.mxu0 0
      %1098 = vmatprep.subr.bf16.mxu0 0
      %1099 = vmatpush1.bf16.msra.mxu0 0
      %1100 = vmatprep.subr.bf16.mxu0 0
      %1101 = vmatpush1.bf16.msra.mxu0 0
      %1102 = vmatprep.subr.bf16.mxu0 0
      %1103 = vmatpush1.bf16.msra.mxu0 0
      %1104 = vmatprep.mubr.bf16.mxu0 0
      %1105 = vmatmul.mubr.bf16.gmra.mrb[0].mxu0 %v1070
      %v1106 = vpop.f32.mrb[0].mxu0
      %v1107 = vadd.f32 %v1054, %v1106
      %v1108 = vpop.f32.mrb[0].mxu0
      %v1109 = vpop.f32.mrb[0].mxu0
      %v1110 = vpop.f32.mrb[0].mxu0
      %1111 = vdwg.mxu0
      %v1112 = vmul.f32 %v1107, 0.35355338
      %v1113 = vpack.c.bf16 %v1112, %v1112
      %1115 = vrot.lane.b32.xlu0 %v1113, 120
      %v1116 = vpop.permute.xlu0 %1115
      %1117 = vrot.lane.b32.xlu0 %v1113, 112
      %v1118 = vpop.permute.xlu0 %1117
      %1119 = vrot.lane.b32.xlu0 %v1113, 104
      %v1120 = vpop.permute.xlu0 %1119
      %v1122 = vunpack.c.l.s4 1983009808
      %v1123 = vunpack.c.0.s8 %v1122
      %v1124 = vlaneseq
      %v1125 = vshrl.u32 %v1124, 7
      %v1126 = vsub.s32 %v1123, %v1125
      %v1127 = vrot.slane %v1113, %v1126
      %v1130 = vunpack.c.l.s4 1983009808
      %v1131 = vunpack.c.0.s8 %v1130
      %v1132 = vlaneseq
      %v1133 = vshrl.u32 %v1132, 7
      %v1134 = vsub.s32 %v1131, %v1133
      %v1135 = vrot.slane %v1118, %v1134
      %v1136 = vcombine.low %v1127, %v1135
      %v1137 = vcombine.high %v1127, %v1135
      %v1139 = vunpack.c.l.s4 1934713408
      %v1140 = vunpack.c.0.s8 %v1139
      %v1141 = vlaneseq
      %v1142 = vshrl.u32 %v1141, 7
      %v1143 = vsub.s32 %v1140, %v1142
      %v1144 = vrot.slane %v1136, %v1143
      %v1146 = vunpack.c.l.s4 1934713408
      %v1147 = vunpack.c.0.s8 %v1146
      %v1148 = vlaneseq
      %v1149 = vshrl.u32 %v1148, 7
      %v1150 = vsub.s32 %v1147, %v1149
      %v1151 = vrot.slane %v1137, %v1150
      %v1152 = vcombine.high %v1144, 0
      %v1153 = vcombine.high %v1151, 0
      %v1156 = vunpack.c.l.s4 1983009808
      %v1157 = vunpack.c.0.s8 %v1156
      %v1158 = vlaneseq
      %v1159 = vshrl.u32 %v1158, 7
      %v1160 = vsub.s32 %v1157, %v1159
      %v1161 = vrot.slane %v1116, %v1160
      %v1164 = vunpack.c.l.s4 1983009808
      %v1165 = vunpack.c.0.s8 %v1164
      %v1166 = vlaneseq
      %v1167 = vshrl.u32 %v1166, 7
      %v1168 = vsub.s32 %v1165, %v1167
      %v1169 = vrot.slane %v1120, %v1168
      %v1170 = vcombine.low %v1161, %v1169
      %v1171 = vcombine.high %v1161, %v1169
      %v1173 = vunpack.c.l.s4 1934713408
      %v1174 = vunpack.c.0.s8 %v1173
      %v1175 = vlaneseq
      %v1176 = vshrl.u32 %v1175, 7
      %v1177 = vsub.s32 %v1174, %v1176
      %v1178 = vrot.slane %v1170, %v1177
      %v1180 = vunpack.c.l.s4 1934713408
      %v1181 = vunpack.c.0.s8 %v1180
      %v1182 = vlaneseq
      %v1183 = vshrl.u32 %v1182, 7
      %v1184 = vsub.s32 %v1181, %v1183
      %v1185 = vrot.slane %v1171, %v1184
      %v1186 = vcombine.high %v1178, 0
      %v1187 = vcombine.high %v1185, 0
      %v1190 = vpack.i.b16 %v1178, %v1144
      %v1192 = vshrl.u32 %v1144, 16
      %v1193 = vshrl.u32 %v1178, 16
      %v1194 = vpack.i.b16 %v1193, %v1192
      %v1198 = vpack.i.b16 %v1186, %v1152
      %v1200 = vshrl.u32 %v1152, 16
      %v1201 = vshrl.u32 %v1186, 16
      %v1202 = vpack.i.b16 %v1201, %v1200
      %v1206 = vpack.i.b16 %v1185, %v1151
      %v1208 = vshrl.u32 %v1151, 16
      %v1209 = vshrl.u32 %v1185, 16
      %v1210 = vpack.i.b16 %v1209, %v1208
      %v1214 = vpack.i.b16 %v1187, %v1153
      %v1216 = vshrl.u32 %v1153, 16
      %v1217 = vshrl.u32 %v1187, 16
      %v1218 = vpack.i.b16 %v1217, %v1216
      %v1220 = vcombine.low %v1190, %v1206
      %v1222 = vunpack.c.l.s4 1983009808
      %v1223 = vunpack.c.0.s8 %v1222
      %v1224 = vlaneseq
      %v1225 = vshrl.u32 %v1224, 7
      %v1226 = vsub.s32 %v1223, %v1225
      %v1227 = vrot.slane %v1220, %v1226
      %v1228 = vcombine.low %v1198, %v1214
      %v1230 = vunpack.c.l.s4 1983009808
      %v1231 = vunpack.c.0.s8 %v1230
      %v1232 = vlaneseq
      %v1233 = vshrl.u32 %v1232, 7
      %v1234 = vsub.s32 %v1231, %v1233
      %v1235 = vrot.slane %v1228, %v1234
      %v1236 = vcombine.low %v1227, %v1235
      %v1238 = vunpack.c.l.s4 1934713408
      %v1239 = vunpack.c.0.s8 %v1238
      %v1240 = vlaneseq
      %v1241 = vshrl.u32 %v1240, 7
      %v1242 = vsub.s32 %v1239, %v1241
      %v1243 = vrot.slane %v1236, %v1242
      %v1244 = vcombine.high %v1243, 0
      %v1245 = vcombine.low %v1194, %v1210
      %v1247 = vunpack.c.l.s4 1983009808
      %v1248 = vunpack.c.0.s8 %v1247
      %v1249 = vlaneseq
      %v1250 = vshrl.u32 %v1249, 7
      %v1251 = vsub.s32 %v1248, %v1250
      %v1252 = vrot.slane %v1245, %v1251
      %v1253 = vcombine.low %v1202, %v1218
      %v1255 = vunpack.c.l.s4 1983009808
      %v1256 = vunpack.c.0.s8 %v1255
      %v1257 = vlaneseq
      %v1258 = vshrl.u32 %v1257, 7
      %v1259 = vsub.s32 %v1256, %v1258
      %v1260 = vrot.slane %v1253, %v1259
      %v1261 = vcombine.low %v1252, %v1260
      %v1263 = vunpack.c.l.s4 1934713408
      %v1264 = vunpack.c.0.s8 %v1263
      %v1265 = vlaneseq
      %v1266 = vshrl.u32 %v1265, 7
      %v1267 = vsub.s32 %v1264, %v1266
      %v1268 = vrot.slane %v1261, %v1267
      %v1269 = vcombine.high %v1268, 0
      %v1272 = vpack.i.b16 %v1268, %v1243
      %v1273 = vshrl.u32 %v1243, 16
      %v1274 = vshrl.u32 %v1268, 16
      %v1275 = vpack.i.b16 %v1274, %v1273
      %v1278 = vpack.i.b16 %v1269, %v1244
      %v1279 = vshrl.u32 %v1244, 16
      %v1280 = vshrl.u32 %v1269, 16
      %v1281 = vpack.i.b16 %v1280, %v1279
      %v1282 = vld [vmem:[%s542] sm:$0xff]
      %vm1283 = vcmp.ne.s32.totalorder %v1282, 0
      %v1284 = vld [vmem:[%s545] sm:$0x1]
      %vm1285 = vcmp.ne.s32.totalorder %v1284, 0
      %v1286 = vsel %vm1283, 1, 0
      %1287 = vset.pattern.permute.xlu0 0
      %1288 = vperm.xlu0 %1287, %v1286
      %v1289 = vpop.permute.xlu0 %1288
      %vm1290 = vcmp.eq.s32.totalorder %v1289, 1
      %v1291 = vsel %vm1285, 1, 0
      %v1292 = vlaneseq
      %v1293 = vshrl.u32 %v1292, 7
      %v1294 = vsub.s32 0, %v1293
      %v1295 = vrot.slane %v1291, %v1294
      %vm1296 = vcmp.eq.s32.totalorder %v1295, 1
      %vm1297 = vmand %vm1290, %vm1296
      %v1298 = vsel %vm1297, 0.0, -1e+09
      %v1299 = vld [vmem:[#allocation2] sm:$0xf]
      %v1300 = vld [vmem:[#allocation2 + $0x4] sm:$0xf]
      %v1301 = vld [vmem:[#allocation2 + $0x8] sm:$0xf]
      %v1302 = vld [vmem:[#allocation2 + $0xc] sm:$0xf]
      %vm1303 = vcmask 64512
      %v1305 = vsel %vm1303, %v1272, 0
      %v1308 = vsel %vm1303, %v1299, 0
      %1310 = vmatprep.subr.bf16.mxu0 0
      %1311 = vmatpush1.bf16.xpose.msra.mxu0 %v1308
      %1312 = vmatprep.subr.bf16.mxu0 0
      %1313 = vmatpush1.bf16.xpose.msra.mxu0 0
      %1314 = vmatprep.subr.bf16.mxu0 0
      %1315 = vmatpush1.bf16.xpose.msra.mxu0 0
      %1316 = vmatprep.subr.bf16.mxu0 0
      %1317 = vmatpush1.bf16.xpose.msra.mxu0 0
      %1318 = vmatprep.subr.bf16.mxu0 0
      %1319 = vmatpush1.bf16.xpose.msra.mxu0 0
      %1320 = vmatprep.subr.bf16.mxu0 0
      %1321 = vmatpush1.bf16.xpose.msra.mxu0 0
      %1322 = vmatprep.subr.bf16.mxu0 0
      %1323 = vmatpush1.bf16.xpose.msra.mxu0 0
      %1324 = vmatprep.subr.bf16.mxu0 0
      %1325 = vmatpush1.bf16.xpose.msra.mxu0 0
      %1326 = vmatprep.subr.bf16.mxu0 0
      %1327 = vmatpush1.bf16.xpose.msra.mxu0 0
      %1328 = vmatprep.subr.bf16.mxu0 0
      %1329 = vmatpush1.bf16.xpose.msra.mxu0 0
      %1330 = vmatprep.subr.bf16.mxu0 0
      %1331 = vmatpush1.bf16.xpose.msra.mxu0 0
      %1332 = vmatprep.subr.bf16.mxu0 0
      %1333 = vmatpush1.bf16.xpose.msra.mxu0 0
      %1334 = vmatprep.subr.bf16.mxu0 0
      %1335 = vmatpush1.bf16.xpose.msra.mxu0 0
      %1336 = vmatprep.subr.bf16.mxu0 0
      %1337 = vmatpush1.bf16.xpose.msra.mxu0 0
      %1338 = vmatprep.subr.bf16.mxu0 0
      %1339 = vmatpush1.bf16.xpose.msra.mxu0 0
      %1340 = vmatprep.subr.bf16.mxu0 0
      %1341 = vmatpush1.bf16.xpose.msra.mxu0 0
      %1342 = vmatprep.mubr.bf16.mxu0 0
      %1343 = vmatmul.mubr.bf16.gmra.mrb[0].mxu0 %v1305
      %v1344 = vpop.f32.mrb[0].mxu0
      %v1345 = vadd.f32 %v1298, %v1344
      %v1346 = vpop.f32.mrb[0].mxu0
      %v1347 = vpop.f32.mrb[0].mxu0
      %v1348 = vpop.f32.mrb[0].mxu0
      %1349 = vdwg.mxu0
      %v1351 = vsel %vm1303, %v1275, 0
      %v1354 = vsel %vm1303, %v1300, 0
      %1356 = vmatprep.subr.bf16.mxu0 0
      %1357 = vmatpush1.bf16.xpose.msra.mxu0 %v1354
      %1358 = vmatprep.subr.bf16.mxu0 0
      %1359 = vmatpush1.bf16.xpose.msra.mxu0 0
      %1360 = vmatprep.subr.bf16.mxu0 0
      %1361 = vmatpush1.bf16.xpose.msra.mxu0 0
      %1362 = vmatprep.subr.bf16.mxu0 0
      %1363 = vmatpush1.bf16.xpose.msra.mxu0 0
      %1364 = vmatprep.subr.bf16.mxu0 0
      %1365 = vmatpush1.bf16.xpose.msra.mxu0 0
      %1366 = vmatprep.subr.bf16.mxu0 0
      %1367 = vmatpush1.bf16.xpose.msra.mxu0 0
      %1368 = vmatprep.subr.bf16.mxu0 0
      %1369 = vmatpush1.bf16.xpose.msra.mxu0 0
      %1370 = vmatprep.subr.bf16.mxu0 0
      %1371 = vmatpush1.bf16.xpose.msra.mxu0 0
      %1372 = vmatprep.subr.bf16.mxu0 0
      %1373 = vmatpush1.bf16.xpose.msra.mxu0 0
      %1374 = vmatprep.subr.bf16.mxu0 0
      %1375 = vmatpush1.bf16.xpose.msra.mxu0 0
      %1376 = vmatprep.subr.bf16.mxu0 0
      %1377 = vmatpush1.bf16.xpose.msra.mxu0 0
      %1378 = vmatprep.subr.bf16.mxu0 0
      %1379 = vmatpush1.bf16.xpose.msra.mxu0 0
      %1380 = vmatprep.subr.bf16.mxu0 0
      %1381 = vmatpush1.bf16.xpose.msra.mxu0 0
      %1382 = vmatprep.subr.bf16.mxu0 0
      %1383 = vmatpush1.bf16.xpose.msra.mxu0 0
      %1384 = vmatprep.subr.bf16.mxu0 0
      %1385 = vmatpush1.bf16.xpose.msra.mxu0 0
      %1386 = vmatprep.subr.bf16.mxu0 0
      %1387 = vmatpush1.bf16.xpose.msra.mxu0 0
      %1388 = vmatprep.mubr.bf16.mxu0 0
      %1389 = vmatmul.mubr.bf16.gmra.mrb[0].mxu0 %v1351
      %v1390 = vpop.f32.mrb[0].mxu0
      %v1391 = vadd.f32 %v1298, %v1390
      %v1392 = vpop.f32.mrb[0].mxu0
      %v1393 = vpop.f32.mrb[0].mxu0
      %v1394 = vpop.f32.mrb[0].mxu0
      %1395 = vdwg.mxu0
      %v1397 = vsel %vm1303, %v1278, 0
      %v1400 = vsel %vm1303, %v1301, 0
      %1402 = vmatprep.subr.bf16.mxu0 0
      %1403 = vmatpush1.bf16.xpose.msra.mxu0 %v1400
      %1404 = vmatprep.subr.bf16.mxu0 0
      %1405 = vmatpush1.bf16.xpose.msra.mxu0 0
      %1406 = vmatprep.subr.bf16.mxu0 0
      %1407 = vmatpush1.bf16.xpose.msra.mxu0 0
      %1408 = vmatprep.subr.bf16.mxu0 0
      %1409 = vmatpush1.bf16.xpose.msra.mxu0 0
      %1410 = vmatprep.subr.bf16.mxu0 0
      %1411 = vmatpush1.bf16.xpose.msra.mxu0 0
      %1412 = vmatprep.subr.bf16.mxu0 0
      %1413 = vmatpush1.bf16.xpose.msra.mxu0 0
      %1414 = vmatprep.subr.bf16.mxu0 0
      %1415 = vmatpush1.bf16.xpose.msra.mxu0 0
      %1416 = vmatprep.subr.bf16.mxu0 0
      %1417 = vmatpush1.bf16.xpose.msra.mxu0 0
      %1418 = vmatprep.subr.bf16.mxu0 0
      %1419 = vmatpush1.bf16.xpose.msra.mxu0 0
      %1420 = vmatprep.subr.bf16.mxu0 0
      %1421 = vmatpush1.bf16.xpose.msra.mxu0 0
      %1422 = vmatprep.subr.bf16.mxu0 0
      %1423 = vmatpush1.bf16.xpose.msra.mxu0 0
      %1424 = vmatprep.subr.bf16.mxu0 0
      %1425 = vmatpush1.bf16.xpose.msra.mxu0 0
      %1426 = vmatprep.subr.bf16.mxu0 0
      %1427 = vmatpush1.bf16.xpose.msra.mxu0 0
      %1428 = vmatprep.subr.bf16.mxu0 0
      %1429 = vmatpush1.bf16.xpose.msra.mxu0 0
      %1430 = vmatprep.subr.bf16.mxu0 0
      %1431 = vmatpush1.bf16.xpose.msra.mxu0 0
      %1432 = vmatprep.subr.bf16.mxu0 0
      %1433 = vmatpush1.bf16.xpose.msra.mxu0 0
      %1434 = vmatprep.mubr.bf16.mxu0 0
      %1435 = vmatmul.mubr.bf16.gmra.mrb[0].mxu0 %v1397
      %v1436 = vpop.f32.mrb[0].mxu0
      %v1437 = vadd.f32 %v1298, %v1436
      %v1438 = vpop.f32.mrb[0].mxu0
      %v1439 = vpop.f32.mrb[0].mxu0
      %v1440 = vpop.f32.mrb[0].mxu0
      %1441 = vdwg.mxu0
      %v1443 = vsel %vm1303, %v1281, 0
      %v1446 = vsel %vm1303, %v1302, 0
      %1448 = vmatprep.subr.bf16.mxu0 0
      %1449 = vmatpush1.bf16.xpose.msra.mxu0 %v1446
      %1450 = vmatprep.subr.bf16.mxu0 0
      %1451 = vmatpush1.bf16.xpose.msra.mxu0 0
      %1452 = vmatprep.subr.bf16.mxu0 0
      %1453 = vmatpush1.bf16.xpose.msra.mxu0 0
      %1454 = vmatprep.subr.bf16.mxu0 0
      %1455 = vmatpush1.bf16.xpose.msra.mxu0 0
      %1456 = vmatprep.subr.bf16.mxu0 0
      %1457 = vmatpush1.bf16.xpose.msra.mxu0 0
      %1458 = vmatprep.subr.bf16.mxu0 0
      %1459 = vmatpush1.bf16.xpose.msra.mxu0 0
      %1460 = vmatprep.subr.bf16.mxu0 0
      %1461 = vmatpush1.bf16.xpose.msra.mxu0 0
      %1462 = vmatprep.subr.bf16.mxu0 0
      %1463 = vmatpush1.bf16.xpose.msra.mxu0 0
      %1464 = vmatprep.subr.bf16.mxu0 0
      %1465 = vmatpush1.bf16.xpose.msra.mxu0 0
      %1466 = vmatprep.subr.bf16.mxu0 0
      %1467 = vmatpush1.bf16.xpose.msra.mxu0 0
      %1468 = vmatprep.subr.bf16.mxu0 0
      %1469 = vmatpush1.bf16.xpose.msra.mxu0 0
      %1470 = vmatprep.subr.bf16.mxu0 0
      %1471 = vmatpush1.bf16.xpose.msra.mxu0 0
      %1472 = vmatprep.subr.bf16.mxu0 0
      %1473 = vmatpush1.bf16.xpose.msra.mxu0 0
      %1474 = vmatprep.subr.bf16.mxu0 0
      %1475 = vmatpush1.bf16.xpose.msra.mxu0 0
      %1476 = vmatprep.subr.bf16.mxu0 0
      %1477 = vmatpush1.bf16.xpose.msra.mxu0 0
      %1478 = vmatprep.subr.bf16.mxu0 0
      %1479 = vmatpush1.bf16.xpose.msra.mxu0 0
      %1480 = vmatprep.mubr.bf16.mxu0 0
      %1481 = vmatmul.mubr.bf16.gmra.mrb[0].mxu0 %v1443
      %v1482 = vpop.f32.mrb[0].mxu0
      %v1483 = vadd.f32 %v1298, %v1482
      %v1484 = vpop.f32.mrb[0].mxu0
      %v1485 = vpop.f32.mrb[0].mxu0
      %v1486 = vpop.f32.mrb[0].mxu0
      %1487 = vdwg.mxu0
      %v1488 = vsel %vm1303, %v1345, -inf
      %1489 = vmax.xlane.f32.xlu0 %v1488
      %v1490 = vpop.xlane.xlu0 %1489
      %v1491 = vsel %vm1303, %v1391, -inf
      %1492 = vmax.xlane.f32.xlu0 %v1491
      %v1493 = vpop.xlane.xlu0 %1492
      %v1494 = vsel %vm1303, %v1437, -inf
      %1495 = vmax.xlane.f32.xlu0 %v1494
      %v1496 = vpop.xlane.xlu0 %1495
      %v1497 = vsel %vm1303, %v1483, -inf
      %1498 = vmax.xlane.f32.xlu0 %v1497
      %v1499 = vpop.xlane.xlu0 %1498
      %v1500 = vsub.f32 %v1345, %v1490
      %v1501 = vsub.f32 %v1391, %v1493
      %v1502 = vsub.f32 %v1437, %v1496
      %v1503 = vsub.f32 %v1483, %v1499
      %v1504 = vmul.f32 %v1500, 1.442695
      %v1505 = vpow.pop %v1504
      %v1506 = vmul.f32 %v1501, 1.442695
      %v1507 = vpow.pop %v1506
      %v1508 = vmul.f32 %v1502, 1.442695
      %v1509 = vpow.pop %v1508
      %v1510 = vmul.f32 %v1503, 1.442695
      %v1511 = vpow.pop %v1510
      %v1512 = vsel %vm1303, %v1505, 0.0
      %1513 = vadd.xlane.f32.xlu0 %v1512
      %v1514 = vpop.xlane.xlu0 %1513
      %v1515 = vsel %vm1303, %v1507, 0.0
      %1516 = vadd.xlane.f32.xlu0 %v1515
      %v1517 = vpop.xlane.xlu0 %1516
      %v1518 = vsel %vm1303, %v1509, 0.0
      %1519 = vadd.xlane.f32.xlu0 %v1518
      %v1520 = vpop.xlane.xlu0 %1519
      %v1521 = vsel %vm1303, %v1511, 0.0
      %1522 = vadd.xlane.f32.xlu0 %v1521
      %v1523 = vpop.xlane.xlu0 %1522
      %v1524 = vrcp.pop %v1514
      %v1525 = vrcp.pop %v1517
      %v1526 = vrcp.pop %v1520
      %v1527 = vrcp.pop %v1523
      %v1528 = vmul.f32 %v1505, %v1524
      %v1529 = vmul.f32 %v1507, %v1525
      %v1530 = vmul.f32 %v1509, %v1526
      %v1531 = vmul.f32 %v1511, %v1527
      %v1532 = vpack.c.bf16 %v1528, %v1528
      %v1533 = vpack.c.bf16 %v1529, %v1529
      %v1534 = vpack.c.bf16 %v1530, %v1530
      %v1535 = vpack.c.bf16 %v1531, %v1531
      %v1536 = vld [vmem:[#allocation3] sm:$0xf]
      %v1537 = vld [vmem:[#allocation3 + $0x4] sm:$0xf]
      %v1538 = vld [vmem:[#allocation3 + $0x8] sm:$0xf]
      %v1539 = vld [vmem:[#allocation3 + $0xc] sm:$0xf]
      %v1541 = vsel %vm1303, %v1532, 0
      %vm1543 = vcmask 1043456
      %v1545 = vsel %vm1543, %v1536, 0
      %1547 = vmatprep.subr.bf16.mxu0 0
      %1548 = vmatpush1.bf16.msra.mxu0 %v1545
      %1549 = vmatprep.subr.bf16.mxu0 0
      %1550 = vmatpush1.bf16.msra.mxu0 0
      %1551 = vmatprep.subr.bf16.mxu0 0
      %1552 = vmatpush1.bf16.msra.mxu0 0
      %1553 = vmatprep.subr.bf16.mxu0 0
      %1554 = vmatpush1.bf16.msra.mxu0 0
      %1555 = vmatprep.subr.bf16.mxu0 0
      %1556 = vmatpush1.bf16.msra.mxu0 0
      %1557 = vmatprep.subr.bf16.mxu0 0
      %1558 = vmatpush1.bf16.msra.mxu0 0
      %1559 = vmatprep.subr.bf16.mxu0 0
      %1560 = vmatpush1.bf16.msra.mxu0 0
      %1561 = vmatprep.subr.bf16.mxu0 0
      %1562 = vmatpush1.bf16.msra.mxu0 0
      %1563 = vmatprep.subr.bf16.mxu0 0
      %1564 = vmatpush1.bf16.msra.mxu0 0
      %1565 = vmatprep.subr.bf16.mxu0 0
      %1566 = vmatpush1.bf16.msra.mxu0 0
      %1567 = vmatprep.subr.bf16.mxu0 0
      %1568 = vmatpush1.bf16.msra.mxu0 0
      %1569 = vmatprep.subr.bf16.mxu0 0
      %1570 = vmatpush1.bf16.msra.mxu0 0
      %1571 = vmatprep.subr.bf16.mxu0 0
      %1572 = vmatpush1.bf16.msra.mxu0 0
      %1573 = vmatprep.subr.bf16.mxu0 0
      %1574 = vmatpush1.bf16.msra.mxu0 0
      %1575 = vmatprep.subr.bf16.mxu0 0
      %1576 = vmatpush1.bf16.msra.mxu0 0
      %1577 = vmatprep.subr.bf16.mxu0 0
      %1578 = vmatpush1.bf16.msra.mxu0 0
      %1579 = vmatprep.mubr.bf16.mxu0 0
      %1580 = vmatmul.mubr.bf16.gmra.mrb[0].mxu0 %v1541
      %v1581 = vpop.f32.mrb[0].mxu0
      %v1582 = vadd.f32 0.0, %v1581
      %v1583 = vpop.f32.mrb[0].mxu0
      %v1584 = vpop.f32.mrb[0].mxu0
      %v1585 = vpop.f32.mrb[0].mxu0
      %1586 = vdwg.mxu0
      %v1588 = vsel %vm1303, %v1533, 0
      %v1591 = vsel %vm1543, %v1537, 0
      %1593 = vmatprep.subr.bf16.mxu0 0
      %1594 = vmatpush1.bf16.msra.mxu0 %v1591
      %1595 = vmatprep.subr.bf16.mxu0 0
      %1596 = vmatpush1.bf16.msra.mxu0 0
      %1597 = vmatprep.subr.bf16.mxu0 0
      %1598 = vmatpush1.bf16.msra.mxu0 0
      %1599 = vmatprep.subr.bf16.mxu0 0
      %1600 = vmatpush1.bf16.msra.mxu0 0
      %1601 = vmatprep.subr.bf16.mxu0 0
      %1602 = vmatpush1.bf16.msra.mxu0 0
      %1603 = vmatprep.subr.bf16.mxu0 0
      %1604 = vmatpush1.bf16.msra.mxu0 0
      %1605 = vmatprep.subr.bf16.mxu0 0
      %1606 = vmatpush1.bf16.msra.mxu0 0
      %1607 = vmatprep.subr.bf16.mxu0 0
      %1608 = vmatpush1.bf16.msra.mxu0 0
      %1609 = vmatprep.subr.bf16.mxu0 0
      %1610 = vmatpush1.bf16.msra.mxu0 0
      %1611 = vmatprep.subr.bf16.mxu0 0
      %1612 = vmatpush1.bf16.msra.mxu0 0
      %1613 = vmatprep.subr.bf16.mxu0 0
      %1614 = vmatpush1.bf16.msra.mxu0 0
      %1615 = vmatprep.subr.bf16.mxu0 0
      %1616 = vmatpush1.bf16.msra.mxu0 0
      %1617 = vmatprep.subr.bf16.mxu0 0
      %1618 = vmatpush1.bf16.msra.mxu0 0
      %1619 = vmatprep.subr.bf16.mxu0 0
      %1620 = vmatpush1.bf16.msra.mxu0 0
      %1621 = vmatprep.subr.bf16.mxu0 0
      %1622 = vmatpush1.bf16.msra.mxu0 0
      %1623 = vmatprep.subr.bf16.mxu0 0
      %1624 = vmatpush1.bf16.msra.mxu0 0
      %1625 = vmatprep.mubr.bf16.mxu0 0
      %1626 = vmatmul.mubr.bf16.gmra.mrb[0].mxu0 %v1588
      %v1627 = vpop.f32.mrb[0].mxu0
      %v1628 = vadd.f32 0.0, %v1627
      %v1629 = vpop.f32.mrb[0].mxu0
      %v1630 = vpop.f32.mrb[0].mxu0
      %v1631 = vpop.f32.mrb[0].mxu0
      %1632 = vdwg.mxu0
      %v1634 = vsel %vm1303, %v1534, 0
      %v1637 = vsel %vm1543, %v1538, 0
      %1639 = vmatprep.subr.bf16.mxu0 0
      %1640 = vmatpush1.bf16.msra.mxu0 %v1637
      %1641 = vmatprep.subr.bf16.mxu0 0
      %1642 = vmatpush1.bf16.msra.mxu0 0
      %1643 = vmatprep.subr.bf16.mxu0 0
      %1644 = vmatpush1.bf16.msra.mxu0 0
      %1645 = vmatprep.subr.bf16.mxu0 0
      %1646 = vmatpush1.bf16.msra.mxu0 0
      %1647 = vmatprep.subr.bf16.mxu0 0
      %1648 = vmatpush1.bf16.msra.mxu0 0
      %1649 = vmatprep.subr.bf16.mxu0 0
      %1650 = vmatpush1.bf16.msra.mxu0 0
      %1651 = vmatprep.subr.bf16.mxu0 0
      %1652 = vmatpush1.bf16.msra.mxu0 0
      %1653 = vmatprep.subr.bf16.mxu0 0
      %1654 = vmatpush1.bf16.msra.mxu0 0
      %1655 = vmatprep.subr.bf16.mxu0 0
      %1656 = vmatpush1.bf16.msra.mxu0 0
      %1657 = vmatprep.subr.bf16.mxu0 0
      %1658 = vmatpush1.bf16.msra.mxu0 0
      %1659 = vmatprep.subr.bf16.mxu0 0
      %1660 = vmatpush1.bf16.msra.mxu0 0
      %1661 = vmatprep.subr.bf16.mxu0 0
      %1662 = vmatpush1.bf16.msra.mxu0 0
      %1663 = vmatprep.subr.bf16.mxu0 0
      %1664 = vmatpush1.bf16.msra.mxu0 0
      %1665 = vmatprep.subr.bf16.mxu0 0
      %1666 = vmatpush1.bf16.msra.mxu0 0
      %1667 = vmatprep.subr.bf16.mxu0 0
      %1668 = vmatpush1.bf16.msra.mxu0 0
      %1669 = vmatprep.subr.bf16.mxu0 0
      %1670 = vmatpush1.bf16.msra.mxu0 0
      %1671 = vmatprep.mubr.bf16.mxu0 0
      %1672 = vmatmul.mubr.bf16.gmra.mrb[0].mxu0 %v1634
      %v1673 = vpop.f32.mrb[0].mxu0
      %v1674 = vadd.f32 0.0, %v1673
      %v1675 = vpop.f32.mrb[0].mxu0
      %v1676 = vpop.f32.mrb[0].mxu0
      %v1677 = vpop.f32.mrb[0].mxu0
      %1678 = vdwg.mxu0
      %v1680 = vsel %vm1303, %v1535, 0
      %v1683 = vsel %vm1543, %v1539, 0
      %1685 = vmatprep.subr.bf16.mxu0 0
      %1686 = vmatpush1.bf16.msra.mxu0 %v1683
      %1687 = vmatprep.subr.bf16.mxu0 0
      %1688 = vmatpush1.bf16.msra.mxu0 0
      %1689 = vmatprep.subr.bf16.mxu0 0
      %1690 = vmatpush1.bf16.msra.mxu0 0
      %1691 = vmatprep.subr.bf16.mxu0 0
      %1692 = vmatpush1.bf16.msra.mxu0 0
      %1693 = vmatprep.subr.bf16.mxu0 0
      %1694 = vmatpush1.bf16.msra.mxu0 0
      %1695 = vmatprep.subr.bf16.mxu0 0
      %1696 = vmatpush1.bf16.msra.mxu0 0
      %1697 = vmatprep.subr.bf16.mxu0 0
      %1698 = vmatpush1.bf16.msra.mxu0 0
      %1699 = vmatprep.subr.bf16.mxu0 0
      %1700 = vmatpush1.bf16.msra.mxu0 0
      %1701 = vmatprep.subr.bf16.mxu0 0
      %1702 = vmatpush1.bf16.msra.mxu0 0
      %1703 = vmatprep.subr.bf16.mxu0 0
      %1704 = vmatpush1.bf16.msra.mxu0 0
      %1705 = vmatprep.subr.bf16.mxu0 0
      %1706 = vmatpush1.bf16.msra.mxu0 0
      %1707 = vmatprep.subr.bf16.mxu0 0
      %1708 = vmatpush1.bf16.msra.mxu0 0
      %1709 = vmatprep.subr.bf16.mxu0 0
      %1710 = vmatpush1.bf16.msra.mxu0 0
      %1711 = vmatprep.subr.bf16.mxu0 0
      %1712 = vmatpush1.bf16.msra.mxu0 0
      %1713 = vmatprep.subr.bf16.mxu0 0
      %1714 = vmatpush1.bf16.msra.mxu0 0
      %1715 = vmatprep.subr.bf16.mxu0 0
      %1716 = vmatpush1.bf16.msra.mxu0 0
      %1717 = vmatprep.mubr.bf16.mxu0 0
      %1718 = vmatmul.mubr.bf16.gmra.mrb[0].mxu0 %v1680
      %v1719 = vpop.f32.mrb[0].mxu0
      %v1720 = vadd.f32 0.0, %v1719
      %v1721 = vpop.f32.mrb[0].mxu0
      %v1722 = vpop.f32.mrb[0].mxu0
      %v1723 = vpop.f32.mrb[0].mxu0
      %1724 = vdwg.mxu0
      %v1725 = vpack.c.bf16 %v1582, %v1582
      %v1727 = vunpack.c.l.s4 1983009808
      %v1728 = vunpack.c.0.s8 %v1727
      %v1729 = vlaneseq
      %v1730 = vshrl.u32 %v1729, 7
      %v1731 = vsub.s32 %v1728, %v1730
      %v1732 = vrot.slane %v1725, %v1731
      %v1733 = vpack.c.bf16 %v1674, %v1674
      %v1735 = vunpack.c.l.s4 1983009808
      %v1736 = vunpack.c.0.s8 %v1735
      %v1737 = vlaneseq
      %v1738 = vshrl.u32 %v1737, 7
      %v1739 = vsub.s32 %v1736, %v1738
      %v1740 = vrot.slane %v1733, %v1739
      %v1741 = vcombine.low %v1732, %v1740
      %v1742 = vcombine.high %v1732, %v1740
      %v1744 = vunpack.c.l.s4 1934713408
      %v1745 = vunpack.c.0.s8 %v1744
      %v1746 = vlaneseq
      %v1747 = vshrl.u32 %v1746, 7
      %v1748 = vsub.s32 %v1745, %v1747
      %v1749 = vrot.slane %v1741, %v1748
      %v1751 = vunpack.c.l.s4 1934713408
      %v1752 = vunpack.c.0.s8 %v1751
      %v1753 = vlaneseq
      %v1754 = vshrl.u32 %v1753, 7
      %v1755 = vsub.s32 %v1752, %v1754
      %v1756 = vrot.slane %v1742, %v1755
      %v1757 = vcombine.high %v1749, 0
      %v1758 = vcombine.high %v1756, 0
      %v1759 = vpack.c.bf16 %v1628, %v1628
      %v1761 = vunpack.c.l.s4 1983009808
      %v1762 = vunpack.c.0.s8 %v1761
      %v1763 = vlaneseq
      %v1764 = vshrl.u32 %v1763, 7
      %v1765 = vsub.s32 %v1762, %v1764
      %v1766 = vrot.slane %v1759, %v1765
      %v1767 = vpack.c.bf16 %v1720, %v1720
      %v1769 = vunpack.c.l.s4 1983009808
      %v1770 = vunpack.c.0.s8 %v1769
      %v1771 = vlaneseq
      %v1772 = vshrl.u32 %v1771, 7
      %v1773 = vsub.s32 %v1770, %v1772
      %v1774 = vrot.slane %v1767, %v1773
      %v1775 = vcombine.low %v1766, %v1774
      %v1776 = vcombine.high %v1766, %v1774
      %v1778 = vunpack.c.l.s4 1934713408
      %v1779 = vunpack.c.0.s8 %v1778
      %v1780 = vlaneseq
      %v1781 = vshrl.u32 %v1780, 7
      %v1782 = vsub.s32 %v1779, %v1781
      %v1783 = vrot.slane %v1775, %v1782
      %v1785 = vunpack.c.l.s4 1934713408
      %v1786 = vunpack.c.0.s8 %v1785
      %v1787 = vlaneseq
      %v1788 = vshrl.u32 %v1787, 7
      %v1789 = vsub.s32 %v1786, %v1788
      %v1790 = vrot.slane %v1776, %v1789
      %v1791 = vcombine.high %v1783, 0
      %v1792 = vcombine.high %v1790, 0
      %v1795 = vpack.i.b16 %v1783, %v1749
      %v1797 = vshrl.u32 %v1749, 16
      %v1798 = vshrl.u32 %v1783, 16
      %v1799 = vpack.i.b16 %v1798, %v1797
      %v1803 = vpack.i.b16 %v1791, %v1757
      %v1805 = vshrl.u32 %v1757, 16
      %v1806 = vshrl.u32 %v1791, 16
      %v1807 = vpack.i.b16 %v1806, %v1805
      %v1811 = vpack.i.b16 %v1790, %v1756
      %v1813 = vshrl.u32 %v1756, 16
      %v1814 = vshrl.u32 %v1790, 16
      %v1815 = vpack.i.b16 %v1814, %v1813
      %v1819 = vpack.i.b16 %v1792, %v1758
      %v1821 = vshrl.u32 %v1758, 16
      %v1822 = vshrl.u32 %v1792, 16
      %v1823 = vpack.i.b16 %v1822, %v1821
      %v1825 = vcombine.low %v1795, %v1811
      %v1827 = vunpack.c.l.s4 1983009808
      %v1828 = vunpack.c.0.s8 %v1827
      %v1829 = vlaneseq
      %v1830 = vshrl.u32 %v1829, 7
      %v1831 = vsub.s32 %v1828, %v1830
      %v1832 = vrot.slane %v1825, %v1831
      %v1833 = vcombine.low %v1803, %v1819
      %v1835 = vunpack.c.l.s4 1983009808
      %v1836 = vunpack.c.0.s8 %v1835
      %v1837 = vlaneseq
      %v1838 = vshrl.u32 %v1837, 7
      %v1839 = vsub.s32 %v1836, %v1838
      %v1840 = vrot.slane %v1833, %v1839
      %v1841 = vcombine.low %v1832, %v1840
      %v1843 = vunpack.c.l.s4 1934713408
      %v1844 = vunpack.c.0.s8 %v1843
      %v1845 = vlaneseq
      %v1846 = vshrl.u32 %v1845, 7
      %v1847 = vsub.s32 %v1844, %v1846
      %v1848 = vrot.slane %v1841, %v1847
      %v1849 = vcombine.high %v1848, 0
      %v1850 = vcombine.low %v1799, %v1815
      %v1852 = vunpack.c.l.s4 1983009808
      %v1853 = vunpack.c.0.s8 %v1852
      %v1854 = vlaneseq
      %v1855 = vshrl.u32 %v1854, 7
      %v1856 = vsub.s32 %v1853, %v1855
      %v1857 = vrot.slane %v1850, %v1856
      %v1858 = vcombine.low %v1807, %v1823
      %v1860 = vunpack.c.l.s4 1983009808
      %v1861 = vunpack.c.0.s8 %v1860
      %v1862 = vlaneseq
      %v1863 = vshrl.u32 %v1862, 7
      %v1864 = vsub.s32 %v1861, %v1863
      %v1865 = vrot.slane %v1858, %v1864
      %v1866 = vcombine.low %v1857, %v1865
      %v1868 = vunpack.c.l.s4 1934713408
      %v1869 = vunpack.c.0.s8 %v1868
      %v1870 = vlaneseq
      %v1871 = vshrl.u32 %v1870, 7
      %v1872 = vsub.s32 %v1869, %v1871
      %v1873 = vrot.slane %v1866, %v1872
      %v1874 = vcombine.high %v1873, 0
      %v1877 = vpack.i.b16 %v1873, %v1848
      %v1878 = vshrl.u32 %v1848, 16
      %v1879 = vshrl.u32 %v1873, 16
      %v1880 = vpack.i.b16 %v1879, %v1878
      %v1883 = vpack.i.b16 %v1874, %v1849
      %v1884 = vshrl.u32 %v1849, 16
      %v1885 = vshrl.u32 %v1874, 16
      %v1886 = vpack.i.b16 %v1885, %v1884
      %1887 = vrot.lane.b32.xlu0 %v1880, 8
      %v1888 = vpop.permute.xlu0 %1887
      %1889 = vrot.lane.b32.xlu0 %v1883, 16
      %v1890 = vpop.permute.xlu0 %1889
      %1891 = vrot.lane.b32.xlu0 %v1886, 24
      %v1892 = vpop.permute.xlu0 %1891
      %v1895 = vsel %vm1303, %v1877, %v1888
      %vm1896 = vcmask 130048
      %v1898 = vsel %vm1896, %v1895, %v1890
      %vm1899 = vcmask 195584
      %v1901 = vsel %vm1899, %v1898, %v1892
      %v1902 = vld [vmem:[%s10] sm:$0xf]
      %v1903 = vld [vmem:[%s10 + $0x4] sm:$0xf]
      %v1904 = vld [vmem:[%s10 + $0x8] sm:$0xf]
      %v1905 = vld [vmem:[%s10 + $0xc] sm:$0xf]
      %v1906 = vld [vmem:[%s11] sm:$0x1]
      %v1908 = vlaneseq
      %v1909 = vshrl.u32 %v1908, 7
      %v1910 = vsub.s32 0, %v1909
      %v1911 = vrot.slane %v1906, %v1910
      %v1917 = vunpack.c.l.b16 %v1902
      %v1918 = vunpack.c.l.b16 %v1903
      %v1919 = vunpack.c.l.b16 %v1904
      %v1920 = vunpack.c.l.b16 %v1905
      %v1921 = vpack.c.b16 %v1918, %v1917
      %v1922 = vpack.c.b16 %v1920, %v1919
      %v1925 = vsel %vm1068, %v1901, 0
      %1927 = vmatprep.subr.bf16.mxu0 0
      %1928 = vmatpush1.bf16.msra.mxu0 %v1921
      %1929 = vmatprep.subr.bf16.mxu0 0
      %1930 = vmatpush1.bf16.msra.mxu0 %v1922
      %1931 = vmatprep.subr.bf16.mxu0 0
      %1932 = vmatpush1.bf16.msra.mxu0 0
      %1933 = vmatprep.subr.bf16.mxu0 0
      %1934 = vmatpush1.bf16.msra.mxu0 0
      %1935 = vmatprep.subr.bf16.mxu0 0
      %1936 = vmatpush1.bf16.msra.mxu0 0
      %1937 = vmatprep.subr.bf16.mxu0 0
      %1938 = vmatpush1.bf16.msra.mxu0 0
      %1939 = vmatprep.subr.bf16.mxu0 0
      %1940 = vmatpush1.bf16.msra.mxu0 0
      %1941 = vmatprep.subr.bf16.mxu0 0
      %1942 = vmatpush1.bf16.msra.mxu0 0
      %1943 = vmatprep.subr.bf16.mxu0 0
      %1944 = vmatpush1.bf16.msra.mxu0 0
      %1945 = vmatprep.subr.bf16.mxu0 0
      %1946 = vmatpush1.bf16.msra.mxu0 0
      %1947 = vmatprep.subr.bf16.mxu0 0
      %1948 = vmatpush1.bf16.msra.mxu0 0
      %1949 = vmatprep.subr.bf16.mxu0 0
      %1950 = vmatpush1.bf16.msra.mxu0 0
      %1951 = vmatprep.subr.bf16.mxu0 0
      %1952 = vmatpush1.bf16.msra.mxu0 0
      %1953 = vmatprep.subr.bf16.mxu0 0
      %1954 = vmatpush1.bf16.msra.mxu0 0
      %1955 = vmatprep.subr.bf16.mxu0 0
      %1956 = vmatpush1.bf16.msra.mxu0 0
      %1957 = vmatprep.subr.bf16.mxu0 0
      %1958 = vmatpush1.bf16.msra.mxu0 0
      %1959 = vmatprep.mubr.bf16.mxu0 0
      %1960 = vmatmul.mubr.bf16.gmra.mrb[0].mxu0 %v1925
      %v1961 = vpop.f32.mrb[0].mxu0
      %v1962 = vadd.f32 %v1911, %v1961
      %v1963 = vpop.f32.mrb[0].mxu0
      %v1964 = vpop.f32.mrb[0].mxu0
      %v1965 = vpop.f32.mrb[0].mxu0
      %1966 = vdwg.mxu0
      %v1967 = vunpack.c.l.bf16 %v1044
      %v1968 = vadd.f32 %v1967, %v1962
      %v1969 = vsel %vm1068, %v1968, 0.0
      %1970 = vadd.xlane.f32.xlu0 %v1969
      %v1971 = vpop.xlane.xlu0 %1970
      %v1972 = vrcp.pop 32.0
      %v1973 = vmul.f32 %v1971, %v1972
      %v1974 = vsub.f32 %v1968, %v1973
      %v1975 = vmul.f32 %v1974, %v1974
      %v1976 = vsel %vm1068, %v1975, 0.0
      %1977 = vadd.xlane.f32.xlu0 %v1976
      %v1978 = vpop.xlane.xlu0 %1977
      %v1979 = vmul.f32 %v1978, %v1972
      %v1980 = vadd.f32 %v1979, 1e-05
      %v1981 = vrsqrt.pop %v1980
      %v1982 = vmul.f32 %v1974, %v1981
      %v1983 = vld [vmem:[%s12] sm:$0x1]
      %v1985 = vlaneseq
      %v1986 = vshrl.u32 %v1985, 7
      %v1987 = vsub.s32 0, %v1986
      %v1988 = vrot.slane %v1983, %v1987
      %v1990 = vmul.f32 %v1982, %v1988
      %v1991 = vld [vmem:[%s13] sm:$0x1]
      %v1993 = vlaneseq
      %v1994 = vshrl.u32 %v1993, 7
      %v1995 = vsub.s32 0, %v1994
      %v1996 = vrot.slane %v1991, %v1995
      %v1998 = vadd.f32 %v1990, %v1996
      %v1999 = vpack.c.bf16 %v1998, %v1998
      %vm2000 = vcmask 257024
      %2001 = vst.msk [vmem:[%s552] sm:$0xf] %vm2000, %v1999
      %p2002 = scmp.lt.s32.totalorder %s29, 1
      %s2003 = scalar_select %p2002, %s29, 1
      %p2004 = scmp.lt.s32.totalorder %s30, 0
      %s2005 = scalar_select %p2004, %s30, 0
      %s2006 = sadd.s32 %s2005, %s2003
      %s2007 = smul.addr %s2006, 4
      %s2008 = scalar_lea.vmem %s14, %s2007
      // Predicated region
      $region81: #{transformer_forward.11} parent=75 // pred_check
        %p2009 = pneg %p375
      $region82: #{transformer_forward.11} parent=75 // pred_check_branch
        %2011 = sbr.rel (%p2009) target = $region84
      $region83: #{transformer_forward.11} parent=75 // pred_region
        _
      $region84: #{transformer_forward.11} parent=75 // pred_fallthru
        _
    $region76: #{transformer_forward.11} parent=5 // pred_fallthru
      _
    %p2012 = scmp.le.s32.totalorder 2, %s20
    // Predicated region
    $region85: #{transformer_forward.11} parent=5 // pred_check
      %p2013 = pneg %p2012
    $region86: #{transformer_forward.11} parent=5 // pred_check_branch
      %2015 = sbr.rel (%p2013) target = $region88
    $region87: #{transformer_forward.11} parent=5 // pred_region
      %s2016 = ssub.s32 %s20, 2
      // Predicated region
      $region89: #{transformer_forward.11} parent=87 // pred_check
        %p2017 = pneg %p381
      $region90: #{transformer_forward.11} parent=87 // pred_check_branch
        %2019 = sbr.rel (%p2017) target = $region92
      $region91: #{transformer_forward.11} parent=87 // pred_region
        %p2020 = scmp.lt.s32.totalorder %s31, 1
        %s2021 = scalar_select %p2020, %s31, 1
        %p2022 = scmp.lt.s32.totalorder %s32, 0
        %s2023 = scalar_select %p2022, %s32, 0
        %s2024 = sadd.s32 %s2023, %s2021
        %s2025 = smul.addr %s2024, 4
        %s2026 = scalar_lea.vmem %s14, %s2025
      $region92: #{transformer_forward.11} parent=87 // pred_fallthru
        _
    $region88: #{transformer_forward.11} parent=5 // pred_fallthru
      _
  $region6: #{transformer_forward.11} parent=0 // loop_footer
    %s24 = sadd.s32 1, %s20
  $region7: #{transformer_forward.11} parent=0 // loop_footer_branch
    %19 = sbr.rel target = $region3
  $region8: #{transformer_forward.11} parent=0 // loop_exit
    _

// kernel: transformer_forward.15
$region0: #{transformer_forward.15}
  #allocation0 [shape = 'u32[]', space=smem, size = 0x4, offset = 0x4, fixed_abs, tag = 'smem constant byte address 0x4 - core index']
  #allocation1 [shape = 'u32[144,128]{1,0:T(1,128)}', space=vmem, size = 0x12000, scoped, tag = 'internal scratch']
  #allocation2 [shape = 'bf16[4,8,8]{2,1,0:T(8,128)(2,1)}', space=vmem, size = 0x2000, scoped, tag = 'scratch operand']
  #allocation3 [shape = 'bf16[4,8,8]{2,1,0:T(8,128)(2,1)}', space=vmem, size = 0x2000, scoped, tag = 'scratch operand']
  %s0 = inlined_call_operand.vmem [shape: bf16[2,8,32], index: 0, kind: input, shape index: {}, may-alias: {0,1}]
  %s1 = inlined_call_operand.vmem [shape: bf16[2,8,32], index: 1, kind: input, shape index: {}, may-alias: {0,1}]
  %s2 = inlined_call_operand.vmem [shape: s32[2,8,1], index: 2, kind: input, shape index: {}]
  %s3 = inlined_call_operand.vmem [shape: s32[2,1,8], index: 3, kind: input, shape index: {}]
  %s4 = inlined_call_operand.vmem [shape: bf16[32,32], index: 4, kind: input, shape index: {}]
  %s5 = inlined_call_operand.vmem [shape: f32[1,32], index: 5, kind: input, shape index: {}]
  %s6 = inlined_call_operand.vmem [shape: bf16[32,32], index: 6, kind: input, shape index: {}]
  %s7 = inlined_call_operand.vmem [shape: f32[1,32], index: 7, kind: input, shape index: {}]
  %s8 = inlined_call_operand.vmem [shape: bf16[32,32], index: 8, kind: input, shape index: {}]
  %s9 = inlined_call_operand.vmem [shape: f32[1,32], index: 9, kind: input, shape index: {}]
  %s10 = inlined_call_operand.vmem [shape: bf16[32,32], index: 10, kind: input, shape index: {}]
  %s11 = inlined_call_operand.vmem [shape: f32[1,32], index: 11, kind: input, shape index: {}]
  %s12 = inlined_call_operand.vmem [shape: f32[1,32], index: 12, kind: input, shape index: {}]
  %s13 = inlined_call_operand.vmem [shape: f32[1,32], index: 13, kind: input, shape index: {}]
  %s14 = inlined_call_operand.vmem [shape: bf16[2,8,32], index: 14, kind: output, shape index: {}]
  %s15 = sld [smem:[#allocation0]]
  $region93: #{transformer_forward.15} parent=0
    _
  %s17 = ssub.s32 1, %s15
  %s18 = scalar_select 0, %s17, %s15
  loop: start=0, step=1, limit=4
  $region2: #{transformer_forward.15} parent=0 // loop_pre_header
    _
  $region3: #{transformer_forward.15} parent=0 // loop_header
    %s20 = sphi 0, %s24
    %p21 = scmp.ge.s32.totalorder %s20, 4
    %s27 = sphi 0, %s39
    %s28 = sphi 0, %s35
    %s29 = sphi 0, %s27
    %s30 = sphi 0, %s28
    %s31 = sphi 0, %s29
    %s32 = sphi 0, %s30
    %s44 = sphi 0, %s46
    %s47 = sphi 0, %s44
    %s48 = sphi 0, %s47
    %s64 = sphi 0, %s48
    %s70 = sphi 0, %s72
    %s73 = sphi 0, %s70
    %s74 = sphi 0, %s73
    %s90 = sphi 0, %s74
    %s98 = sphi 0, %s100
    %s101 = sphi 0, %s98
    %s102 = sphi 0, %s101
    %s118 = sphi 0, %s102
    %s124 = sphi 0, %s126
    %s127 = sphi 0, %s124
    %s128 = sphi 0, %s127
    %s144 = sphi 0, %s128
    %s148 = sphi 0, %s148
    %s150 = sphi 0, %s148
    %s151 = sphi 0, %s150
    %s165 = sphi 0, %s151
    %s169 = sphi 0, %s169
    %s171 = sphi 0, %s169
    %s172 = sphi 0, %s171
    %s186 = sphi 0, %s172
    %s190 = sphi 0, %s190
    %s192 = sphi 0, %s190
    %s193 = sphi 0, %s192
    %s207 = sphi 0, %s193
    %s211 = sphi 0, %s211
    %s213 = sphi 0, %s211
    %s214 = sphi 0, %s213
    %s228 = sphi 0, %s214
    %s232 = sphi 0, %s232
    %s234 = sphi 0, %s232
    %s235 = sphi 0, %s234
    %s249 = sphi 0, %s235
    %s253 = sphi 0, %s253
    %s255 = sphi 0, %s253
    %s256 = sphi 0, %s255
    %s270 = sphi 0, %s256
    %s274 = sphi 0, %s274
    %s276 = sphi 0, %s274
    %s277 = sphi 0, %s276
    %s291 = sphi 0, %s277
    %s295 = sphi 0, %s295
    %s297 = sphi 0, %s295
    %s298 = sphi 0, %s297
    %s312 = sphi 0, %s298
    %s316 = sphi 0, %s316
    %s318 = sphi 0, %s316
    %s319 = sphi 0, %s318
    %s333 = sphi 0, %s319
    %s337 = sphi 0, %s337
    %s339 = sphi 0, %s337
    %s340 = sphi 0, %s339
    %s354 = sphi 0, %s340
    %s362 = sphi 0, %s364
    %s365 = sphi 0, %s362
    %s366 = sphi 0, %s365
    %s382 = sphi 0, %s366
  $region4: #{transformer_forward.15} parent=0 // loop_header_branch
    %23 = sbr.rel (%p21) target = $region8
  $region5: #{transformer_forward.15} parent=0 // loop_body
    %s25 = ssub.s32 %s20, 1
    %s26 = ssub.s32 %s20, 2
    %s33 = sadd.s32 1, %s28
    %p34 = scmp.ge.s32.totalorder %s33, 1
    %s35 = scalar_select %p34, 0, %s33
    %s36 = sadd.s32 1, %s27
    %s37 = scalar_select %p34, %s36, %s27
    %p38 = scmp.ge.s32.totalorder %s37, 2
    %s39 = scalar_select %p38, 0, %s37
    %s40 = ssub.s32 %s27, %s39
    %s41 = ssub.s32 %s28, %s35
    %s42 = sor.u32 %s40, %s41
    %p43 = scmp.eq.s32.totalorder %s42, 0
    %s45 = sadd.s32 %s44, 1
    %s46 = scalar_select %p43, %s44, %s45
    %p49 = pneg %p43
    %p50 = scmp.eq.s32.totalorder %s20, 1
    %p51 = por %p49, %p50
    %p52 = scmp.ne.s32.totalorder %s44, %s47
    %p53 = scmp.eq.s32.totalorder %s20, 0
    %p54 = por %p52, %p53
    %p55 = scmp.ne.s32.totalorder %s44, %s47
    %p56 = scmp.eq.s32.totalorder %s25, 1
    %p57 = por %p55, %p56
    %p58 = scmp.ne.s32.totalorder %s47, %s48
    %p59 = scmp.eq.s32.totalorder %s25, 0
    %p60 = por %p58, %p59
    %p61 = scmp.ne.s32.totalorder %s47, %s48
    %p62 = scmp.eq.s32.totalorder %s26, 1
    %p63 = por %p61, %p62
    %p65 = scmp.ne.s32.totalorder %s48, %s64
    %p66 = scmp.eq.s32.totalorder %s26, 0
    %p67 = por %p65, %p66
    %s68 = ssub.s32 %s27, %s39
    %p69 = scmp.eq.s32.totalorder %s68, 0
    %s71 = sadd.s32 %s70, 1
    %s72 = scalar_select %p69, %s70, %s71
    %p75 = pneg %p69
    %p76 = scmp.eq.s32.totalorder %s20, 1
    %p77 = por %p75, %p76
    %p78 = scmp.ne.s32.totalorder %s70, %s73
    %p79 = scmp.eq.s32.totalorder %s20, 0
    %p80 = por %p78, %p79
    %p81 = scmp.ne.s32.totalorder %s70, %s73
    %p82 = scmp.eq.s32.totalorder %s25, 1
    %p83 = por %p81, %p82
    %p84 = scmp.ne.s32.totalorder %s73, %s74
    %p85 = scmp.eq.s32.totalorder %s25, 0
    %p86 = por %p84, %p85
    %p87 = scmp.ne.s32.totalorder %s73, %s74
    %p88 = scmp.eq.s32.totalorder %s26, 1
    %p89 = por %p87, %p88
    %p91 = scmp.ne.s32.totalorder %s74, %s90
    %p92 = scmp.eq.s32.totalorder %s26, 0
    %p93 = por %p91, %p92
    %s94 = ssub.s32 %s27, %s39
    %s95 = ssub.s32 %s28, %s35
    %s96 = sor.u32 %s94, %s95
    %p97 = scmp.eq.s32.totalorder %s96, 0
    %s99 = sadd.s32 %s98, 1
    %s100 = scalar_select %p97, %s98, %s99
    %p103 = pneg %p97
    %p104 = scmp.eq.s32.totalorder %s20, 1
    %p105 = por %p103, %p104
    %p106 = scmp.ne.s32.totalorder %s98, %s101
    %p107 = scmp.eq.s32.totalorder %s20, 0
    %p108 = por %p106, %p107
    %p109 = scmp.ne.s32.totalorder %s98, %s101
    %p110 = scmp.eq.s32.totalorder %s25, 1
    %p111 = por %p109, %p110
    %p112 = scmp.ne.s32.totalorder %s101, %s102
    %p113 = scmp.eq.s32.totalorder %s25, 0
    %p114 = por %p112, %p113
    %p115 = scmp.ne.s32.totalorder %s101, %s102
    %p116 = scmp.eq.s32.totalorder %s26, 1
    %p117 = por %p115, %p116
    %p119 = scmp.ne.s32.totalorder %s102, %s118
    %p120 = scmp.eq.s32.totalorder %s26, 0
    %p121 = por %p119, %p120
    %s122 = ssub.s32 %s27, %s39
    %p123 = scmp.eq.s32.totalorder %s122, 0
    %s125 = sadd.s32 %s124, 1
    %s126 = scalar_select %p123, %s124, %s125
    %p129 = pneg %p123
    %p130 = scmp.eq.s32.totalorder %s20, 1
    %p131 = por %p129, %p130
    %p132 = scmp.ne.s32.totalorder %s124, %s127
    %p133 = scmp.eq.s32.totalorder %s20, 0
    %p134 = por %p132, %p133
    %p135 = scmp.ne.s32.totalorder %s124, %s127
    %p136 = scmp.eq.s32.totalorder %s25, 1
    %p137 = por %p135, %p136
    %p138 = scmp.ne.s32.totalorder %s127, %s128
    %p139 = scmp.eq.s32.totalorder %s25, 0
    %p140 = por %p138, %p139
    %p141 = scmp.ne.s32.totalorder %s127, %s128
    %p142 = scmp.eq.s32.totalorder %s26, 1
    %p143 = por %p141, %p142
    %p145 = scmp.ne.s32.totalorder %s128, %s144
    %p146 = scmp.eq.s32.totalorder %s26, 0
    %p147 = por %p145, %p146
    %s149 = sadd.s32 %s148, 1
    %p152 = scmp.eq.s32.totalorder %s20, 1
    %p153 = scmp.ne.s32.totalorder %s148, %s150
    %p154 = scmp.eq.s32.totalorder %s20, 0
    %p155 = por %p153, %p154
    %p156 = scmp.ne.s32.totalorder %s148, %s150
    %p157 = scmp.eq.s32.totalorder %s25, 1
    %p158 = por %p156, %p157
    %p159 = scmp.ne.s32.totalorder %s150, %s151
    %p160 = scmp.eq.s32.totalorder %s25, 0
    %p161 = por %p159, %p160
    %p162 = scmp.ne.s32.totalorder %s150, %s151
    %p163 = scmp.eq.s32.totalorder %s26, 1
    %p164 = por %p162, %p163
    %p166 = scmp.ne.s32.totalorder %s151, %s165
    %p167 = scmp.eq.s32.totalorder %s26, 0
    %p168 = por %p166, %p167
    %s170 = sadd.s32 %s169, 1
    %p173 = scmp.eq.s32.totalorder %s20, 1
    %p174 = scmp.ne.s32.totalorder %s169, %s171
    %p175 = scmp.eq.s32.totalorder %s20, 0
    %p176 = por %p174, %p175
    %p177 = scmp.ne.s32.totalorder %s169, %s171
    %p178 = scmp.eq.s32.totalorder %s25, 1
    %p179 = por %p177, %p178
    %p180 = scmp.ne.s32.totalorder %s171, %s172
    %p181 = scmp.eq.s32.totalorder %s25, 0
    %p182 = por %p180, %p181
    %p183 = scmp.ne.s32.totalorder %s171, %s172
    %p184 = scmp.eq.s32.totalorder %s26, 1
    %p185 = por %p183, %p184
    %p187 = scmp.ne.s32.totalorder %s172, %s186
    %p188 = scmp.eq.s32.totalorder %s26, 0
    %p189 = por %p187, %p188
    %s191 = sadd.s32 %s190, 1
    %p194 = scmp.eq.s32.totalorder %s20, 1
    %p195 = scmp.ne.s32.totalorder %s190, %s192
    %p196 = scmp.eq.s32.totalorder %s20, 0
    %p197 = por %p195, %p196
    %p198 = scmp.ne.s32.totalorder %s190, %s192
    %p199 = scmp.eq.s32.totalorder %s25, 1
    %p200 = por %p198, %p199
    %p201 = scmp.ne.s32.totalorder %s192, %s193
    %p202 = scmp.eq.s32.totalorder %s25, 0
    %p203 = por %p201, %p202
    %p204 = scmp.ne.s32.totalorder %s192, %s193
    %p205 = scmp.eq.s32.totalorder %s26, 1
    %p206 = por %p204, %p205
    %p208 = scmp.ne.s32.totalorder %s193, %s207
    %p209 = scmp.eq.s32.totalorder %s26, 0
    %p210 = por %p208, %p209
    %s212 = sadd.s32 %s211, 1
    %p215 = scmp.eq.s32.totalorder %s20, 1
    %p216 = scmp.ne.s32.totalorder %s211, %s213
    %p217 = scmp.eq.s32.totalorder %s20, 0
    %p218 = por %p216, %p217
    %p219 = scmp.ne.s32.totalorder %s211, %s213
    %p220 = scmp.eq.s32.totalorder %s25, 1
    %p221 = por %p219, %p220
    %p222 = scmp.ne.s32.totalorder %s213, %s214
    %p223 = scmp.eq.s32.totalorder %s25, 0
    %p224 = por %p222, %p223
    %p225 = scmp.ne.s32.totalorder %s213, %s214
    %p226 = scmp.eq.s32.totalorder %s26, 1
    %p227 = por %p225, %p226
    %p229 = scmp.ne.s32.totalorder %s214, %s228
    %p230 = scmp.eq.s32.totalorder %s26, 0
    %p231 = por %p229, %p230
    %s233 = sadd.s32 %s232, 1
    %p236 = scmp.eq.s32.totalorder %s20, 1
    %p237 = scmp.ne.s32.totalorder %s232, %s234
    %p238 = scmp.eq.s32.totalorder %s20, 0
    %p239 = por %p237, %p238
    %p240 = scmp.ne.s32.totalorder %s232, %s234
    %p241 = scmp.eq.s32.totalorder %s25, 1
    %p242 = por %p240, %p241
    %p243 = scmp.ne.s32.totalorder %s234, %s235
    %p244 = scmp.eq.s32.totalorder %s25, 0
    %p245 = por %p243, %p244
    %p246 = scmp.ne.s32.totalorder %s234, %s235
    %p247 = scmp.eq.s32.totalorder %s26, 1
    %p248 = por %p246, %p247
    %p250 = scmp.ne.s32.totalorder %s235, %s249
    %p251 = scmp.eq.s32.totalorder %s26, 0
    %p252 = por %p250, %p251
    %s254 = sadd.s32 %s253, 1
    %p257 = scmp.eq.s32.totalorder %s20, 1
    %p258 = scmp.ne.s32.totalorder %s253, %s255
    %p259 = scmp.eq.s32.totalorder %s20, 0
    %p260 = por %p258, %p259
    %p261 = scmp.ne.s32.totalorder %s253, %s255
    %p262 = scmp.eq.s32.totalorder %s25, 1
    %p263 = por %p261, %p262
    %p264 = scmp.ne.s32.totalorder %s255, %s256
    %p265 = scmp.eq.s32.totalorder %s25, 0
    %p266 = por %p264, %p265
    %p267 = scmp.ne.s32.totalorder %s255, %s256
    %p268 = scmp.eq.s32.totalorder %s26, 1
    %p269 = por %p267, %p268
    %p271 = scmp.ne.s32.totalorder %s256, %s270
    %p272 = scmp.eq.s32.totalorder %s26, 0
    %p273 = por %p271, %p272
    %s275 = sadd.s32 %s274, 1
    %p278 = scmp.eq.s32.totalorder %s20, 1
    %p279 = scmp.ne.s32.totalorder %s274, %s276
    %p280 = scmp.eq.s32.totalorder %s20, 0
    %p281 = por %p279, %p280
    %p282 = scmp.ne.s32.totalorder %s274, %s276
    %p283 = scmp.eq.s32.totalorder %s25, 1
    %p284 = por %p282, %p283
    %p285 = scmp.ne.s32.totalorder %s276, %s277
    %p286 = scmp.eq.s32.totalorder %s25, 0
    %p287 = por %p285, %p286
    %p288 = scmp.ne.s32.totalorder %s276, %s277
    %p289 = scmp.eq.s32.totalorder %s26, 1
    %p290 = por %p288, %p289
    %p292 = scmp.ne.s32.totalorder %s277, %s291
    %p293 = scmp.eq.s32.totalorder %s26, 0
    %p294 = por %p292, %p293
    %s296 = sadd.s32 %s295, 1
    %p299 = scmp.eq.s32.totalorder %s20, 1
    %p300 = scmp.ne.s32.totalorder %s295, %s297
    %p301 = scmp.eq.s32.totalorder %s20, 0
    %p302 = por %p300, %p301
    %p303 = scmp.ne.s32.totalorder %s295, %s297
    %p304 = scmp.eq.s32.totalorder %s25, 1
    %p305 = por %p303, %p304
    %p306 = scmp.ne.s32.totalorder %s297, %s298
    %p307 = scmp.eq.s32.totalorder %s25, 0
    %p308 = por %p306, %p307
    %p309 = scmp.ne.s32.totalorder %s297, %s298
    %p310 = scmp.eq.s32.totalorder %s26, 1
    %p311 = por %p309, %p310
    %p313 = scmp.ne.s32.totalorder %s298, %s312
    %p314 = scmp.eq.s32.totalorder %s26, 0
    %p315 = por %p313, %p314
    %s317 = sadd.s32 %s316, 1
    %p320 = scmp.eq.s32.totalorder %s20, 1
    %p321 = scmp.ne.s32.totalorder %s316, %s318
    %p322 = scmp.eq.s32.totalorder %s20, 0
    %p323 = por %p321, %p322
    %p324 = scmp.ne.s32.totalorder %s316, %s318
    %p325 = scmp.eq.s32.totalorder %s25, 1
    %p326 = por %p324, %p325
    %p327 = scmp.ne.s32.totalorder %s318, %s319
    %p328 = scmp.eq.s32.totalorder %s25, 0
    %p329 = por %p327, %p328
    %p330 = scmp.ne.s32.totalorder %s318, %s319
    %p331 = scmp.eq.s32.totalorder %s26, 1
    %p332 = por %p330, %p331
    %p334 = scmp.ne.s32.totalorder %s319, %s333
    %p335 = scmp.eq.s32.totalorder %s26, 0
    %p336 = por %p334, %p335
    %s338 = sadd.s32 %s337, 1
    %p341 = scmp.eq.s32.totalorder %s20, 1
    %p342 = scmp.ne.s32.totalorder %s337, %s339
    %p343 = scmp.eq.s32.totalorder %s20, 0
    %p344 = por %p342, %p343
    %p345 = scmp.ne.s32.totalorder %s337, %s339
    %p346 = scmp.eq.s32.totalorder %s25, 1
    %p347 = por %p345, %p346
    %p348 = scmp.ne.s32.totalorder %s339, %s340
    %p349 = scmp.eq.s32.totalorder %s25, 0
    %p350 = por %p348, %p349
    %p351 = scmp.ne.s32.totalorder %s339, %s340
    %p352 = scmp.eq.s32.totalorder %s26, 1
    %p353 = por %p351, %p352
    %p355 = scmp.ne.s32.totalorder %s340, %s354
    %p356 = scmp.eq.s32.totalorder %s26, 0
    %p357 = por %p355, %p356
    %s358 = ssub.s32 %s27, %s39
    %s359 = ssub.s32 %s28, %s35
    %s360 = sor.u32 %s358, %s359
    %p361 = scmp.eq.s32.totalorder %s360, 0
    %s363 = sadd.s32 %s362, 1
    %s364 = scalar_select %p361, %s362, %s363
    %p367 = pneg %p361
    %p368 = scmp.eq.s32.totalorder %s20, 1
    %p369 = por %p367, %p368
    %p370 = scmp.ne.s32.totalorder %s362, %s365
    %p371 = scmp.eq.s32.totalorder %s20, 0
    %p372 = por %p370, %p371
    %p373 = scmp.ne.s32.totalorder %s362, %s365
    %p374 = scmp.eq.s32.totalorder %s25, 1
    %p375 = por %p373, %p374
    %p376 = scmp.ne.s32.totalorder %s365, %s366
    %p377 = scmp.eq.s32.totalorder %s25, 0
    %p378 = por %p376, %p377
    %p379 = scmp.ne.s32.totalorder %s365, %s366
    %p380 = scmp.eq.s32.totalorder %s26, 1
    %p381 = por %p379, %p380
    %p383 = scmp.ne.s32.totalorder %s366, %s382
    %p384 = scmp.eq.s32.totalorder %s26, 0
    %p385 = por %p383, %p384
    %p386 = scmp.le.s32.totalorder 1, %s20
    %p387 = scmp.lt.s32.totalorder %s20, 3
    %p388 = pnand %p386, %p387
    %p389 = pneg %p388
    // Predicated region
    $region9: #{transformer_forward.15} parent=5 // pred_check
      _
    $region10: #{transformer_forward.15} parent=5 // pred_check_branch
      %391 = sbr.rel (%p388) target = $region12
    $region11: #{transformer_forward.15} parent=5 // pred_region
      %s392 = ssub.s32 %s20, 1
      // Predicated region
      $region13: #{transformer_forward.15} parent=11 // pred_check
        %p393 = pneg %p161
      $region14: #{transformer_forward.15} parent=11 // pred_check_branch
        %395 = sbr.rel (%p393) target = $region16
      $region15: #{transformer_forward.15} parent=11 // pred_region
        _
      $region16: #{transformer_forward.15} parent=11 // pred_fallthru
        _
      // Predicated region
      $region17: #{transformer_forward.15} parent=11 // pred_check
        %p396 = pneg %p182
      $region18: #{transformer_forward.15} parent=11 // pred_check_branch
        %398 = sbr.rel (%p396) target = $region20
      $region19: #{transformer_forward.15} parent=11 // pred_region
        _
      $region20: #{transformer_forward.15} parent=11 // pred_fallthru
        _
      // Predicated region
      $region21: #{transformer_forward.15} parent=11 // pred_check
        %p399 = pneg %p203
      $region22: #{transformer_forward.15} parent=11 // pred_check_branch
        %401 = sbr.rel (%p399) target = $region24
      $region23: #{transformer_forward.15} parent=11 // pred_region
        _
      $region24: #{transformer_forward.15} parent=11 // pred_fallthru
        _
      // Predicated region
      $region25: #{transformer_forward.15} parent=11 // pred_check
        %p402 = pneg %p224
      $region26: #{transformer_forward.15} parent=11 // pred_check_branch
        %404 = sbr.rel (%p402) target = $region28
      $region27: #{transformer_forward.15} parent=11 // pred_region
        _
      $region28: #{transformer_forward.15} parent=11 // pred_fallthru
        _
      // Predicated region
      $region29: #{transformer_forward.15} parent=11 // pred_check
        %p405 = pneg %p245
      $region30: #{transformer_forward.15} parent=11 // pred_check_branch
        %407 = sbr.rel (%p405) target = $region32
      $region31: #{transformer_forward.15} parent=11 // pred_region
        _
      $region32: #{transformer_forward.15} parent=11 // pred_fallthru
        _
      // Predicated region
      $region33: #{transformer_forward.15} parent=11 // pred_check
        %p408 = pneg %p266
      $region34: #{transformer_forward.15} parent=11 // pred_check_branch
        %410 = sbr.rel (%p408) target = $region36
      $region35: #{transformer_forward.15} parent=11 // pred_region
        _
      $region36: #{transformer_forward.15} parent=11 // pred_fallthru
        _
      // Predicated region
      $region37: #{transformer_forward.15} parent=11 // pred_check
        %p411 = pneg %p287
      $region38: #{transformer_forward.15} parent=11 // pred_check_branch
        %413 = sbr.rel (%p411) target = $region40
      $region39: #{transformer_forward.15} parent=11 // pred_region
        _
      $region40: #{transformer_forward.15} parent=11 // pred_fallthru
        _
      // Predicated region
      $region41: #{transformer_forward.15} parent=11 // pred_check
        %p414 = pneg %p308
      $region42: #{transformer_forward.15} parent=11 // pred_check_branch
        %416 = sbr.rel (%p414) target = $region44
      $region43: #{transformer_forward.15} parent=11 // pred_region
        _
      $region44: #{transformer_forward.15} parent=11 // pred_fallthru
        _
      // Predicated region
      $region45: #{transformer_forward.15} parent=11 // pred_check
        %p417 = pneg %p329
      $region46: #{transformer_forward.15} parent=11 // pred_check_branch
        %419 = sbr.rel (%p417) target = $region48
      $region47: #{transformer_forward.15} parent=11 // pred_region
        _
      $region48: #{transformer_forward.15} parent=11 // pred_fallthru
        _
      // Predicated region
      $region49: #{transformer_forward.15} parent=11 // pred_check
        %p420 = pneg %p350
      $region50: #{transformer_forward.15} parent=11 // pred_check_branch
        %422 = sbr.rel (%p420) target = $region52
      $region51: #{transformer_forward.15} parent=11 // pred_region
        _
      $region52: #{transformer_forward.15} parent=11 // pred_fallthru
        _
    $region12: #{transformer_forward.15} parent=5 // pred_fallthru
      _
    %p423 = scmp.lt.s32.totalorder %s20, 2
    // Predicated region
    $region53: #{transformer_forward.15} parent=5 // pred_check
      %p424 = pneg %p423
    $region54: #{transformer_forward.15} parent=5 // pred_check_branch
      %426 = sbr.rel (%p424) target = $region56
    $region55: #{transformer_forward.15} parent=5 // pred_region
      // Predicated region
      $region57: #{transformer_forward.15} parent=55 // pred_check
        %p427 = pneg %p54
      $region58: #{transformer_forward.15} parent=55 // pred_check_branch
        %429 = sbr.rel (%p427) target = $region60
      $region59: #{transformer_forward.15} parent=55 // pred_region
        %p430 = scmp.lt.s32.totalorder %s27, 1
        %s431 = scalar_select %p430, %s27, 1
        %p432 = scmp.lt.s32.totalorder %s28, 0
        %s433 = scalar_select %p432, %s28, 0
        %s434 = sadd.s32 %s433, %s431
        %s435 = smul.addr %s434, 4
        %s436 = scalar_lea.vmem %s0, %s435
      $region60: #{transformer_forward.15} parent=55 // pred_fallthru
        _
      // Predicated region
      $region61: #{transformer_forward.15} parent=55 // pred_check
        %p437 = pneg %p80
      $region62: #{transformer_forward.15} parent=55 // pred_check_branch
        %439 = sbr.rel (%p437) target = $region64
      $region63: #{transformer_forward.15} parent=55 // pred_region
        %p440 = scmp.lt.s32.totalorder %s27, 1
        %s441 = scalar_select %p440, %s27, 1
        %s442 = smul.addr %s441, 4
        %s443 = scalar_lea.vmem %s1, %s442
      $region64: #{transformer_forward.15} parent=55 // pred_fallthru
        _
      // Predicated region
      $region65: #{transformer_forward.15} parent=55 // pred_check
        %p444 = pneg %p108
      $region66: #{transformer_forward.15} parent=55 // pred_check_branch
        %446 = sbr.rel (%p444) target = $region68
      $region67: #{transformer_forward.15} parent=55 // pred_region
        %p447 = scmp.lt.s32.totalorder %s27, 1
        %s448 = scalar_select %p447, %s27, 1
        %p449 = scmp.lt.s32.totalorder %s28, 0
        %s450 = scalar_select %p449, %s28, 0
        %s451 = sadd.s32 %s450, %s448
        %s452 = smul.addr %s451, 8
        %s453 = scalar_lea.vmem %s2, %s452
      $region68: #{transformer_forward.15} parent=55 // pred_fallthru
        _
      // Predicated region
      $region69: #{transformer_forward.15} parent=55 // pred_check
        %p454 = pneg %p134
      $region70: #{transformer_forward.15} parent=55 // pred_check_branch
        %456 = sbr.rel (%p454) target = $region72
      $region71: #{transformer_forward.15} parent=55 // pred_region
        %p457 = scmp.lt.s32.totalorder %s27, 1
        %s458 = scalar_select %p457, %s27, 1
        %s459 = scalar_lea.vmem %s3, %s458
      $region72: #{transformer_forward.15} parent=55 // pred_fallthru
        _
    $region56: #{transformer_forward.15} parent=5 // pred_fallthru
      _
    %p460 = scmp.le.s32.totalorder 1, %s20
    %p461 = scmp.lt.s32.totalorder %s20, 3
    %p462 = pnand %p460, %p461
    %p463 = pneg %p462
    // Predicated region
    $region73: #{transformer_forward.15} parent=5 // pred_check
      _
    $region74: #{transformer_forward.15} parent=5 // pred_check_branch
      %465 = sbr.rel (%p462) target = $region76
    $region75: #{transformer_forward.15} parent=5 // pred_region
      %s466 = ssub.s32 %s20, 1
      %p467 = scmp.lt.s32.totalorder %s29, 1
      %s468 = scalar_select %p467, %s29, 1
      %p469 = scmp.lt.s32.totalorder %s30, 0
      %s470 = scalar_select %p469, %s30, 0
      %s471 = sadd.s32 %s470, %s468
      %s472 = smul.addr %s471, 4
      %s473 = scalar_lea.vmem %s0, %s472
      %p474 = pneg %p60
      %p475 = pneg %p57
      %p476 = scmp.lt.s32.totalorder %s29, 1
      %s477 = scalar_select %p476, %s29, 1
      %s478 = smul.addr %s477, 4
      %s479 = scalar_lea.vmem %s1, %s478
      %p480 = pneg %p86
      %p481 = pneg %p83
      %p482 = scmp.lt.s32.totalorder %s29, 1
      %s483 = scalar_select %p482, %s29, 1
      %p484 = scmp.lt.s32.totalorder %s30, 0
      %s485 = scalar_select %p484, %s30, 0
      %s486 = sadd.s32 %s485, %s483
      %s487 = smul.addr %s486, 8
      %s488 = scalar_lea.vmem %s2, %s487
      %p489 = pneg %p114
      %p490 = pneg %p111
      %p491 = scmp.lt.s32.totalorder %s29, 1
      %s492 = scalar_select %p491, %s29, 1
      %s493 = scalar_lea.vmem %s3, %s492
      %p494 = pneg %p140
      %p495 = pneg %p137
      %p496 = pneg %p161
      %p497 = pneg %p158
      %p498 = pneg %p182
      %p499 = pneg %p179
      %p500 = pneg %p203
      %p501 = pneg %p200
      %p502 = pneg %p224
      %p503 = pneg %p221
      %p504 = pneg %p245
      %p505 = pneg %p242
      %p506 = pneg %p266
      %p507 = pneg %p263
      %p508 = pneg %p287
      %p509 = pneg %p284
      %p510 = pneg %p308
      %p511 = pneg %p305
      %p512 = pneg %p329
      %p513 = pneg %p326
      %p514 = pneg %p350
      %p515 = pneg %p347
      %p516 = pneg %p378
      %p517 = pneg %p375
      %p518 = scmp.lt.s32.totalorder %s29, 1
      %s519 = scalar_select %p518, %s29, 1
      %p520 = scmp.lt.s32.totalorder %s30, 0
      %s521 = scalar_select %p520, %s30, 0
      %s522 = sadd.s32 %s521, %s519
      %s523 = smul.addr %s522, 4
      %s524 = scalar_lea.vmem %s14, %s523
      %p525 = scmp.lt.s32.totalorder %s29, 1
      %s526 = scalar_select %p525, %s29, 1
      %p527 = scmp.lt.s32.totalorder %s30, 0
      %s528 = scalar_select %p527, %s30, 0
      %s529 = sadd.s32 %s528, %s526
      %s530 = smul.addr %s529, 4
      %s531 = scalar_lea.vmem %s0, %s530
      %p532 = scmp.lt.s32.totalorder %s29, 1
      %s533 = scalar_select %p532, %s29, 1
      %s534 = smul.addr %s533, 4
      %s535 = scalar_lea.vmem %s1, %s534
      %p536 = scmp.lt.s32.totalorder %s29, 1
      %s537 = scalar_select %p536, %s29, 1
      %p538 = scmp.lt.s32.totalorder %s30, 0
      %s539 = scalar_select %p538, %s30, 0
      %s540 = sadd.s32 %s539, %s537
      %s541 = smul.addr %s540, 8
      %s542 = scalar_lea.vmem %s2, %s541
      %p543 = scmp.lt.s32.totalorder %s29, 1
      %s544 = scalar_select %p543, %s29, 1
      %s545 = scalar_lea.vmem %s3, %s544
      %p546 = scmp.lt.s32.totalorder %s29, 1
      %s547 = scalar_select %p546, %s29, 1
      %p548 = scmp.lt.s32.totalorder %s30, 0
      %s549 = scalar_select %p548, %s30, 0
      %s550 = sadd.s32 %s549, %s547
      %s551 = smul.addr %s550, 4
      %s552 = scalar_lea.vmem %s14, %s551
      %p554 = scmp.eq.s32.totalorder %s30, 0
      // Predicated region
      $region77: #{transformer_forward.15} parent=75 // pred_check
        %p555 = pneg %p554
      $region78: #{transformer_forward.15} parent=75 // pred_check_branch
        %557 = sbr.rel (%p555) target = $region80
      $region79: #{transformer_forward.15} parent=75 // pred_region
        %v558 = vld [vmem:[%s535] sm:$0xf]
        %v559 = vld [vmem:[%s6] sm:$0xf]
        %v560 = vld [vmem:[%s6 + $0x4] sm:$0xf]
        %v561 = vld [vmem:[%s6 + $0x8] sm:$0xf]
        %v562 = vld [vmem:[%s6 + $0xc] sm:$0xf]
        %v563 = vld [vmem:[%s7] sm:$0x1]
        %v565 = vlaneseq
        %v566 = vshrl.u32 %v565, 7
        %v567 = vsub.s32 0, %v566
        %v568 = vrot.slane %v563, %v567
        %v574 = vunpack.c.l.b16 %v559
        %v575 = vunpack.c.l.b16 %v560
        %v576 = vunpack.c.l.b16 %v561
        %v577 = vunpack.c.l.b16 %v562
        %v578 = vpack.c.b16 %v575, %v574
        %v579 = vpack.c.b16 %v577, %v576
        %vm582 = vcmask 261120
        %v584 = vsel %vm582, %v558, 0
        %586 = vmatprep.subr.bf16.mxu0 0
        %587 = vmatpush1.bf16.msra.mxu0 %v578
        %588 = vmatprep.subr.bf16.mxu0 0
        %589 = vmatpush1.bf16.msra.mxu0 %v579
        %590 = vmatprep.subr.bf16.mxu0 0
        %591 = vmatpush1.bf16.msra.mxu0 0
        %592 = vmatprep.subr.bf16.mxu0 0
        %593 = vmatpush1.bf16.msra.mxu0 0
        %594 = vmatprep.subr.bf16.mxu0 0
        %595 = vmatpush1.bf16.msra.mxu0 0
        %596 = vmatprep.subr.bf16.mxu0 0
        %597 = vmatpush1.bf16.msra.mxu0 0
        %598 = vmatprep.subr.bf16.mxu0 0
        %599 = vmatpush1.bf16.msra.mxu0 0
        %600 = vmatprep.subr.bf16.mxu0 0
        %601 = vmatpush1.bf16.msra.mxu0 0
        %602 = vmatprep.subr.bf16.mxu0 0
        %603 = vmatpush1.bf16.msra.mxu0 0
        %604 = vmatprep.subr.bf16.mxu0 0
        %605 = vmatpush1.bf16.msra.mxu0 0
        %606 = vmatprep.subr.bf16.mxu0 0
        %607 = vmatpush1.bf16.msra.mxu0 0
        %608 = vmatprep.subr.bf16.mxu0 0
        %609 = vmatpush1.bf16.msra.mxu0 0
        %610 = vmatprep.subr.bf16.mxu0 0
        %611 = vmatpush1.bf16.msra.mxu0 0
        %612 = vmatprep.subr.bf16.mxu0 0
        %613 = vmatpush1.bf16.msra.mxu0 0
        %614 = vmatprep.subr.bf16.mxu0 0
        %615 = vmatpush1.bf16.msra.mxu0 0
        %616 = vmatprep.subr.bf16.mxu0 0
        %617 = vmatpush1.bf16.msra.mxu0 0
        %618 = vmatprep.mubr.bf16.mxu0 0
        %619 = vmatmul.mubr.bf16.gmra.mrb[0].mxu0 %v584
        %v620 = vpop.f32.mrb[0].mxu0
        %v621 = vadd.f32 %v568, %v620
        %v622 = vpop.f32.mrb[0].mxu0
        %v623 = vpop.f32.mrb[0].mxu0
        %v624 = vpop.f32.mrb[0].mxu0
        %625 = vdwg.mxu0
        %v626 = vld [vmem:[%s8] sm:$0xf]
        %v627 = vld [vmem:[%s8 + $0x4] sm:$0xf]
        %v628 = vld [vmem:[%s8 + $0x8] sm:$0xf]
        %v629 = vld [vmem:[%s8 + $0xc] sm:$0xf]
        %v630 = vld [vmem:[%s9] sm:$0x1]
        %v632 = vlaneseq
        %v633 = vshrl.u32 %v632, 7
        %v634 = vsub.s32 0, %v633
        %v635 = vrot.slane %v630, %v634
        %v641 = vunpack.c.l.b16 %v626
        %v642 = vunpack.c.l.b16 %v627
        %v643 = vunpack.c.l.b16 %v628
        %v644 = vunpack.c.l.b16 %v629
        %v645 = vpack.c.b16 %v642, %v641
        %v646 = vpack.c.b16 %v644, %v643
        %649 = vmatprep.subr.bf16.mxu0 0
        %650 = vmatpush1.bf16.msra.mxu0 %v645
        %651 = vmatprep.subr.bf16.mxu0 0
        %652 = vmatpush1.bf16.msra.mxu0 %v646
        %653 = vmatprep.subr.bf16.mxu0 0
        %654 = vmatpush1.bf16.msra.mxu0 0
        %655 = vmatprep.subr.bf16.mxu0 0
        %656 = vmatpush1.bf16.msra.mxu0 0
        %657 = vmatprep.subr.bf16.mxu0 0
        %658 = vmatpush1.bf16.msra.mxu0 0
        %659 = vmatprep.subr.bf16.mxu0 0
        %660 = vmatpush1.bf16.msra.mxu0 0
        %661 = vmatprep.subr.bf16.mxu0 0
        %662 = vmatpush1.bf16.msra.mxu0 0
        %663 = vmatprep.subr.bf16.mxu0 0
        %664 = vmatpush1.bf16.msra.mxu0 0
        %665 = vmatprep.subr.bf16.mxu0 0
        %666 = vmatpush1.bf16.msra.mxu0 0
        %667 = vmatprep.subr.bf16.mxu0 0
        %668 = vmatpush1.bf16.msra.mxu0 0
        %669 = vmatprep.subr.bf16.mxu0 0
        %670 = vmatpush1.bf16.msra.mxu0 0
        %671 = vmatprep.subr.bf16.mxu0 0
        %672 = vmatpush1.bf16.msra.mxu0 0
        %673 = vmatprep.subr.bf16.mxu0 0
        %674 = vmatpush1.bf16.msra.mxu0 0
        %675 = vmatprep.subr.bf16.mxu0 0
        %676 = vmatpush1.bf16.msra.mxu0 0
        %677 = vmatprep.subr.bf16.mxu0 0
        %678 = vmatpush1.bf16.msra.mxu0 0
        %679 = vmatprep.subr.bf16.mxu0 0
        %680 = vmatpush1.bf16.msra.mxu0 0
        %681 = vmatprep.mubr.bf16.mxu0 0
        %682 = vmatmul.mubr.bf16.gmra.mrb[0].mxu0 %v584
        %v683 = vpop.f32.mrb[0].mxu0
        %v684 = vadd.f32 %v635, %v683
        %v685 = vpop.f32.mrb[0].mxu0
        %v686 = vpop.f32.mrb[0].mxu0
        %v687 = vpop.f32.mrb[0].mxu0
        %688 = vdwg.mxu0
        %v689 = vpack.c.bf16 %v621, %v621
        %691 = vrot.lane.b32.xlu0 %v689, 120
        %v692 = vpop.permute.xlu0 %691
        %693 = vrot.lane.b32.xlu0 %v689, 112
        %v694 = vpop.permute.xlu0 %693
        %695 = vrot.lane.b32.xlu0 %v689, 104
        %v696 = vpop.permute.xlu0 %695
        %v698 = vunpack.c.l.s4 1983009808
        %v699 = vunpack.c.0.s8 %v698
        %v700 = vlaneseq
        %v701 = vshrl.u32 %v700, 7
        %v702 = vsub.s32 %v699, %v701
        %v703 = vrot.slane %v689, %v702
        %v706 = vunpack.c.l.s4 1983009808
        %v707 = vunpack.c.0.s8 %v706
        %v708 = vlaneseq
        %v709 = vshrl.u32 %v708, 7
        %v710 = vsub.s32 %v707, %v709
        %v711 = vrot.slane %v694, %v710
        %v712 = vcombine.low %v703, %v711
        %v713 = vcombine.high %v703, %v711
        %v715 = vunpack.c.l.s4 1934713408
        %v716 = vunpack.c.0.s8 %v715
        %v717 = vlaneseq
        %v718 = vshrl.u32 %v717, 7
        %v719 = vsub.s32 %v716, %v718
        %v720 = vrot.slane %v712, %v719
        %v722 = vunpack.c.l.s4 1934713408
        %v723 = vunpack.c.0.s8 %v722
        %v724 = vlaneseq
        %v725 = vshrl.u32 %v724, 7
        %v726 = vsub.s32 %v723, %v725
        %v727 = vrot.slane %v713, %v726
        %v728 = vcombine.high %v720, 0
        %v729 = vcombine.high %v727, 0
        %v732 = vunpack.c.l.s4 1983009808
        %v733 = vunpack.c.0.s8 %v732
        %v734 = vlaneseq
        %v735 = vshrl.u32 %v734, 7
        %v736 = vsub.s32 %v733, %v735
        %v737 = vrot.slane %v692, %v736
        %v740 = vunpack.c.l.s4 1983009808
        %v741 = vunpack.c.0.s8 %v740
        %v742 = vlaneseq
        %v743 = vshrl.u32 %v742, 7
        %v744 = vsub.s32 %v741, %v743
        %v745 = vrot.slane %v696, %v744
        %v746 = vcombine.low %v737, %v745
        %v747 = vcombine.high %v737, %v745
        %v749 = vunpack.c.l.s4 1934713408
        %v750 = vunpack.c.0.s8 %v749
        %v751 = vlaneseq
        %v752 = vshrl.u32 %v751, 7
        %v753 = vsub.s32 %v750, %v752
        %v754 = vrot.slane %v746, %v753
        %v756 = vunpack.c.l.s4 1934713408
        %v757 = vunpack.c.0.s8 %v756
        %v758 = vlaneseq
        %v759 = vshrl.u32 %v758, 7
        %v760 = vsub.s32 %v757, %v759
        %v761 = vrot.slane %v747, %v760
        %v762 = vcombine.high %v754, 0
        %v763 = vcombine.high %v761, 0
        %v766 = vpack.i.b16 %v754, %v720
        %v768 = vshrl.u32 %v720, 16
        %v769 = vshrl.u32 %v754, 16
        %v770 = vpack.i.b16 %v769, %v768
        %v774 = vpack.i.b16 %v762, %v728
        %v776 = vshrl.u32 %v728, 16
        %v777 = vshrl.u32 %v762, 16
        %v778 = vpack.i.b16 %v777, %v776
        %v782 = vpack.i.b16 %v761, %v727
        %v784 = vshrl.u32 %v727, 16
        %v785 = vshrl.u32 %v761, 16
        %v786 = vpack.i.b16 %v785, %v784
        %v790 = vpack.i.b16 %v763, %v729
        %v792 = vshrl.u32 %v729, 16
        %v793 = vshrl.u32 %v763, 16
        %v794 = vpack.i.b16 %v793, %v792
        %v796 = vcombine.low %v766, %v782
        %v798 = vunpack.c.l.s4 1983009808
        %v799 = vunpack.c.0.s8 %v798
        %v800 = vlaneseq
        %v801 = vshrl.u32 %v800, 7
        %v802 = vsub.s32 %v799, %v801
        %v803 = vrot.slane %v796, %v802
        %v804 = vcombine.low %v774, %v790
        %v806 = vunpack.c.l.s4 1983009808
        %v807 = vunpack.c.0.s8 %v806
        %v808 = vlaneseq
        %v809 = vshrl.u32 %v808, 7
        %v810 = vsub.s32 %v807, %v809
        %v811 = vrot.slane %v804, %v810
        %v812 = vcombine.low %v803, %v811
        %v814 = vunpack.c.l.s4 1934713408
        %v815 = vunpack.c.0.s8 %v814
        %v816 = vlaneseq
        %v817 = vshrl.u32 %v816, 7
        %v818 = vsub.s32 %v815, %v817
        %v819 = vrot.slane %v812, %v818
        %v820 = vcombine.high %v819, 0
        %v821 = vcombine.low %v770, %v786
        %v823 = vunpack.c.l.s4 1983009808
        %v824 = vunpack.c.0.s8 %v823
        %v825 = vlaneseq
        %v826 = vshrl.u32 %v825, 7
        %v827 = vsub.s32 %v824, %v826
        %v828 = vrot.slane %v821, %v827
        %v829 = vcombine.low %v778, %v794
        %v831 = vunpack.c.l.s4 1983009808
        %v832 = vunpack.c.0.s8 %v831
        %v833 = vlaneseq
        %v834 = vshrl.u32 %v833, 7
        %v835 = vsub.s32 %v832, %v834
        %v836 = vrot.slane %v829, %v835
        %v837 = vcombine.low %v828, %v836
        %v839 = vunpack.c.l.s4 1934713408
        %v840 = vunpack.c.0.s8 %v839
        %v841 = vlaneseq
        %v842 = vshrl.u32 %v841, 7
        %v843 = vsub.s32 %v840, %v842
        %v844 = vrot.slane %v837, %v843
        %v845 = vcombine.high %v844, 0
        %v848 = vpack.i.b16 %v844, %v819
        %v850 = vshrl.u32 %v819, 16
        %v851 = vshrl.u32 %v844, 16
        %v852 = vpack.i.b16 %v851, %v850
        %v856 = vpack.i.b16 %v845, %v820
        %v858 = vshrl.u32 %v820, 16
        %v859 = vshrl.u32 %v845, 16
        %v860 = vpack.i.b16 %v859, %v858
        %vm862 = vcmask 60416
        %863 = vst.msk [vmem:[#allocation2] sm:$0xf] %vm862, %v848
        %864 = vst.msk [vmem:[#allocation2 + $0x4] sm:$0xf] %vm862, %v852
        %865 = vst.msk [vmem:[#allocation2 + $0x8] sm:$0xf] %vm862, %v856
        %866 = vst.msk [vmem:[#allocation2 + $0xc] sm:$0xf] %vm862, %v860
        %v867 = vpack.c.bf16 %v684, %v684
        %869 = vrot.lane.b32.xlu0 %v867, 120
        %v870 = vpop.permute.xlu0 %869
        %871 = vrot.lane.b32.xlu0 %v867, 112
        %v872 = vpop.permute.xlu0 %871
        %873 = vrot.lane.b32.xlu0 %v867, 104
        %v874 = vpop.permute.xlu0 %873
        %v876 = vunpack.c.l.s4 1983009808
        %v877 = vunpack.c.0.s8 %v876
        %v878 = vlaneseq
        %v879 = vshrl.u32 %v878, 7
        %v880 = vsub.s32 %v877, %v879
        %v881 = vrot.slane %v867, %v880
        %v884 = vunpack.c.l.s4 1983009808
        %v885 = vunpack.c.0.s8 %v884
        %v886 = vlaneseq
        %v887 = vshrl.u32 %v886, 7
        %v888 = vsub.s32 %v885, %v887
        %v889 = vrot.slane %v872, %v888
        %v890 = vcombine.low %v881, %v889
        %v891 = vcombine.high %v881, %v889
        %v893 = vunpack.c.l.s4 1934713408
        %v894 = vunpack.c.0.s8 %v893
        %v895 = vlaneseq
        %v896 = vshrl.u32 %v895, 7
        %v897 = vsub.s32 %v894, %v896
        %v898 = vrot.slane %v890, %v897
        %v900 = vunpack.c.l.s4 1934713408
        %v901 = vunpack.c.0.s8 %v900
        %v902 = vlaneseq
        %v903 = vshrl.u32 %v902, 7
        %v904 = vsub.s32 %v901, %v903
        %v905 = vrot.slane %v891, %v904
        %v906 = vcombine.high %v898, 0
        %v907 = vcombine.high %v905, 0
        %v910 = vunpack.c.l.s4 1983009808
        %v911 = vunpack.c.0.s8 %v910
        %v912 = vlaneseq
        %v913 = vshrl.u32 %v912, 7
        %v914 = vsub.s32 %v911, %v913
        %v915 = vrot.slane %v870, %v914
        %v918 = vunpack.c.l.s4 1983009808
        %v919 = vunpack.c.0.s8 %v918
        %v920 = vlaneseq
        %v921 = vshrl.u32 %v920, 7
        %v922 = vsub.s32 %v919, %v921
        %v923 = vrot.slane %v874, %v922
        %v924 = vcombine.low %v915, %v923
        %v925 = vcombine.high %v915, %v923
        %v927 = vunpack.c.l.s4 1934713408
        %v928 = vunpack.c.0.s8 %v927
        %v929 = vlaneseq
        %v930 = vshrl.u32 %v929, 7
        %v931 = vsub.s32 %v928, %v930
        %v932 = vrot.slane %v924, %v931
        %v934 = vunpack.c.l.s4 1934713408
        %v935 = vunpack.c.0.s8 %v934
        %v936 = vlaneseq
        %v937 = vshrl.u32 %v936, 7
        %v938 = vsub.s32 %v935, %v937
        %v939 = vrot.slane %v925, %v938
        %v940 = vcombine.high %v932, 0
        %v941 = vcombine.high %v939, 0
        %v944 = vpack.i.b16 %v932, %v898
        %v946 = vshrl.u32 %v898, 16
        %v947 = vshrl.u32 %v932, 16
        %v948 = vpack.i.b16 %v947, %v946
        %v952 = vpack.i.b16 %v940, %v906
        %v954 = vshrl.u32 %v906, 16
        %v955 = vshrl.u32 %v940, 16
        %v956 = vpack.i.b16 %v955, %v954
        %v960 = vpack.i.b16 %v939, %v905
        %v962 = vshrl.u32 %v905, 16
        %v963 = vshrl.u32 %v939, 16
        %v964 = vpack.i.b16 %v963, %v962
        %v968 = vpack.i.b16 %v941, %v907
        %v970 = vshrl.u32 %v907, 16
        %v971 = vshrl.u32 %v941, 16
        %v972 = vpack.i.b16 %v971, %v970
        %v974 = vcombine.low %v944, %v960
        %v976 = vunpack.c.l.s4 1983009808
        %v977 = vunpack.c.0.s8 %v976
        %v978 = vlaneseq
        %v979 = vshrl.u32 %v978, 7
        %v980 = vsub.s32 %v977, %v979
        %v981 = vrot.slane %v974, %v980
        %v982 = vcombine.low %v952, %v968
        %v984 = vunpack.c.l.s4 1983009808
        %v985 = vunpack.c.0.s8 %v984
        %v986 = vlaneseq
        %v987 = vshrl.u32 %v986, 7
        %v988 = vsub.s32 %v985, %v987
        %v989 = vrot.slane %v982, %v988
        %v990 = vcombine.low %v981, %v989
        %v992 = vunpack.c.l.s4 1934713408
        %v993 = vunpack.c.0.s8 %v992
        %v994 = vlaneseq
        %v995 = vshrl.u32 %v994, 7
        %v996 = vsub.s32 %v993, %v995
        %v997 = vrot.slane %v990, %v996
        %v998 = vcombine.high %v997, 0
        %v999 = vcombine.low %v948, %v964
        %v1001 = vunpack.c.l.s4 1983009808
        %v1002 = vunpack.c.0.s8 %v1001
        %v1003 = vlaneseq
        %v1004 = vshrl.u32 %v1003, 7
        %v1005 = vsub.s32 %v1002, %v1004
        %v1006 = vrot.slane %v999, %v1005
        %v1007 = vcombine.low %v956, %v972
        %v1009 = vunpack.c.l.s4 1983009808
        %v1010 = vunpack.c.0.s8 %v1009
        %v1011 = vlaneseq
        %v1012 = vshrl.u32 %v1011, 7
        %v1013 = vsub.s32 %v1010, %v1012
        %v1014 = vrot.slane %v1007, %v1013
        %v1015 = vcombine.low %v1006, %v1014
        %v1017 = vunpack.c.l.s4 1934713408
        %v1018 = vunpack.c.0.s8 %v1017
        %v1019 = vlaneseq
        %v1020 = vshrl.u32 %v1019, 7
        %v1021 = vsub.s32 %v1018, %v1020
        %v1022 = vrot.slane %v1015, %v1021
        %v1023 = vcombine.high %v1022, 0
        %v1026 = vpack.i.b16 %v1022, %v997
        %v1028 = vshrl.u32 %v997, 16
        %v1029 = vshrl.u32 %v1022, 16
        %v1030 = vpack.i.b16 %v1029, %v1028
        %v1034 = vpack.i.b16 %v1023, %v998
        %v1036 = vshrl.u32 %v998, 16
        %v1037 = vshrl.u32 %v1023, 16
        %v1038 = vpack.i.b16 %v1037, %v1036
        %1040 = vst.msk [vmem:[#allocation3] sm:$0xf] %vm862, %v1026
        %1041 = vst.msk [vmem:[#allocation3 + $0x4] sm:$0xf] %vm862, %v1030
        %1042 = vst.msk [vmem:[#allocation3 + $0x8] sm:$0xf] %vm862, %v1034
        %1043 = vst.msk [vmem:[#allocation3 + $0xc] sm:$0xf] %vm862, %v1038
      $region80: #{transformer_forward.15} parent=75 // pred_fallthru
        _
      %v1044 = vld [vmem:[%s531] sm:$0xf]
      %v1045 = vld [vmem:[%s4] sm:$0xf]
      %v1046 = vld [vmem:[%s4 + $0x4] sm:$0xf]
      %v1047 = vld [vmem:[%s4 + $0x8] sm:$0xf]
      %v1048 = vld [vmem:[%s4 + $0xc] sm:$0xf]
      %v1049 = vld [vmem:[%s5] sm:$0x1]
      %v1051 = vlaneseq
      %v1052 = vshrl.u32 %v1051, 7
      %v1053 = vsub.s32 0, %v1052
      %v1054 = vrot.slane %v1049, %v1053
      %v1060 = vunpack.c.l.b16 %v1045
      %v1061 = vunpack.c.l.b16 %v1046
      %v1062 = vunpack.c.l.b16 %v1047
      %v1063 = vunpack.c.l.b16 %v1048
      %v1064 = vpack.c.b16 %v1061, %v1060
      %v1065 = vpack.c.b16 %v1063, %v1062
      %vm1068 = vcmask 261120
      %v1070 = vsel %vm1068, %v1044, 0
      %1072 = vmatprep.subr.bf16.mxu0 0
      %1073 = vmatpush1.bf16.msra.mxu0 %v1064
      %1074 = vmatprep.subr.bf16.mxu0 0
      %1075 = vmatpush1.bf16.msra.mxu0 %v1065
      %1076 = vmatprep.subr.bf16.mxu0 0
      %1077 = vmatpush1.bf16.msra.mxu0 0
      %1078 = vmatprep.subr.bf16.mxu0 0
      %1079 = vmatpush1.bf16.msra.mxu0 0
      %1080 = vmatprep.subr.bf16.mxu0 0
      %1081 = vmatpush1.bf16.msra.mxu0 0
      %1082 = vmatprep.subr.bf16.mxu0 0
      %1083 = vmatpush1.bf16.msra.mxu0 0
      %1084 = vmatprep.subr.bf16.mxu0 0
      %1085 = vmatpush1.bf16.msra.mxu0 0
      %1086 = vmatprep.subr.bf16.mxu0 0
      %1087 = vmatpush1.bf16.msra.mxu0 0
      %1088 = vmatprep.subr.bf16.mxu0 0
      %1089 = vmatpush1.bf16.msra.mxu0 0
      %1090 = vmatprep.subr.bf16.mxu0 0
      %1091 = vmatpush1.bf16.msra.mxu0 0
      %1092 = vmatprep.subr.bf16.mxu0 0
      %1093 = vmatpush1.bf16.msra.mxu0 0
      %1094 = vmatprep.subr.bf16.mxu0 0
      %1095 = vmatpush1.bf16.msra.mxu0 0
      %1096 = vmatprep.subr.bf16.mxu0 0
      %1097 = vmatpush1.bf16.msra.mxu0 0
      %1098 = vmatprep.subr.bf16.mxu0 0
      %1099 = vmatpush1.bf16.msra.mxu0 0
      %1100 = vmatprep.subr.bf16.mxu0 0
      %1101 = vmatpush1.bf16.msra.mxu0 0
      %1102 = vmatprep.subr.bf16.mxu0 0
      %1103 = vmatpush1.bf16.msra.mxu0 0
      %1104 = vmatprep.mubr.bf16.mxu0 0
      %1105 = vmatmul.mubr.bf16.gmra.mrb[0].mxu0 %v1070
      %v1106 = vpop.f32.mrb[0].mxu0
      %v1107 = vadd.f32 %v1054, %v1106
      %v1108 = vpop.f32.mrb[0].mxu0
      %v1109 = vpop.f32.mrb[0].mxu0
      %v1110 = vpop.f32.mrb[0].mxu0
      %1111 = vdwg.mxu0
      %v1112 = vmul.f32 %v1107, 0.35355338
      %v1113 = vpack.c.bf16 %v1112, %v1112
      %1115 = vrot.lane.b32.xlu0 %v1113, 120
      %v1116 = vpop.permute.xlu0 %1115
      %1117 = vrot.lane.b32.xlu0 %v1113, 112
      %v1118 = vpop.permute.xlu0 %1117
      %1119 = vrot.lane.b32.xlu0 %v1113, 104
      %v1120 = vpop.permute.xlu0 %1119
      %v1122 = vunpack.c.l.s4 1983009808
      %v1123 = vunpack.c.0.s8 %v1122
      %v1124 = vlaneseq
      %v1125 = vshrl.u32 %v1124, 7
      %v1126 = vsub.s32 %v1123, %v1125
      %v1127 = vrot.slane %v1113, %v1126
      %v1130 = vunpack.c.l.s4 1983009808
      %v1131 = vunpack.c.0.s8 %v1130
      %v1132 = vlaneseq
      %v1133 = vshrl.u32 %v1132, 7
      %v1134 = vsub.s32 %v1131, %v1133
      %v1135 = vrot.slane %v1118, %v1134
      %v1136 = vcombine.low %v1127, %v1135
      %v1137 = vcombine.high %v1127, %v1135
      %v1139 = vunpack.c.l.s4 1934713408
      %v1140 = vunpack.c.0.s8 %v1139
      %v1141 = vlaneseq
      %v1142 = vshrl.u32 %v1141, 7
      %v1143 = vsub.s32 %v1140, %v1142
      %v1144 = vrot.slane %v1136, %v1143
      %v1146 = vunpack.c.l.s4 1934713408
      %v1147 = vunpack.c.0.s8 %v1146
      %v1148 = vlaneseq
      %v1149 = vshrl.u32 %v1148, 7
      %v1150 = vsub.s32 %v1147, %v1149
      %v1151 = vrot.slane %v1137, %v1150
      %v1152 = vcombine.high %v1144, 0
      %v1153 = vcombine.high %v1151, 0
      %v1156 = vunpack.c.l.s4 1983009808
      %v1157 = vunpack.c.0.s8 %v1156
      %v1158 = vlaneseq
      %v1159 = vshrl.u32 %v1158, 7
      %v1160 = vsub.s32 %v1157, %v1159
      %v1161 = vrot.slane %v1116, %v1160
      %v1164 = vunpack.c.l.s4 1983009808
      %v1165 = vunpack.c.0.s8 %v1164
      %v1166 = vlaneseq
      %v1167 = vshrl.u32 %v1166, 7
      %v1168 = vsub.s32 %v1165, %v1167
      %v1169 = vrot.slane %v1120, %v1168
      %v1170 = vcombine.low %v1161, %v1169
      %v1171 = vcombine.high %v1161, %v1169
      %v1173 = vunpack.c.l.s4 1934713408
      %v1174 = vunpack.c.0.s8 %v1173
      %v1175 = vlaneseq
      %v1176 = vshrl.u32 %v1175, 7
      %v1177 = vsub.s32 %v1174, %v1176
      %v1178 = vrot.slane %v1170, %v1177
      %v1180 = vunpack.c.l.s4 1934713408
      %v1181 = vunpack.c.0.s8 %v1180
      %v1182 = vlaneseq
      %v1183 = vshrl.u32 %v1182, 7
      %v1184 = vsub.s32 %v1181, %v1183
      %v1185 = vrot.slane %v1171, %v1184
      %v1186 = vcombine.high %v1178, 0
      %v1187 = vcombine.high %v1185, 0
      %v1190 = vpack.i.b16 %v1178, %v1144
      %v1192 = vshrl.u32 %v1144, 16
      %v1193 = vshrl.u32 %v1178, 16
      %v1194 = vpack.i.b16 %v1193, %v1192
      %v1198 = vpack.i.b16 %v1186, %v1152
      %v1200 = vshrl.u32 %v1152, 16
      %v1201 = vshrl.u32 %v1186, 16
      %v1202 = vpack.i.b16 %v1201, %v1200
      %v1206 = vpack.i.b16 %v1185, %v1151
      %v1208 = vshrl.u32 %v1151, 16
      %v1209 = vshrl.u32 %v1185, 16
      %v1210 = vpack.i.b16 %v1209, %v1208
      %v1214 = vpack.i.b16 %v1187, %v1153
      %v1216 = vshrl.u32 %v1153, 16
      %v1217 = vshrl.u32 %v1187, 16
      %v1218 = vpack.i.b16 %v1217, %v1216
      %v1220 = vcombine.low %v1190, %v1206
      %v1222 = vunpack.c.l.s4 1983009808
      %v1223 = vunpack.c.0.s8 %v1222
      %v1224 = vlaneseq
      %v1225 = vshrl.u32 %v1224, 7
      %v1226 = vsub.s32 %v1223, %v1225
      %v1227 = vrot.slane %v1220, %v1226
      %v1228 = vcombine.low %v1198, %v1214
      %v1230 = vunpack.c.l.s4 1983009808
      %v1231 = vunpack.c.0.s8 %v1230
      %v1232 = vlaneseq
      %v1233 = vshrl.u32 %v1232, 7
      %v1234 = vsub.s32 %v1231, %v1233
      %v1235 = vrot.slane %v1228, %v1234
      %v1236 = vcombine.low %v1227, %v1235
      %v1238 = vunpack.c.l.s4 1934713408
      %v1239 = vunpack.c.0.s8 %v1238
      %v1240 = vlaneseq
      %v1241 = vshrl.u32 %v1240, 7
      %v1242 = vsub.s32 %v1239, %v1241
      %v1243 = vrot.slane %v1236, %v1242
      %v1244 = vcombine.high %v1243, 0
      %v1245 = vcombine.low %v1194, %v1210
      %v1247 = vunpack.c.l.s4 1983009808
      %v1248 = vunpack.c.0.s8 %v1247
      %v1249 = vlaneseq
      %v1250 = vshrl.u32 %v1249, 7
      %v1251 = vsub.s32 %v1248, %v1250
      %v1252 = vrot.slane %v1245, %v1251
      %v1253 = vcombine.low %v1202, %v1218
      %v1255 = vunpack.c.l.s4 1983009808
      %v1256 = vunpack.c.0.s8 %v1255
      %v1257 = vlaneseq
      %v1258 = vshrl.u32 %v1257, 7
      %v1259 = vsub.s32 %v1256, %v1258
      %v1260 = vrot.slane %v1253, %v1259
      %v1261 = vcombine.low %v1252, %v1260
      %v1263 = vunpack.c.l.s4 1934713408
      %v1264 = vunpack.c.0.s8 %v1263
      %v1265 = vlaneseq
      %v1266 = vshrl.u32 %v1265, 7
      %v1267 = vsub.s32 %v1264, %v1266
      %v1268 = vrot.slane %v1261, %v1267
      %v1269 = vcombine.high %v1268, 0
      %v1272 = vpack.i.b16 %v1268, %v1243
      %v1273 = vshrl.u32 %v1243, 16
      %v1274 = vshrl.u32 %v1268, 16
      %v1275 = vpack.i.b16 %v1274, %v1273
      %v1278 = vpack.i.b16 %v1269, %v1244
      %v1279 = vshrl.u32 %v1244, 16
      %v1280 = vshrl.u32 %v1269, 16
      %v1281 = vpack.i.b16 %v1280, %v1279
      %v1282 = vld [vmem:[%s542] sm:$0xff]
      %vm1283 = vcmp.ne.s32.totalorder %v1282, 0
      %v1284 = vld [vmem:[%s545] sm:$0x1]
      %vm1285 = vcmp.ne.s32.totalorder %v1284, 0
      %v1286 = vsel %vm1283, 1, 0
      %1287 = vset.pattern.permute.xlu0 0
      %1288 = vperm.xlu0 %1287, %v1286
      %v1289 = vpop.permute.xlu0 %1288
      %vm1290 = vcmp.eq.s32.totalorder %v1289, 1
      %v1291 = vsel %vm1285, 1, 0
      %v1292 = vlaneseq
      %v1293 = vshrl.u32 %v1292, 7
      %v1294 = vsub.s32 0, %v1293
      %v1295 = vrot.slane %v1291, %v1294
      %vm1296 = vcmp.eq.s32.totalorder %v1295, 1
      %vm1297 = vmand %vm1290, %vm1296
      %s1298 = smul.u32 %s30, 8
      %v1299 = vlaneseq
      %v1300 = vshrl.u32 %v1299, 7
      %v1301 = vstv %s1298
      %v1302 = vadd.s32 %v1301, %v1300
      %v1303 = vlaneseq
      %v1304 = vand.u32 %v1303, 127
      %vm1305 = vcmp.le.s32.totalorder %v1304, %v1302
      %vm1306 = vmand %vm1297, %vm1305
      %v1307 = vsel %vm1306, 0.0, -1e+09
      %v1308 = vld [vmem:[#allocation2] sm:$0xf]
      %v1309 = vld [vmem:[#allocation2 + $0x4] sm:$0xf]
      %v1310 = vld [vmem:[#allocation2 + $0x8] sm:$0xf]
      %v1311 = vld [vmem:[#allocation2 + $0xc] sm:$0xf]
      %vm1312 = vcmask 64512
      %v1314 = vsel %vm1312, %v1272, 0
      %v1317 = vsel %vm1312, %v1308, 0
      %1319 = vmatprep.subr.bf16.mxu0 0
      %1320 = vmatpush1.bf16.xpose.msra.mxu0 %v1317
      %1321 = vmatprep.subr.bf16.mxu0 0
      %1322 = vmatpush1.bf16.xpose.msra.mxu0 0
      %1323 = vmatprep.subr.bf16.mxu0 0
      %1324 = vmatpush1.bf16.xpose.msra.mxu0 0
      %1325 = vmatprep.subr.bf16.mxu0 0
      %1326 = vmatpush1.bf16.xpose.msra.mxu0 0
      %1327 = vmatprep.subr.bf16.mxu0 0
      %1328 = vmatpush1.bf16.xpose.msra.mxu0 0
      %1329 = vmatprep.subr.bf16.mxu0 0
      %1330 = vmatpush1.bf16.xpose.msra.mxu0 0
      %1331 = vmatprep.subr.bf16.mxu0 0
      %1332 = vmatpush1.bf16.xpose.msra.mxu0 0
      %1333 = vmatprep.subr.bf16.mxu0 0
      %1334 = vmatpush1.bf16.xpose.msra.mxu0 0
      %1335 = vmatprep.subr.bf16.mxu0 0
      %1336 = vmatpush1.bf16.xpose.msra.mxu0 0
      %1337 = vmatprep.subr.bf16.mxu0 0
      %1338 = vmatpush1.bf16.xpose.msra.mxu0 0
      %1339 = vmatprep.subr.bf16.mxu0 0
      %1340 = vmatpush1.bf16.xpose.msra.mxu0 0
      %1341 = vmatprep.subr.bf16.mxu0 0
      %1342 = vmatpush1.bf16.xpose.msra.mxu0 0
      %1343 = vmatprep.subr.bf16.mxu0 0
      %1344 = vmatpush1.bf16.xpose.msra.mxu0 0
      %1345 = vmatprep.subr.bf16.mxu0 0
      %1346 = vmatpush1.bf16.xpose.msra.mxu0 0
      %1347 = vmatprep.subr.bf16.mxu0 0
      %1348 = vmatpush1.bf16.xpose.msra.mxu0 0
      %1349 = vmatprep.subr.bf16.mxu0 0
      %1350 = vmatpush1.bf16.xpose.msra.mxu0 0
      %1351 = vmatprep.mubr.bf16.mxu0 0
      %1352 = vmatmul.mubr.bf16.gmra.mrb[0].mxu0 %v1314
      %v1353 = vpop.f32.mrb[0].mxu0
      %v1354 = vadd.f32 %v1307, %v1353
      %v1355 = vpop.f32.mrb[0].mxu0
      %v1356 = vpop.f32.mrb[0].mxu0
      %v1357 = vpop.f32.mrb[0].mxu0
      %1358 = vdwg.mxu0
      %v1360 = vsel %vm1312, %v1275, 0
      %v1363 = vsel %vm1312, %v1309, 0
      %1365 = vmatprep.subr.bf16.mxu0 0
      %1366 = vmatpush1.bf16.xpose.msra.mxu0 %v1363
      %1367 = vmatprep.subr.bf16.mxu0 0
      %1368 = vmatpush1.bf16.xpose.msra.mxu0 0
      %1369 = vmatprep.subr.bf16.mxu0 0
      %1370 = vmatpush1.bf16.xpose.msra.mxu0 0
      %1371 = vmatprep.subr.bf16.mxu0 0
      %1372 = vmatpush1.bf16.xpose.msra.mxu0 0
      %1373 = vmatprep.subr.bf16.mxu0 0
      %1374 = vmatpush1.bf16.xpose.msra.mxu0 0
      %1375 = vmatprep.subr.bf16.mxu0 0
      %1376 = vmatpush1.bf16.xpose.msra.mxu0 0
      %1377 = vmatprep.subr.bf16.mxu0 0
      %1378 = vmatpush1.bf16.xpose.msra.mxu0 0
      %1379 = vmatprep.subr.bf16.mxu0 0
      %1380 = vmatpush1.bf16.xpose.msra.mxu0 0
      %1381 = vmatprep.subr.bf16.mxu0 0
      %1382 = vmatpush1.bf16.xpose.msra.mxu0 0
      %1383 = vmatprep.subr.bf16.mxu0 0
      %1384 = vmatpush1.bf16.xpose.msra.mxu0 0
      %1385 = vmatprep.subr.bf16.mxu0 0
      %1386 = vmatpush1.bf16.xpose.msra.mxu0 0
      %1387 = vmatprep.subr.bf16.mxu0 0
      %1388 = vmatpush1.bf16.xpose.msra.mxu0 0
      %1389 = vmatprep.subr.bf16.mxu0 0
      %1390 = vmatpush1.bf16.xpose.msra.mxu0 0
      %1391 = vmatprep.subr.bf16.mxu0 0
      %1392 = vmatpush1.bf16.xpose.msra.mxu0 0
      %1393 = vmatprep.subr.bf16.mxu0 0
      %1394 = vmatpush1.bf16.xpose.msra.mxu0 0
      %1395 = vmatprep.subr.bf16.mxu0 0
      %1396 = vmatpush1.bf16.xpose.msra.mxu0 0
      %1397 = vmatprep.mubr.bf16.mxu0 0
      %1398 = vmatmul.mubr.bf16.gmra.mrb[0].mxu0 %v1360
      %v1399 = vpop.f32.mrb[0].mxu0
      %v1400 = vadd.f32 %v1307, %v1399
      %v1401 = vpop.f32.mrb[0].mxu0
      %v1402 = vpop.f32.mrb[0].mxu0
      %v1403 = vpop.f32.mrb[0].mxu0
      %1404 = vdwg.mxu0
      %v1406 = vsel %vm1312, %v1278, 0
      %v1409 = vsel %vm1312, %v1310, 0
      %1411 = vmatprep.subr.bf16.mxu0 0
      %1412 = vmatpush1.bf16.xpose.msra.mxu0 %v1409
      %1413 = vmatprep.subr.bf16.mxu0 0
      %1414 = vmatpush1.bf16.xpose.msra.mxu0 0
      %1415 = vmatprep.subr.bf16.mxu0 0
      %1416 = vmatpush1.bf16.xpose.msra.mxu0 0
      %1417 = vmatprep.subr.bf16.mxu0 0
      %1418 = vmatpush1.bf16.xpose.msra.mxu0 0
      %1419 = vmatprep.subr.bf16.mxu0 0
      %1420 = vmatpush1.bf16.xpose.msra.mxu0 0
      %1421 = vmatprep.subr.bf16.mxu0 0
      %1422 = vmatpush1.bf16.xpose.msra.mxu0 0
      %1423 = vmatprep.subr.bf16.mxu0 0
      %1424 = vmatpush1.bf16.xpose.msra.mxu0 0
      %1425 = vmatprep.subr.bf16.mxu0 0
      %1426 = vmatpush1.bf16.xpose.msra.mxu0 0
      %1427 = vmatprep.subr.bf16.mxu0 0
      %1428 = vmatpush1.bf16.xpose.msra.mxu0 0
      %1429 = vmatprep.subr.bf16.mxu0 0
      %1430 = vmatpush1.bf16.xpose.msra.mxu0 0
      %1431 = vmatprep.subr.bf16.mxu0 0
      %1432 = vmatpush1.bf16.xpose.msra.mxu0 0
      %1433 = vmatprep.subr.bf16.mxu0 0
      %1434 = vmatpush1.bf16.xpose.msra.mxu0 0
      %1435 = vmatprep.subr.bf16.mxu0 0
      %1436 = vmatpush1.bf16.xpose.msra.mxu0 0
      %1437 = vmatprep.subr.bf16.mxu0 0
      %1438 = vmatpush1.bf16.xpose.msra.mxu0 0
      %1439 = vmatprep.subr.bf16.mxu0 0
      %1440 = vmatpush1.bf16.xpose.msra.mxu0 0
      %1441 = vmatprep.subr.bf16.mxu0 0
      %1442 = vmatpush1.bf16.xpose.msra.mxu0 0
      %1443 = vmatprep.mubr.bf16.mxu0 0
      %1444 = vmatmul.mubr.bf16.gmra.mrb[0].mxu0 %v1406
      %v1445 = vpop.f32.mrb[0].mxu0
      %v1446 = vadd.f32 %v1307, %v1445
      %v1447 = vpop.f32.mrb[0].mxu0
      %v1448 = vpop.f32.mrb[0].mxu0
      %v1449 = vpop.f32.mrb[0].mxu0
      %1450 = vdwg.mxu0
      %v1452 = vsel %vm1312, %v1281, 0
      %v1455 = vsel %vm1312, %v1311, 0
      %1457 = vmatprep.subr.bf16.mxu0 0
      %1458 = vmatpush1.bf16.xpose.msra.mxu0 %v1455
      %1459 = vmatprep.subr.bf16.mxu0 0
      %1460 = vmatpush1.bf16.xpose.msra.mxu0 0
      %1461 = vmatprep.subr.bf16.mxu0 0
      %1462 = vmatpush1.bf16.xpose.msra.mxu0 0
      %1463 = vmatprep.subr.bf16.mxu0 0
      %1464 = vmatpush1.bf16.xpose.msra.mxu0 0
      %1465 = vmatprep.subr.bf16.mxu0 0
      %1466 = vmatpush1.bf16.xpose.msra.mxu0 0
      %1467 = vmatprep.subr.bf16.mxu0 0
      %1468 = vmatpush1.bf16.xpose.msra.mxu0 0
      %1469 = vmatprep.subr.bf16.mxu0 0
      %1470 = vmatpush1.bf16.xpose.msra.mxu0 0
      %1471 = vmatprep.subr.bf16.mxu0 0
      %1472 = vmatpush1.bf16.xpose.msra.mxu0 0
      %1473 = vmatprep.subr.bf16.mxu0 0
      %1474 = vmatpush1.bf16.xpose.msra.mxu0 0
      %1475 = vmatprep.subr.bf16.mxu0 0
      %1476 = vmatpush1.bf16.xpose.msra.mxu0 0
      %1477 = vmatprep.subr.bf16.mxu0 0
      %1478 = vmatpush1.bf16.xpose.msra.mxu0 0
      %1479 = vmatprep.subr.bf16.mxu0 0
      %1480 = vmatpush1.bf16.xpose.msra.mxu0 0
      %1481 = vmatprep.subr.bf16.mxu0 0
      %1482 = vmatpush1.bf16.xpose.msra.mxu0 0
      %1483 = vmatprep.subr.bf16.mxu0 0
      %1484 = vmatpush1.bf16.xpose.msra.mxu0 0
      %1485 = vmatprep.subr.bf16.mxu0 0
      %1486 = vmatpush1.bf16.xpose.msra.mxu0 0
      %1487 = vmatprep.subr.bf16.mxu0 0
      %1488 = vmatpush1.bf16.xpose.msra.mxu0 0
      %1489 = vmatprep.mubr.bf16.mxu0 0
      %1490 = vmatmul.mubr.bf16.gmra.mrb[0].mxu0 %v1452
      %v1491 = vpop.f32.mrb[0].mxu0
      %v1492 = vadd.f32 %v1307, %v1491
      %v1493 = vpop.f32.mrb[0].mxu0
      %v1494 = vpop.f32.mrb[0].mxu0
      %v1495 = vpop.f32.mrb[0].mxu0
      %1496 = vdwg.mxu0
      %v1497 = vsel %vm1312, %v1354, -inf
      %1498 = vmax.xlane.f32.xlu0 %v1497
      %v1499 = vpop.xlane.xlu0 %1498
      %v1500 = vsel %vm1312, %v1400, -inf
      %1501 = vmax.xlane.f32.xlu0 %v1500
      %v1502 = vpop.xlane.xlu0 %1501
      %v1503 = vsel %vm1312, %v1446, -inf
      %1504 = vmax.xlane.f32.xlu0 %v1503
      %v1505 = vpop.xlane.xlu0 %1504
      %v1506 = vsel %vm1312, %v1492, -inf
      %1507 = vmax.xlane.f32.xlu0 %v1506
      %v1508 = vpop.xlane.xlu0 %1507
      %v1509 = vsub.f32 %v1354, %v1499
      %v1510 = vsub.f32 %v1400, %v1502
      %v1511 = vsub.f32 %v1446, %v1505
      %v1512 = vsub.f32 %v1492, %v1508
      %v1513 = vmul.f32 %v1509, 1.442695
      %v1514 = vpow.pop %v1513
      %v1515 = vmul.f32 %v1510, 1.442695
      %v1516 = vpow.pop %v1515
      %v1517 = vmul.f32 %v1511, 1.442695
      %v1518 = vpow.pop %v1517
      %v1519 = vmul.f32 %v1512, 1.442695
      %v1520 = vpow.pop %v1519
      %v1521 = vsel %vm1312, %v1514, 0.0
      %1522 = vadd.xlane.f32.xlu0 %v1521
      %v1523 = vpop.xlane.xlu0 %1522
      %v1524 = vsel %vm1312, %v1516, 0.0
      %1525 = vadd.xlane.f32.xlu0 %v1524
      %v1526 = vpop.xlane.xlu0 %1525
      %v1527 = vsel %vm1312, %v1518, 0.0
      %1528 = vadd.xlane.f32.xlu0 %v1527
      %v1529 = vpop.xlane.xlu0 %1528
      %v1530 = vsel %vm1312, %v1520, 0.0
      %1531 = vadd.xlane.f32.xlu0 %v1530
      %v1532 = vpop.xlane.xlu0 %1531
      %v1533 = vrcp.pop %v1523
      %v1534 = vrcp.pop %v1526
      %v1535 = vrcp.pop %v1529
      %v1536 = vrcp.pop %v1532
      %v1537 = vmul.f32 %v1514, %v1533
      %v1538 = vmul.f32 %v1516, %v1534
      %v1539 = vmul.f32 %v1518, %v1535
      %v1540 = vmul.f32 %v1520, %v1536
      %v1541 = vpack.c.bf16 %v1537, %v1537
      %v1542 = vpack.c.bf16 %v1538, %v1538
      %v1543 = vpack.c.bf16 %v1539, %v1539
      %v1544 = vpack.c.bf16 %v1540, %v1540
      %v1545 = vld [vmem:[#allocation3] sm:$0xf]
      %v1546 = vld [vmem:[#allocation3 + $0x4] sm:$0xf]
      %v1547 = vld [vmem:[#allocation3 + $0x8] sm:$0xf]
      %v1548 = vld [vmem:[#allocation3 + $0xc] sm:$0xf]
      %v1550 = vsel %vm1312, %v1541, 0
      %vm1552 = vcmask 1043456
      %v1554 = vsel %vm1552, %v1545, 0
      %1556 = vmatprep.subr.bf16.mxu0 0
      %1557 = vmatpush1.bf16.msra.mxu0 %v1554
      %1558 = vmatprep.subr.bf16.mxu0 0
      %1559 = vmatpush1.bf16.msra.mxu0 0
      %1560 = vmatprep.subr.bf16.mxu0 0
      %1561 = vmatpush1.bf16.msra.mxu0 0
      %1562 = vmatprep.subr.bf16.mxu0 0
      %1563 = vmatpush1.bf16.msra.mxu0 0
      %1564 = vmatprep.subr.bf16.mxu0 0
      %1565 = vmatpush1.bf16.msra.mxu0 0
      %1566 = vmatprep.subr.bf16.mxu0 0
      %1567 = vmatpush1.bf16.msra.mxu0 0
      %1568 = vmatprep.subr.bf16.mxu0 0
      %1569 = vmatpush1.bf16.msra.mxu0 0
      %1570 = vmatprep.subr.bf16.mxu0 0
      %1571 = vmatpush1.bf16.msra.mxu0 0
      %1572 = vmatprep.subr.bf16.mxu0 0
      %1573 = vmatpush1.bf16.msra.mxu0 0
      %1574 = vmatprep.subr.bf16.mxu0 0
      %1575 = vmatpush1.bf16.msra.mxu0 0
      %1576 = vmatprep.subr.bf16.mxu0 0
      %1577 = vmatpush1.bf16.msra.mxu0 0
      %1578 = vmatprep.subr.bf16.mxu0 0
      %1579 = vmatpush1.bf16.msra.mxu0 0
      %1580 = vmatprep.subr.bf16.mxu0 0
      %1581 = vmatpush1.bf16.msra.mxu0 0
      %1582 = vmatprep.subr.bf16.mxu0 0
      %1583 = vmatpush1.bf16.msra.mxu0 0
      %1584 = vmatprep.subr.bf16.mxu0 0
      %1585 = vmatpush1.bf16.msra.mxu0 0
      %1586 = vmatprep.subr.bf16.mxu0 0
      %1587 = vmatpush1.bf16.msra.mxu0 0
      %1588 = vmatprep.mubr.bf16.mxu0 0
      %1589 = vmatmul.mubr.bf16.gmra.mrb[0].mxu0 %v1550
      %v1590 = vpop.f32.mrb[0].mxu0
      %v1591 = vadd.f32 0.0, %v1590
      %v1592 = vpop.f32.mrb[0].mxu0
      %v1593 = vpop.f32.mrb[0].mxu0
      %v1594 = vpop.f32.mrb[0].mxu0
      %1595 = vdwg.mxu0
      %v1597 = vsel %vm1312, %v1542, 0
      %v1600 = vsel %vm1552, %v1546, 0
      %1602 = vmatprep.subr.bf16.mxu0 0
      %1603 = vmatpush1.bf16.msra.mxu0 %v1600
      %1604 = vmatprep.subr.bf16.mxu0 0
      %1605 = vmatpush1.bf16.msra.mxu0 0
      %1606 = vmatprep.subr.bf16.mxu0 0
      %1607 = vmatpush1.bf16.msra.mxu0 0
      %1608 = vmatprep.subr.bf16.mxu0 0
      %1609 = vmatpush1.bf16.msra.mxu0 0
      %1610 = vmatprep.subr.bf16.mxu0 0
      %1611 = vmatpush1.bf16.msra.mxu0 0
      %1612 = vmatprep.subr.bf16.mxu0 0
      %1613 = vmatpush1.bf16.msra.mxu0 0
      %1614 = vmatprep.subr.bf16.mxu0 0
      %1615 = vmatpush1.bf16.msra.mxu0 0
      %1616 = vmatprep.subr.bf16.mxu0 0
      %1617 = vmatpush1.bf16.msra.mxu0 0
      %1618 = vmatprep.subr.bf16.mxu0 0
      %1619 = vmatpush1.bf16.msra.mxu0 0
      %1620 = vmatprep.subr.bf16.mxu0 0
      %1621 = vmatpush1.bf16.msra.mxu0 0
      %1622 = vmatprep.subr.bf16.mxu0 0
      %1623 = vmatpush1.bf16.msra.mxu0 0
      %1624 = vmatprep.subr.bf16.mxu0 0
      %1625 = vmatpush1.bf16.msra.mxu0 0
      %1626 = vmatprep.subr.bf16.mxu0 0
      %1627 = vmatpush1.bf16.msra.mxu0 0
      %1628 = vmatprep.subr.bf16.mxu0 0
      %1629 = vmatpush1.bf16.msra.mxu0 0
      %1630 = vmatprep.subr.bf16.mxu0 0
      %1631 = vmatpush1.bf16.msra.mxu0 0
      %1632 = vmatprep.subr.bf16.mxu0 0
      %1633 = vmatpush1.bf16.msra.mxu0 0
      %1634 = vmatprep.mubr.bf16.mxu0 0
      %1635 = vmatmul.mubr.bf16.gmra.mrb[0].mxu0 %v1597
      %v1636 = vpop.f32.mrb[0].mxu0
      %v1637 = vadd.f32 0.0, %v1636
      %v1638 = vpop.f32.mrb[0].mxu0
      %v1639 = vpop.f32.mrb[0].mxu0
      %v1640 = vpop.f32.mrb[0].mxu0
      %1641 = vdwg.mxu0
      %v1643 = vsel %vm1312, %v1543, 0
      %v1646 = vsel %vm1552, %v1547, 0
      %1648 = vmatprep.subr.bf16.mxu0 0
      %1649 = vmatpush1.bf16.msra.mxu0 %v1646
      %1650 = vmatprep.subr.bf16.mxu0 0
      %1651 = vmatpush1.bf16.msra.mxu0 0
      %1652 = vmatprep.subr.bf16.mxu0 0
      %1653 = vmatpush1.bf16.msra.mxu0 0
      %1654 = vmatprep.subr.bf16.mxu0 0
      %1655 = vmatpush1.bf16.msra.mxu0 0
      %1656 = vmatprep.subr.bf16.mxu0 0
      %1657 = vmatpush1.bf16.msra.mxu0 0
      %1658 = vmatprep.subr.bf16.mxu0 0
      %1659 = vmatpush1.bf16.msra.mxu0 0
      %1660 = vmatprep.subr.bf16.mxu0 0
      %1661 = vmatpush1.bf16.msra.mxu0 0
      %1662 = vmatprep.subr.bf16.mxu0 0
      %1663 = vmatpush1.bf16.msra.mxu0 0
      %1664 = vmatprep.subr.bf16.mxu0 0
      %1665 = vmatpush1.bf16.msra.mxu0 0
      %1666 = vmatprep.subr.bf16.mxu0 0
      %1667 = vmatpush1.bf16.msra.mxu0 0
      %1668 = vmatprep.subr.bf16.mxu0 0
      %1669 = vmatpush1.bf16.msra.mxu0 0
      %1670 = vmatprep.subr.bf16.mxu0 0
      %1671 = vmatpush1.bf16.msra.mxu0 0
      %1672 = vmatprep.subr.bf16.mxu0 0
      %1673 = vmatpush1.bf16.msra.mxu0 0
      %1674 = vmatprep.subr.bf16.mxu0 0
      %1675 = vmatpush1.bf16.msra.mxu0 0
      %1676 = vmatprep.subr.bf16.mxu0 0
      %1677 = vmatpush1.bf16.msra.mxu0 0
      %1678 = vmatprep.subr.bf16.mxu0 0
      %1679 = vmatpush1.bf16.msra.mxu0 0
      %1680 = vmatprep.mubr.bf16.mxu0 0
      %1681 = vmatmul.mubr.bf16.gmra.mrb[0].mxu0 %v1643
      %v1682 = vpop.f32.mrb[0].mxu0
      %v1683 = vadd.f32 0.0, %v1682
      %v1684 = vpop.f32.mrb[0].mxu0
      %v1685 = vpop.f32.mrb[0].mxu0
      %v1686 = vpop.f32.mrb[0].mxu0
      %1687 = vdwg.mxu0
      %v1689 = vsel %vm1312, %v1544, 0
      %v1692 = vsel %vm1552, %v1548, 0
      %1694 = vmatprep.subr.bf16.mxu0 0
      %1695 = vmatpush1.bf16.msra.mxu0 %v1692
      %1696 = vmatprep.subr.bf16.mxu0 0
      %1697 = vmatpush1.bf16.msra.mxu0 0
      %1698 = vmatprep.subr.bf16.mxu0 0
      %1699 = vmatpush1.bf16.msra.mxu0 0
      %1700 = vmatprep.subr.bf16.mxu0 0
      %1701 = vmatpush1.bf16.msra.mxu0 0
      %1702 = vmatprep.subr.bf16.mxu0 0
      %1703 = vmatpush1.bf16.msra.mxu0 0
      %1704 = vmatprep.subr.bf16.mxu0 0
      %1705 = vmatpush1.bf16.msra.mxu0 0
      %1706 = vmatprep.subr.bf16.mxu0 0
      %1707 = vmatpush1.bf16.msra.mxu0 0
      %1708 = vmatprep.subr.bf16.mxu0 0
      %1709 = vmatpush1.bf16.msra.mxu0 0
      %1710 = vmatprep.subr.bf16.mxu0 0
      %1711 = vmatpush1.bf16.msra.mxu0 0
      %1712 = vmatprep.subr.bf16.mxu0 0
      %1713 = vmatpush1.bf16.msra.mxu0 0
      %1714 = vmatprep.subr.bf16.mxu0 0
      %1715 = vmatpush1.bf16.msra.mxu0 0
      %1716 = vmatprep.subr.bf16.mxu0 0
      %1717 = vmatpush1.bf16.msra.mxu0 0
      %1718 = vmatprep.subr.bf16.mxu0 0
      %1719 = vmatpush1.bf16.msra.mxu0 0
      %1720 = vmatprep.subr.bf16.mxu0 0
      %1721 = vmatpush1.bf16.msra.mxu0 0
      %1722 = vmatprep.subr.bf16.mxu0 0
      %1723 = vmatpush1.bf16.msra.mxu0 0
      %1724 = vmatprep.subr.bf16.mxu0 0
      %1725 = vmatpush1.bf16.msra.mxu0 0
      %1726 = vmatprep.mubr.bf16.mxu0 0
      %1727 = vmatmul.mubr.bf16.gmra.mrb[0].mxu0 %v1689
      %v1728 = vpop.f32.mrb[0].mxu0
      %v1729 = vadd.f32 0.0, %v1728
      %v1730 = vpop.f32.mrb[0].mxu0
      %v1731 = vpop.f32.mrb[0].mxu0
      %v1732 = vpop.f32.mrb[0].mxu0
      %1733 = vdwg.mxu0
      %v1734 = vpack.c.bf16 %v1591, %v1591
      %v1736 = vunpack.c.l.s4 1983009808
      %v1737 = vunpack.c.0.s8 %v1736
      %v1738 = vlaneseq
      %v1739 = vshrl.u32 %v1738, 7
      %v1740 = vsub.s32 %v1737, %v1739
      %v1741 = vrot.slane %v1734, %v1740
      %v1742 = vpack.c.bf16 %v1683, %v1683
      %v1744 = vunpack.c.l.s4 1983009808
      %v1745 = vunpack.c.0.s8 %v1744
      %v1746 = vlaneseq
      %v1747 = vshrl.u32 %v1746, 7
      %v1748 = vsub.s32 %v1745, %v1747
      %v1749 = vrot.slane %v1742, %v1748
      %v1750 = vcombine.low %v1741, %v1749
      %v1751 = vcombine.high %v1741, %v1749
      %v1753 = vunpack.c.l.s4 1934713408
      %v1754 = vunpack.c.0.s8 %v1753
      %v1755 = vlaneseq
      %v1756 = vshrl.u32 %v1755, 7
      %v1757 = vsub.s32 %v1754, %v1756
      %v1758 = vrot.slane %v1750, %v1757
      %v1760 = vunpack.c.l.s4 1934713408
      %v1761 = vunpack.c.0.s8 %v1760
      %v1762 = vlaneseq
      %v1763 = vshrl.u32 %v1762, 7
      %v1764 = vsub.s32 %v1761, %v1763
      %v1765 = vrot.slane %v1751, %v1764
      %v1766 = vcombine.high %v1758, 0
      %v1767 = vcombine.high %v1765, 0
      %v1768 = vpack.c.bf16 %v1637, %v1637
      %v1770 = vunpack.c.l.s4 1983009808
      %v1771 = vunpack.c.0.s8 %v1770
      %v1772 = vlaneseq
      %v1773 = vshrl.u32 %v1772, 7
      %v1774 = vsub.s32 %v1771, %v1773
      %v1775 = vrot.slane %v1768, %v1774
      %v1776 = vpack.c.bf16 %v1729, %v1729
      %v1778 = vunpack.c.l.s4 1983009808
      %v1779 = vunpack.c.0.s8 %v1778
      %v1780 = vlaneseq
      %v1781 = vshrl.u32 %v1780, 7
      %v1782 = vsub.s32 %v1779, %v1781
      %v1783 = vrot.slane %v1776, %v1782
      %v1784 = vcombine.low %v1775, %v1783
      %v1785 = vcombine.high %v1775, %v1783
      %v1787 = vunpack.c.l.s4 1934713408
      %v1788 = vunpack.c.0.s8 %v1787
      %v1789 = vlaneseq
      %v1790 = vshrl.u32 %v1789, 7
      %v1791 = vsub.s32 %v1788, %v1790
      %v1792 = vrot.slane %v1784, %v1791
      %v1794 = vunpack.c.l.s4 1934713408
      %v1795 = vunpack.c.0.s8 %v1794
      %v1796 = vlaneseq
      %v1797 = vshrl.u32 %v1796, 7
      %v1798 = vsub.s32 %v1795, %v1797
      %v1799 = vrot.slane %v1785, %v1798
      %v1800 = vcombine.high %v1792, 0
      %v1801 = vcombine.high %v1799, 0
      %v1804 = vpack.i.b16 %v1792, %v1758
      %v1806 = vshrl.u32 %v1758, 16
      %v1807 = vshrl.u32 %v1792, 16
      %v1808 = vpack.i.b16 %v1807, %v1806
      %v1812 = vpack.i.b16 %v1800, %v1766
      %v1814 = vshrl.u32 %v1766, 16
      %v1815 = vshrl.u32 %v1800, 16
      %v1816 = vpack.i.b16 %v1815, %v1814
      %v1820 = vpack.i.b16 %v1799, %v1765
      %v1822 = vshrl.u32 %v1765, 16
      %v1823 = vshrl.u32 %v1799, 16
      %v1824 = vpack.i.b16 %v1823, %v1822
      %v1828 = vpack.i.b16 %v1801, %v1767
      %v1830 = vshrl.u32 %v1767, 16
      %v1831 = vshrl.u32 %v1801, 16
      %v1832 = vpack.i.b16 %v1831, %v1830
      %v1834 = vcombine.low %v1804, %v1820
      %v1836 = vunpack.c.l.s4 1983009808
      %v1837 = vunpack.c.0.s8 %v1836
      %v1838 = vlaneseq
      %v1839 = vshrl.u32 %v1838, 7
      %v1840 = vsub.s32 %v1837, %v1839
      %v1841 = vrot.slane %v1834, %v1840
      %v1842 = vcombine.low %v1812, %v1828
      %v1844 = vunpack.c.l.s4 1983009808
      %v1845 = vunpack.c.0.s8 %v1844
      %v1846 = vlaneseq
      %v1847 = vshrl.u32 %v1846, 7
      %v1848 = vsub.s32 %v1845, %v1847
      %v1849 = vrot.slane %v1842, %v1848
      %v1850 = vcombine.low %v1841, %v1849
      %v1852 = vunpack.c.l.s4 1934713408
      %v1853 = vunpack.c.0.s8 %v1852
      %v1854 = vlaneseq
      %v1855 = vshrl.u32 %v1854, 7
      %v1856 = vsub.s32 %v1853, %v1855
      %v1857 = vrot.slane %v1850, %v1856
      %v1858 = vcombine.high %v1857, 0
      %v1859 = vcombine.low %v1808, %v1824
      %v1861 = vunpack.c.l.s4 1983009808
      %v1862 = vunpack.c.0.s8 %v1861
      %v1863 = vlaneseq
      %v1864 = vshrl.u32 %v1863, 7
      %v1865 = vsub.s32 %v1862, %v1864
      %v1866 = vrot.slane %v1859, %v1865
      %v1867 = vcombine.low %v1816, %v1832
      %v1869 = vunpack.c.l.s4 1983009808
      %v1870 = vunpack.c.0.s8 %v1869
      %v1871 = vlaneseq
      %v1872 = vshrl.u32 %v1871, 7
      %v1873 = vsub.s32 %v1870, %v1872
      %v1874 = vrot.slane %v1867, %v1873
      %v1875 = vcombine.low %v1866, %v1874
      %v1877 = vunpack.c.l.s4 1934713408
      %v1878 = vunpack.c.0.s8 %v1877
      %v1879 = vlaneseq
      %v1880 = vshrl.u32 %v1879, 7
      %v1881 = vsub.s32 %v1878, %v1880
      %v1882 = vrot.slane %v1875, %v1881
      %v1883 = vcombine.high %v1882, 0
      %v1886 = vpack.i.b16 %v1882, %v1857
      %v1887 = vshrl.u32 %v1857, 16
      %v1888 = vshrl.u32 %v1882, 16
      %v1889 = vpack.i.b16 %v1888, %v1887
      %v1892 = vpack.i.b16 %v1883, %v1858
      %v1893 = vshrl.u32 %v1858, 16
      %v1894 = vshrl.u32 %v1883, 16
      %v1895 = vpack.i.b16 %v1894, %v1893
      %1896 = vrot.lane.b32.xlu0 %v1889, 8
      %v1897 = vpop.permute.xlu0 %1896
      %1898 = vrot.lane.b32.xlu0 %v1892, 16
      %v1899 = vpop.permute.xlu0 %1898
      %1900 = vrot.lane.b32.xlu0 %v1895, 24
      %v1901 = vpop.permute.xlu0 %1900
      %v1904 = vsel %vm1312, %v1886, %v1897
      %vm1905 = vcmask 130048
      %v1907 = vsel %vm1905, %v1904, %v1899
      %vm1908 = vcmask 195584
      %v1910 = vsel %vm1908, %v1907, %v1901
      %v1911 = vld [vmem:[%s10] sm:$0xf]
      %v1912 = vld [vmem:[%s10 + $0x4] sm:$0xf]
      %v1913 = vld [vmem:[%s10 + $0x8] sm:$0xf]
      %v1914 = vld [vmem:[%s10 + $0xc] sm:$0xf]
      %v1915 = vld [vmem:[%s11] sm:$0x1]
      %v1917 = vlaneseq
      %v1918 = vshrl.u32 %v1917, 7
      %v1919 = vsub.s32 0, %v1918
      %v1920 = vrot.slane %v1915, %v1919
      %v1926 = vunpack.c.l.b16 %v1911
      %v1927 = vunpack.c.l.b16 %v1912
      %v1928 = vunpack.c.l.b16 %v1913
      %v1929 = vunpack.c.l.b16 %v1914
      %v1930 = vpack.c.b16 %v1927, %v1926
      %v1931 = vpack.c.b16 %v1929, %v1928
      %v1934 = vsel %vm1068, %v1910, 0
      %1936 = vmatprep.subr.bf16.mxu0 0
      %1937 = vmatpush1.bf16.msra.mxu0 %v1930
      %1938 = vmatprep.subr.bf16.mxu0 0
      %1939 = vmatpush1.bf16.msra.mxu0 %v1931
      %1940 = vmatprep.subr.bf16.mxu0 0
      %1941 = vmatpush1.bf16.msra.mxu0 0
      %1942 = vmatprep.subr.bf16.mxu0 0
      %1943 = vmatpush1.bf16.msra.mxu0 0
      %1944 = vmatprep.subr.bf16.mxu0 0
      %1945 = vmatpush1.bf16.msra.mxu0 0
      %1946 = vmatprep.subr.bf16.mxu0 0
      %1947 = vmatpush1.bf16.msra.mxu0 0
      %1948 = vmatprep.subr.bf16.mxu0 0
      %1949 = vmatpush1.bf16.msra.mxu0 0
      %1950 = vmatprep.subr.bf16.mxu0 0
      %1951 = vmatpush1.bf16.msra.mxu0 0
      %1952 = vmatprep.subr.bf16.mxu0 0
      %1953 = vmatpush1.bf16.msra.mxu0 0
      %1954 = vmatprep.subr.bf16.mxu0 0
      %1955 = vmatpush1.bf16.msra.mxu0 0
      %1956 = vmatprep.subr.bf16.mxu0 0
      %1957 = vmatpush1.bf16.msra.mxu0 0
      %1958 = vmatprep.subr.bf16.mxu0 0
      %1959 = vmatpush1.bf16.msra.mxu0 0
      %1960 = vmatprep.subr.bf16.mxu0 0
      %1961 = vmatpush1.bf16.msra.mxu0 0
      %1962 = vmatprep.subr.bf16.mxu0 0
      %1963 = vmatpush1.bf16.msra.mxu0 0
      %1964 = vmatprep.subr.bf16.mxu0 0
      %1965 = vmatpush1.bf16.msra.mxu0 0
      %1966 = vmatprep.subr.bf16.mxu0 0
      %1967 = vmatpush1.bf16.msra.mxu0 0
      %1968 = vmatprep.mubr.bf16.mxu0 0
      %1969 = vmatmul.mubr.bf16.gmra.mrb[0].mxu0 %v1934
      %v1970 = vpop.f32.mrb[0].mxu0
      %v1971 = vadd.f32 %v1920, %v1970
      %v1972 = vpop.f32.mrb[0].mxu0
      %v1973 = vpop.f32.mrb[0].mxu0
      %v1974 = vpop.f32.mrb[0].mxu0
      %1975 = vdwg.mxu0
      %v1976 = vunpack.c.l.bf16 %v1044
      %v1977 = vadd.f32 %v1976, %v1971
      %v1978 = vsel %vm1068, %v1977, 0.0
      %1979 = vadd.xlane.f32.xlu0 %v1978
      %v1980 = vpop.xlane.xlu0 %1979
      %v1981 = vrcp.pop 32.0
      %v1982 = vmul.f32 %v1980, %v1981
      %v1983 = vsub.f32 %v1977, %v1982
      %v1984 = vmul.f32 %v1983, %v1983
      %v1985 = vsel %vm1068, %v1984, 0.0
      %1986 = vadd.xlane.f32.xlu0 %v1985
      %v1987 = vpop.xlane.xlu0 %1986
      %v1988 = vmul.f32 %v1987, %v1981
      %v1989 = vadd.f32 %v1988, 1e-05
      %v1990 = vrsqrt.pop %v1989
      %v1991 = vmul.f32 %v1983, %v1990
      %v1992 = vld [vmem:[%s12] sm:$0x1]
      %v1994 = vlaneseq
      %v1995 = vshrl.u32 %v1994, 7
      %v1996 = vsub.s32 0, %v1995
      %v1997 = vrot.slane %v1992, %v1996
      %v1999 = vmul.f32 %v1991, %v1997
      %v2000 = vld [vmem:[%s13] sm:$0x1]
      %v2002 = vlaneseq
      %v2003 = vshrl.u32 %v2002, 7
      %v2004 = vsub.s32 0, %v2003
      %v2005 = vrot.slane %v2000, %v2004
      %v2007 = vadd.f32 %v1999, %v2005
      %v2008 = vpack.c.bf16 %v2007, %v2007
      %vm2009 = vcmask 257024
      %2010 = vst.msk [vmem:[%s552] sm:$0xf] %vm2009, %v2008
      %p2011 = scmp.lt.s32.totalorder %s29, 1
      %s2012 = scalar_select %p2011, %s29, 1
      %p2013 = scmp.lt.s32.totalorder %s30, 0
      %s2014 = scalar_select %p2013, %s30, 0
      %s2015 = sadd.s32 %s2014, %s2012
      %s2016 = smul.addr %s2015, 4
      %s2017 = scalar_lea.vmem %s14, %s2016
      // Predicated region
      $region81: #{transformer_forward.15} parent=75 // pred_check
        %p2018 = pneg %p375
      $region82: #{transformer_forward.15} parent=75 // pred_check_branch
        %2020 = sbr.rel (%p2018) target = $region84
      $region83: #{transformer_forward.15} parent=75 // pred_region
        _
      $region84: #{transformer_forward.15} parent=75 // pred_fallthru
        _
    $region76: #{transformer_forward.15} parent=5 // pred_fallthru
      _
    %p2021 = scmp.le.s32.totalorder 2, %s20
    // Predicated region
    $region85: #{transformer_forward.15} parent=5 // pred_check
      %p2022 = pneg %p2021
    $region86: #{transformer_forward.15} parent=5 // pred_check_branch
      %2024 = sbr.rel (%p2022) target = $region88
    $region87: #{transformer_forward.15} parent=5 // pred_region
      %s2025 = ssub.s32 %s20, 2
      // Predicated region
      $region89: #{transformer_forward.15} parent=87 // pred_check
        %p2026 = pneg %p381
      $region90: #{transformer_forward.15} parent=87 // pred_check_branch
        %2028 = sbr.rel (%p2026) target = $region92
      $region91: #{transformer_forward.15} parent=87 // pred_region
        %p2029 = scmp.lt.s32.totalorder %s31, 1
        %s2030 = scalar_select %p2029, %s31, 1
        %p2031 = scmp.lt.s32.totalorder %s32, 0
        %s2032 = scalar_select %p2031, %s32, 0
        %s2033 = sadd.s32 %s2032, %s2030
        %s2034 = smul.addr %s2033, 4
        %s2035 = scalar_lea.vmem %s14, %s2034
      $region92: #{transformer_forward.15} parent=87 // pred_fallthru
        _
    $region88: #{transformer_forward.15} parent=5 // pred_fallthru
      _
  $region6: #{transformer_forward.15} parent=0 // loop_footer
    %s24 = sadd.s32 1, %s20
  $region7: #{transformer_forward.15} parent=0 // loop_footer_branch
    %19 = sbr.rel target = $region3
  $region8: #{transformer_forward.15} parent=0 // loop_exit
    _

</llo_original>
